<compile_context>
chip_gen: v6e
topology: v6e:2x2x1
jax: 0.10.0
libtpu: 0.0.40
codegen_flags: <defaults>
</compile_context>

<pallas_src>
import math

import jax
import jax.numpy as jnp
import numpy as np
from jax.experimental import pallas as pl
from jax.experimental.pallas import tpu as pltpu


# ----------------------------------------------------------------------------
# Module configuration (matches the PyTorch ConvDecoder)
# ----------------------------------------------------------------------------
_LAYER_CFGS = [  # (Cin, Cout, K, stride)
    (64, 32, 2, 1),
    (32, 16, 3, 2),
    (16, 8, 4, 4),
    (8, 4, 2, 2),
    (4, 1, 2, 2),
]
_ACTS = ["relu", "relu", "relu", "relu", "sigmoid"]


def init_params(seed=42):
    key = jax.random.PRNGKey(seed)
    params = []
    for i, (cin, cout, k, _s) in enumerate(_LAYER_CFGS):
        kw, kb = jax.random.split(jax.random.fold_in(key, i))
        scale = 1.0 / math.sqrt(cin * k * k)
        w = jax.random.normal(kw, (cin, cout, k, k), jnp.float32) * scale
        b = jax.random.normal(kb, (cout,), jnp.float32) * 0.1
        params.append((w, b))
    return params


# ----------------------------------------------------------------------------
# Host-side weight refactoring (pure numpy, done once)
# ----------------------------------------------------------------------------
def _block_diag(block, n):
    r, c = block.shape
    out = np.zeros((n * r, n * c), np.float32)
    for i in range(n):
        out[i * r:(i + 1) * r, i * c:(i + 1) * c] = block
    return out


def build_decoder_mats(params):
    (w1, b1), (w2, b2), (w3, b3), (w4, b4), (w5, b5) = [
        (np.asarray(w, np.float32), np.asarray(b, np.float32)) for (w, b) in params
    ]

    # Layer 1 (64->32, K=2, s=1, 1x1 input): dense (64,128); col = c1*4+y1*2+x1.
    W1 = w1.reshape(64, 32 * 2 * 2)
    B1 = np.repeat(b1, 4)[None, :]                       # (1,128)

    # Layer 2 (32->16, K=3, s=2, 2x2 -> 5x5, OVERLAPPING): fold col2im into a dense
    # (128,400) matrix.  row = c1*4+y1*2+x1 ; col = (Y*5+X)*16 + c2.
    T = np.zeros((32, 2, 2, 5, 5, 16), np.float32)
    for y1 in range(2):
        for x1 in range(2):
            for ky in range(3):
                for kx in range(3):
                    T[:, y1, x1, 2 * y1 + ky, 2 * x1 + kx, :] += w2[:, :, ky, kx]
    W2 = T.reshape(128, 400)
    B2 = np.tile(b2, 25)[None, :]                        # (1,400)

    # Layer 3 (16->8, K=4, s=4, no overlap): cols tap-major -> col = tap3*8 + c3.
    W3 = w3.transpose(0, 2, 3, 1).reshape(16, 128)       # (16,128)
    B3 = np.tile(b3, 16)[None, :]                        # (1,128)

    # Layer 4 (8->4, K=2, s=2): block-diagonal over the 16 layer-3 taps.
    # col = tap3*16 + tap4*4 + c4.
    W4m = w4.transpose(0, 2, 3, 1).reshape(8, 16)
    W4 = _block_diag(W4m, 16)                            # (128,256)
    B4 = np.tile(b4, 64)[None, :]                        # (1,256)

    # Layer 5 (4->1, K=2, s=2): block-diagonal over the 64 (tap3,tap4) groups.
    # Raw col = tap3*16 + tap4*4 + tap5; then permute columns so that within each
    # pixel the 256 outputs are ordered y_loc*16 + x_loc (row-major 16x16 tile),
    # making the post-kernel depth-to-space a cheap 16-wide blocked transpose.
    W5m = w5.transpose(0, 2, 3, 1).reshape(4, 4)
    W5 = _block_diag(W5m, 64)                            # (256,256)
    perm = np.empty(256, np.int64)
    for ky3 in range(4):
        for kx3 in range(4):
            for ky4 in range(2):
                for kx4 in range(2):
                    for ky5 in range(2):
                        for kx5 in range(2):
                            old = (ky3 * 4 + kx3) * 16 + (ky4 * 2 + kx4) * 4 + (ky5 * 2 + kx5)
                            y_loc = 4 * ky3 + 2 * ky4 + ky5
                            x_loc = 4 * kx3 + 2 * kx4 + kx5
                            perm[y_loc * 16 + x_loc] = old
    W5 = W5[:, perm]
    B5 = np.full((1, 256), float(b5[0]), np.float32)     # constant -> perm-invariant

    mats = (W1, B1, W2, B2, W3, B3, W4, B4, W5, B5)
    return tuple(jnp.asarray(m) for m in mats)


# ----------------------------------------------------------------------------
# Fused Pallas kernel: whole decoder for TB batch elements per grid step
# ----------------------------------------------------------------------------
def _decoder_kernel(x_ref, w1, b1, w2, b2, w3, b3, w4, b4, w5, b5,
                    out_ref, x3_ref):
    tb = x_ref.shape[0]

    def relu(v):
        return jnp.maximum(v, 0.0)

    x = x_ref[...]                                                     # (TB, 64)
    h1 = relu(jnp.dot(x, w1[...], preferred_element_type=jnp.float32)
              + b1[...])                                               # (TB, 128)
    h2 = relu(jnp.dot(h1, w2[...], preferred_element_type=jnp.float32)
              + b2[...])                                               # (TB, 400)

    # Repack (TB, 25*16) -> (25*TB, 16): 25 slab stores of (TB,16) into VMEM
    # scratch, row order p*TB + b (pixel-major).  Constant 25 stores per grid
    # step regardless of TB.
    for p in range(25):
        x3_ref[p * tb:(p + 1) * tb, :] = h2[:, p * 16:(p + 1) * 16]
    x3 = x3_ref[...]                                                   # (25*TB, 16)

    c3 = relu(jnp.dot(x3, w3[...], preferred_element_type=jnp.float32)
              + b3[...])                                               # (25*TB, 128)
    c4 = relu(jnp.dot(c3, w4[...], preferred_element_type=jnp.float32)
              + b4[...])                                               # (25*TB, 256)
    z5 = (jnp.dot(c4, w5[...], preferred_element_type=jnp.float32)
          + b5[...])                                                   # (25*TB, 256)
    s = pl.reciprocal(1.0 + jnp.exp(-z5), approx=False)                # sigmoid

    # Lane-dense output: 25 full-lane (TB, 256) stores.
    for p in range(25):
        out_ref[p] = s[p * tb:(p + 1) * tb, :]


def _round_up(n, m):
    return ((n + m - 1) // m) * m


def conv_decoder_forward(x, mats, block_b=128):
    """x: (B, 64, 1, 1) -> (B, 1, 80, 80)."""
    B = x.shape[0]
    xf = x.reshape(B, 64).astype(jnp.float32)

    # Batch tile: multiple of 8 (sublane), <= block_b.  When the batch is big
    # enough, keep >= 2 grid steps so v7x's two TensorCores both get work.
    tb = max(8, min(block_b, _round_up(B, 8)))
    if B > 8 and (B + tb - 1) // tb < 2:
        tb = max(8, _round_up((B + 1) // 2, 8))
    nb = (B + tb - 1) // tb
    b_pad = nb * tb
    if b_pad != B:
        xf = jnp.pad(xf, ((0, b_pad - B), (0, 0)))

    in_specs = [pl.BlockSpec((tb, 64), lambda i: (i, 0))]
    # Weights/biases: constant index_map -> fetched once, resident across steps.
    in_specs += [pl.BlockSpec(m.shape, lambda i: (0, 0)) for m in mats]

    out = pl.pallas_call(
        _decoder_kernel,
        out_shape=jax.ShapeDtypeStruct((25, b_pad, 256), jnp.float32),
        grid=(nb,),
        in_specs=in_specs,
        out_specs=pl.BlockSpec((25, tb, 256), lambda i: (0, i, 0)),
        scratch_shapes=[pltpu.VMEM((25 * tb, 16), jnp.float32)],
        compiler_params=pltpu.CompilerParams(
            dimension_semantics=("parallel",)),
    )(xf, *mats)

    # Depth-to-space (pure layout plumbing in XLA).  out[p, b, y_loc*16+x_loc]
    # with p = Y*5+X maps to image[b, 0, 16*Y+y_loc, 16*X+x_loc]; the transpose
    # has 16-wide contiguous inner runs thanks to the W5 column permutation.
    out = out[:, :B, :]
    out = out.reshape(5, 5, B, 16, 16)          # (Y, X, b, y_loc, x_loc)
    out = out.transpose(2, 0, 3, 1, 4)          # (b, Y, y_loc, X, x_loc)
    return out.reshape(B, 1, 80, 80)


# ----------------------------------------------------------------------------
# Pure-JAX reference (for correctness check)
# ----------------------------------------------------------------------------
def _ref_conv_transpose(x, w, b, s):
    K = w.shape[2]
    w_r = jnp.transpose(jnp.flip(w, (2, 3)), (1, 0, 2, 3))  # OIHW
    y = jax.lax.conv_general_dilated(
        x, w_r, window_strides=(1, 1),
        padding=[(K - 1, K - 1), (K - 1, K - 1)],
        lhs_dilation=(s, s), rhs_dilation=(1, 1),
        dimension_numbers=("NCHW", "OIHW", "NCHW"))
    return y + b.reshape(1, -1, 1, 1)


def ref_forward(x, params):
    for (w, b), (_cin, _cout, _k, s), act in zip(params, _LAYER_CFGS, _ACTS):
        y = _ref_conv_transpose(x, w, b, s)
        x = jnp.maximum(y, 0.0) if act == "relu" else jax.nn.sigmoid(y)
    return x


# ----------------------------------------------------------------------------
if __name__ == "__main__":
    key = jax.random.PRNGKey(0)
    # latent grid-world code: (batch, 64 channels, 1x1 spatial) -> (batch, 1, 80, 80)
    B = 16                                   # small, but gives 2 grid steps (TB=8)
    x = jax.random.normal(key, (B, 64, 1, 1), jnp.float32)

    params = init_params()
    mats = build_decoder_mats(params)

    out = jax.jit(conv_decoder_forward)(x, mats)
    out = jax.block_until_ready(out)
    assert out.shape == (B, 1, 80, 80), out.shape

    ref = jax.block_until_ready(ref_forward(x, params))
    np.testing.assert_allclose(np.asarray(out), np.asarray(ref),
                               rtol=1e-4, atol=1e-4)
    print("KERNEL_OK")
</pallas_src>

<mosaic_0001>
module attributes {stable_mosaic.version = 11 : i64} {
  func.func @_decoder_kernel(%arg0: i32, %arg1: memref<8x64xf32, #tpu.memory_space<vmem>>, %arg2: memref<64x128xf32, #tpu.memory_space<vmem>>, %arg3: memref<1x128xf32, #tpu.memory_space<vmem>>, %arg4: memref<128x400xf32, #tpu.memory_space<vmem>>, %arg5: memref<1x400xf32, #tpu.memory_space<vmem>>, %arg6: memref<16x128xf32, #tpu.memory_space<vmem>>, %arg7: memref<1x128xf32, #tpu.memory_space<vmem>>, %arg8: memref<128x256xf32, #tpu.memory_space<vmem>>, %arg9: memref<1x256xf32, #tpu.memory_space<vmem>>, %arg10: memref<256x256xf32, #tpu.memory_space<vmem>>, %arg11: memref<1x256xf32, #tpu.memory_space<vmem>>, %arg12: memref<25x8x256xf32, #tpu.memory_space<vmem>>, %arg13: memref<200x16xf32, #tpu.memory_space<vmem>>) attributes {dimension_semantics = [#tpu.dimension_semantics<parallel>], iteration_bounds = array<i64: 2>, scalar_prefetch = 0 : i64, scratch_operands = 1 : i64, tpu.core_type = #tpu.core_type<tc>, window_params = [{transform_indices = @transform_0, window_bounds = array<i64: 8, 64>}, {pipeline_mode = #tpu.pipeline_mode<synchronous>, transform_indices = @transform_1, window_bounds = array<i64: 64, 128>}, {pipeline_mode = #tpu.pipeline_mode<synchronous>, transform_indices = @transform_2, window_bounds = array<i64: 1, 128>}, {pipeline_mode = #tpu.pipeline_mode<synchronous>, transform_indices = @transform_3, window_bounds = array<i64: 128, 400>}, {pipeline_mode = #tpu.pipeline_mode<synchronous>, transform_indices = @transform_4, window_bounds = array<i64: 1, 400>}, {pipeline_mode = #tpu.pipeline_mode<synchronous>, transform_indices = @transform_5, window_bounds = array<i64: 16, 128>}, {pipeline_mode = #tpu.pipeline_mode<synchronous>, transform_indices = @transform_6, window_bounds = array<i64: 1, 128>}, {pipeline_mode = #tpu.pipeline_mode<synchronous>, transform_indices = @transform_7, window_bounds = array<i64: 128, 256>}, {pipeline_mode = #tpu.pipeline_mode<synchronous>, transform_indices = @transform_8, window_bounds = array<i64: 1, 256>}, {pipeline_mode = #tpu.pipeline_mode<synchronous>, transform_indices = @transform_9, window_bounds = array<i64: 256, 256>}, {pipeline_mode = #tpu.pipeline_mode<synchronous>, transform_indices = @transform_10, window_bounds = array<i64: 1, 256>}, {transform_indices = @transform_11, window_bounds = array<i64: 25, 8, 256>}]} {
    %c0 = arith.constant 0 : index
    %c0_0 = arith.constant 0 : index
    %0 = vector.load %arg1[%c0, %c0_0] : memref<8x64xf32, #tpu.memory_space<vmem>>, vector<8x64xf32>
    %c0_1 = arith.constant 0 : index
    %c0_2 = arith.constant 0 : index
    %1 = vector.load %arg2[%c0_1, %c0_2] : memref<64x128xf32, #tpu.memory_space<vmem>>, vector<64x128xf32>
    %cst = arith.constant dense<0.000000e+00> : vector<8x128xf32>
    %2 = tpu.matmul %0, %1, %cst {dimension_numbers = #tpu.dot_dimension_numbers<[1], [0], [0], [1], [0, 0, 1, 1], [], []>} : vector<8x64xf32>, vector<64x128xf32>, vector<8x128xf32> -> vector<8x128xf32>
    %c0_3 = arith.constant 0 : index
    %c0_4 = arith.constant 0 : index
    %3 = vector.load %arg3[%c0_3, %c0_4] : memref<1x128xf32, #tpu.memory_space<vmem>>, vector<1x128xf32>
    %4 = vector.broadcast %3 : vector<1x128xf32> to vector<8x128xf32>
    %5 = arith.addf %2, %4 : vector<8x128xf32>
    %cst_5 = arith.constant 0.000000e+00 : f32
    %6 = vector.broadcast %cst_5 : f32 to vector<8x128xf32>
    %7 = arith.maximumf %5, %6 : vector<8x128xf32>
    %c0_6 = arith.constant 0 : index
    %c0_7 = arith.constant 0 : index
    %8 = vector.load %arg4[%c0_6, %c0_7] : memref<128x400xf32, #tpu.memory_space<vmem>>, vector<128x400xf32>
    %cst_8 = arith.constant dense<0.000000e+00> : vector<8x400xf32>
    %9 = tpu.matmul %7, %8, %cst_8 {dimension_numbers = #tpu.dot_dimension_numbers<[1], [0], [0], [1], [0, 0, 1, 1], [], []>} : vector<8x128xf32>, vector<128x400xf32>, vector<8x400xf32> -> vector<8x400xf32>
    %c0_9 = arith.constant 0 : index
    %c0_10 = arith.constant 0 : index
    %10 = vector.load %arg5[%c0_9, %c0_10] : memref<1x400xf32, #tpu.memory_space<vmem>>, vector<1x400xf32>
    %11 = vector.broadcast %10 : vector<1x400xf32> to vector<8x400xf32>
    %12 = arith.addf %9, %11 : vector<8x400xf32>
    %cst_11 = arith.constant 0.000000e+00 : f32
    %13 = vector.broadcast %cst_11 : f32 to vector<8x400xf32>
    %14 = arith.maximumf %12, %13 : vector<8x400xf32>
    %15 = vector.extract_strided_slice %14 {offsets = [0, 0], sizes = [8, 16], strides = [1, 1]} : vector<8x400xf32> to vector<8x16xf32>
    %c0_12 = arith.constant 0 : index
    %c0_13 = arith.constant 0 : index
    %16 = vector.load %arg13[%c0_12, %c0_13] : memref<200x16xf32, #tpu.memory_space<vmem>>, vector<8x16xf32>
    tpu.vector_store %arg13[%c0_12, %c0_13], %15 {strides = array<i32>} : memref<200x16xf32, #tpu.memory_space<vmem>>, vector<8x16xf32>,
    %17 = vector.extract_strided_slice %14 {offsets = [0, 16], sizes = [8, 16], strides = [1, 1]} : vector<8x400xf32> to vector<8x16xf32>
    %c8 = arith.constant 8 : index
    %c0_14 = arith.constant 0 : index
    %18 = vector.load %arg13[%c8, %c0_14] : memref<200x16xf32, #tpu.memory_space<vmem>>, vector<8x16xf32>
    tpu.vector_store %arg13[%c8, %c0_14], %17 {strides = array<i32>} : memref<200x16xf32, #tpu.memory_space<vmem>>, vector<8x16xf32>,
    %19 = vector.extract_strided_slice %14 {offsets = [0, 32], sizes = [8, 16], strides = [1, 1]} : vector<8x400xf32> to vector<8x16xf32>
    %c16 = arith.constant 16 : index
    %c0_15 = arith.constant 0 : index
    %20 = vector.load %arg13[%c16, %c0_15] : memref<200x16xf32, #tpu.memory_space<vmem>>, vector<8x16xf32>
    tpu.vector_store %arg13[%c16, %c0_15], %19 {strides = array<i32>} : memref<200x16xf32, #tpu.memory_space<vmem>>, vector<8x16xf32>,
    %21 = vector.extract_strided_slice %14 {offsets = [0, 48], sizes = [8, 16], strides = [1, 1]} : vector<8x400xf32> to vector<8x16xf32>
    %c24 = arith.constant 24 : index
    %c0_16 = arith.constant 0 : index
    %22 = vector.load %arg13[%c24, %c0_16] : memref<200x16xf32, #tpu.memory_space<vmem>>, vector<8x16xf32>
    tpu.vector_store %arg13[%c24, %c0_16], %21 {strides = array<i32>} : memref<200x16xf32, #tpu.memory_space<vmem>>, vector<8x16xf32>,
    %23 = vector.extract_strided_slice %14 {offsets = [0, 64], sizes = [8, 16], strides = [1, 1]} : vector<8x400xf32> to vector<8x16xf32>
    %c32 = arith.constant 32 : index
    %c0_17 = arith.constant 0 : index
    %24 = vector.load %arg13[%c32, %c0_17] : memref<200x16xf32, #tpu.memory_space<vmem>>, vector<8x16xf32>
    tpu.vector_store %arg13[%c32, %c0_17], %23 {strides = array<i32>} : memref<200x16xf32, #tpu.memory_space<vmem>>, vector<8x16xf32>,
    %25 = vector.extract_strided_slice %14 {offsets = [0, 80], sizes = [8, 16], strides = [1, 1]} : vector<8x400xf32> to vector<8x16xf32>
    %c40 = arith.constant 40 : index
    %c0_18 = arith.constant 0 : index
    %26 = vector.load %arg13[%c40, %c0_18] : memref<200x16xf32, #tpu.memory_space<vmem>>, vector<8x16xf32>
    tpu.vector_store %arg13[%c40, %c0_18], %25 {strides = array<i32>} : memref<200x16xf32, #tpu.memory_space<vmem>>, vector<8x16xf32>,
    %27 = vector.extract_strided_slice %14 {offsets = [0, 96], sizes = [8, 16], strides = [1, 1]} : vector<8x400xf32> to vector<8x16xf32>
    %c48 = arith.constant 48 : index
    %c0_19 = arith.constant 0 : index
    %28 = vector.load %arg13[%c48, %c0_19] : memref<200x16xf32, #tpu.memory_space<vmem>>, vector<8x16xf32>
    tpu.vector_store %arg13[%c48, %c0_19], %27 {strides = array<i32>} : memref<200x16xf32, #tpu.memory_space<vmem>>, vector<8x16xf32>,
    %29 = vector.extract_strided_slice %14 {offsets = [0, 112], sizes = [8, 16], strides = [1, 1]} : vector<8x400xf32> to vector<8x16xf32>
    %c56 = arith.constant 56 : index
    %c0_20 = arith.constant 0 : index
    %30 = vector.load %arg13[%c56, %c0_20] : memref<200x16xf32, #tpu.memory_space<vmem>>, vector<8x16xf32>
    tpu.vector_store %arg13[%c56, %c0_20], %29 {strides = array<i32>} : memref<200x16xf32, #tpu.memory_space<vmem>>, vector<8x16xf32>,
    %31 = vector.extract_strided_slice %14 {offsets = [0, 128], sizes = [8, 16], strides = [1, 1]} : vector<8x400xf32> to vector<8x16xf32>
    %c64 = arith.constant 64 : index
    %c0_21 = arith.constant 0 : index
    %32 = vector.load %arg13[%c64, %c0_21] : memref<200x16xf32, #tpu.memory_space<vmem>>, vector<8x16xf32>
    tpu.vector_store %arg13[%c64, %c0_21], %31 {strides = array<i32>} : memref<200x16xf32, #tpu.memory_space<vmem>>, vector<8x16xf32>,
    %33 = vector.extract_strided_slice %14 {offsets = [0, 144], sizes = [8, 16], strides = [1, 1]} : vector<8x400xf32> to vector<8x16xf32>
    %c72 = arith.constant 72 : index
    %c0_22 = arith.constant 0 : index
    %34 = vector.load %arg13[%c72, %c0_22] : memref<200x16xf32, #tpu.memory_space<vmem>>, vector<8x16xf32>
    tpu.vector_store %arg13[%c72, %c0_22], %33 {strides = array<i32>} : memref<200x16xf32, #tpu.memory_space<vmem>>, vector<8x16xf32>,
    %35 = vector.extract_strided_slice %14 {offsets = [0, 160], sizes = [8, 16], strides = [1, 1]} : vector<8x400xf32> to vector<8x16xf32>
    %c80 = arith.constant 80 : index
    %c0_23 = arith.constant 0 : index
    %36 = vector.load %arg13[%c80, %c0_23] : memref<200x16xf32, #tpu.memory_space<vmem>>, vector<8x16xf32>
    tpu.vector_store %arg13[%c80, %c0_23], %35 {strides = array<i32>} : memref<200x16xf32, #tpu.memory_space<vmem>>, vector<8x16xf32>,
    %37 = vector.extract_strided_slice %14 {offsets = [0, 176], sizes = [8, 16], strides = [1, 1]} : vector<8x400xf32> to vector<8x16xf32>
    %c88 = arith.constant 88 : index
    %c0_24 = arith.constant 0 : index
    %38 = vector.load %arg13[%c88, %c0_24] : memref<200x16xf32, #tpu.memory_space<vmem>>, vector<8x16xf32>
    tpu.vector_store %arg13[%c88, %c0_24], %37 {strides = array<i32>} : memref<200x16xf32, #tpu.memory_space<vmem>>, vector<8x16xf32>,
    %39 = vector.extract_strided_slice %14 {offsets = [0, 192], sizes = [8, 16], strides = [1, 1]} : vector<8x400xf32> to vector<8x16xf32>
    %c96 = arith.constant 96 : index
    %c0_25 = arith.constant 0 : index
    %40 = vector.load %arg13[%c96, %c0_25] : memref<200x16xf32, #tpu.memory_space<vmem>>, vector<8x16xf32>
    tpu.vector_store %arg13[%c96, %c0_25], %39 {strides = array<i32>} : memref<200x16xf32, #tpu.memory_space<vmem>>, vector<8x16xf32>,
    %41 = vector.extract_strided_slice %14 {offsets = [0, 208], sizes = [8, 16], strides = [1, 1]} : vector<8x400xf32> to vector<8x16xf32>
    %c104 = arith.constant 104 : index
    %c0_26 = arith.constant 0 : index
    %42 = vector.load %arg13[%c104, %c0_26] : memref<200x16xf32, #tpu.memory_space<vmem>>, vector<8x16xf32>
    tpu.vector_store %arg13[%c104, %c0_26], %41 {strides = array<i32>} : memref<200x16xf32, #tpu.memory_space<vmem>>, vector<8x16xf32>,
    %43 = vector.extract_strided_slice %14 {offsets = [0, 224], sizes = [8, 16], strides = [1, 1]} : vector<8x400xf32> to vector<8x16xf32>
    %c112 = arith.constant 112 : index
    %c0_27 = arith.constant 0 : index
    %44 = vector.load %arg13[%c112, %c0_27] : memref<200x16xf32, #tpu.memory_space<vmem>>, vector<8x16xf32>
    tpu.vector_store %arg13[%c112, %c0_27], %43 {strides = array<i32>} : memref<200x16xf32, #tpu.memory_space<vmem>>, vector<8x16xf32>,
    %45 = vector.extract_strided_slice %14 {offsets = [0, 240], sizes = [8, 16], strides = [1, 1]} : vector<8x400xf32> to vector<8x16xf32>
    %c120 = arith.constant 120 : index
    %c0_28 = arith.constant 0 : index
    %46 = vector.load %arg13[%c120, %c0_28] : memref<200x16xf32, #tpu.memory_space<vmem>>, vector<8x16xf32>
    tpu.vector_store %arg13[%c120, %c0_28], %45 {strides = array<i32>} : memref<200x16xf32, #tpu.memory_space<vmem>>, vector<8x16xf32>,
    %47 = vector.extract_strided_slice %14 {offsets = [0, 256], sizes = [8, 16], strides = [1, 1]} : vector<8x400xf32> to vector<8x16xf32>
    %c128 = arith.constant 128 : index
    %c0_29 = arith.constant 0 : index
    %48 = vector.load %arg13[%c128, %c0_29] : memref<200x16xf32, #tpu.memory_space<vmem>>, vector<8x16xf32>
    tpu.vector_store %arg13[%c128, %c0_29], %47 {strides = array<i32>} : memref<200x16xf32, #tpu.memory_space<vmem>>, vector<8x16xf32>,
    %49 = vector.extract_strided_slice %14 {offsets = [0, 272], sizes = [8, 16], strides = [1, 1]} : vector<8x400xf32> to vector<8x16xf32>
    %c136 = arith.constant 136 : index
    %c0_30 = arith.constant 0 : index
    %50 = vector.load %arg13[%c136, %c0_30] : memref<200x16xf32, #tpu.memory_space<vmem>>, vector<8x16xf32>
    tpu.vector_store %arg13[%c136, %c0_30], %49 {strides = array<i32>} : memref<200x16xf32, #tpu.memory_space<vmem>>, vector<8x16xf32>,
    %51 = vector.extract_strided_slice %14 {offsets = [0, 288], sizes = [8, 16], strides = [1, 1]} : vector<8x400xf32> to vector<8x16xf32>
    %c144 = arith.constant 144 : index
    %c0_31 = arith.constant 0 : index
    %52 = vector.load %arg13[%c144, %c0_31] : memref<200x16xf32, #tpu.memory_space<vmem>>, vector<8x16xf32>
    tpu.vector_store %arg13[%c144, %c0_31], %51 {strides = array<i32>} : memref<200x16xf32, #tpu.memory_space<vmem>>, vector<8x16xf32>,
    %53 = vector.extract_strided_slice %14 {offsets = [0, 304], sizes = [8, 16], strides = [1, 1]} : vector<8x400xf32> to vector<8x16xf32>
    %c152 = arith.constant 152 : index
    %c0_32 = arith.constant 0 : index
    %54 = vector.load %arg13[%c152, %c0_32] : memref<200x16xf32, #tpu.memory_space<vmem>>, vector<8x16xf32>
    tpu.vector_store %arg13[%c152, %c0_32], %53 {strides = array<i32>} : memref<200x16xf32, #tpu.memory_space<vmem>>, vector<8x16xf32>,
    %55 = vector.extract_strided_slice %14 {offsets = [0, 320], sizes = [8, 16], strides = [1, 1]} : vector<8x400xf32> to vector<8x16xf32>
    %c160 = arith.constant 160 : index
    %c0_33 = arith.constant 0 : index
    %56 = vector.load %arg13[%c160, %c0_33] : memref<200x16xf32, #tpu.memory_space<vmem>>, vector<8x16xf32>
    tpu.vector_store %arg13[%c160, %c0_33], %55 {strides = array<i32>} : memref<200x16xf32, #tpu.memory_space<vmem>>, vector<8x16xf32>,
    %57 = vector.extract_strided_slice %14 {offsets = [0, 336], sizes = [8, 16], strides = [1, 1]} : vector<8x400xf32> to vector<8x16xf32>
    %c168 = arith.constant 168 : index
    %c0_34 = arith.constant 0 : index
    %58 = vector.load %arg13[%c168, %c0_34] : memref<200x16xf32, #tpu.memory_space<vmem>>, vector<8x16xf32>
    tpu.vector_store %arg13[%c168, %c0_34], %57 {strides = array<i32>} : memref<200x16xf32, #tpu.memory_space<vmem>>, vector<8x16xf32>,
    %59 = vector.extract_strided_slice %14 {offsets = [0, 352], sizes = [8, 16], strides = [1, 1]} : vector<8x400xf32> to vector<8x16xf32>
    %c176 = arith.constant 176 : index
    %c0_35 = arith.constant 0 : index
    %60 = vector.load %arg13[%c176, %c0_35] : memref<200x16xf32, #tpu.memory_space<vmem>>, vector<8x16xf32>
    tpu.vector_store %arg13[%c176, %c0_35], %59 {strides = array<i32>} : memref<200x16xf32, #tpu.memory_space<vmem>>, vector<8x16xf32>,
    %61 = vector.extract_strided_slice %14 {offsets = [0, 368], sizes = [8, 16], strides = [1, 1]} : vector<8x400xf32> to vector<8x16xf32>
    %c184 = arith.constant 184 : index
    %c0_36 = arith.constant 0 : index
    %62 = vector.load %arg13[%c184, %c0_36] : memref<200x16xf32, #tpu.memory_space<vmem>>, vector<8x16xf32>
    tpu.vector_store %arg13[%c184, %c0_36], %61 {strides = array<i32>} : memref<200x16xf32, #tpu.memory_space<vmem>>, vector<8x16xf32>,
    %63 = vector.extract_strided_slice %14 {offsets = [0, 384], sizes = [8, 16], strides = [1, 1]} : vector<8x400xf32> to vector<8x16xf32>
    %c192 = arith.constant 192 : index
    %c0_37 = arith.constant 0 : index
    %64 = vector.load %arg13[%c192, %c0_37] : memref<200x16xf32, #tpu.memory_space<vmem>>, vector<8x16xf32>
    tpu.vector_store %arg13[%c192, %c0_37], %63 {strides = array<i32>} : memref<200x16xf32, #tpu.memory_space<vmem>>, vector<8x16xf32>,
    %c0_38 = arith.constant 0 : index
    %c0_39 = arith.constant 0 : index
    %65 = vector.load %arg13[%c0_38, %c0_39] : memref<200x16xf32, #tpu.memory_space<vmem>>, vector<200x16xf32>
    %c0_40 = arith.constant 0 : index
    %c0_41 = arith.constant 0 : index
    %66 = vector.load %arg6[%c0_40, %c0_41] : memref<16x128xf32, #tpu.memory_space<vmem>>, vector<16x128xf32>
    %cst_42 = arith.constant dense<0.000000e+00> : vector<200x128xf32>
    %67 = tpu.matmul %65, %66, %cst_42 {dimension_numbers = #tpu.dot_dimension_numbers<[1], [0], [0], [1], [0, 0, 1, 1], [], []>} : vector<200x16xf32>, vector<16x128xf32>, vector<200x128xf32> -> vector<200x128xf32>
    %c0_43 = arith.constant 0 : index
    %c0_44 = arith.constant 0 : index
    %68 = vector.load %arg7[%c0_43, %c0_44] : memref<1x128xf32, #tpu.memory_space<vmem>>, vector<1x128xf32>
    %69 = vector.broadcast %68 : vector<1x128xf32> to vector<200x128xf32>
    %70 = arith.addf %67, %69 : vector<200x128xf32>
    %cst_45 = arith.constant 0.000000e+00 : f32
    %71 = vector.broadcast %cst_45 : f32 to vector<200x128xf32>
    %72 = arith.maximumf %70, %71 : vector<200x128xf32>
    %c0_46 = arith.constant 0 : index
    %c0_47 = arith.constant 0 : index
    %73 = vector.load %arg8[%c0_46, %c0_47] : memref<128x256xf32, #tpu.memory_space<vmem>>, vector<128x256xf32>
    %cst_48 = arith.constant dense<0.000000e+00> : vector<200x256xf32>
    %74 = tpu.matmul %72, %73, %cst_48 {dimension_numbers = #tpu.dot_dimension_numbers<[1], [0], [0], [1], [0, 0, 1, 1], [], []>} : vector<200x128xf32>, vector<128x256xf32>, vector<200x256xf32> -> vector<200x256xf32>
    %c0_49 = arith.constant 0 : index
    %c0_50 = arith.constant 0 : index
    %75 = vector.load %arg9[%c0_49, %c0_50] : memref<1x256xf32, #tpu.memory_space<vmem>>, vector<1x256xf32>
    %76 = vector.broadcast %75 : vector<1x256xf32> to vector<200x256xf32>
    %77 = arith.addf %74, %76 : vector<200x256xf32>
    %cst_51 = arith.constant 0.000000e+00 : f32
    %78 = vector.broadcast %cst_51 : f32 to vector<200x256xf32>
    %79 = arith.maximumf %77, %78 : vector<200x256xf32>
    %c0_52 = arith.constant 0 : index
    %c0_53 = arith.constant 0 : index
    %80 = vector.load %arg10[%c0_52, %c0_53] : memref<256x256xf32, #tpu.memory_space<vmem>>, vector<256x256xf32>
    %cst_54 = arith.constant dense<0.000000e+00> : vector<200x256xf32>
    %81 = tpu.matmul %79, %80, %cst_54 {dimension_numbers = #tpu.dot_dimension_numbers<[1], [0], [0], [1], [0, 0, 1, 1], [], []>} : vector<200x256xf32>, vector<256x256xf32>, vector<200x256xf32> -> vector<200x256xf32>
    %c0_55 = arith.constant 0 : index
    %c0_56 = arith.constant 0 : index
    %82 = vector.load %arg11[%c0_55, %c0_56] : memref<1x256xf32, #tpu.memory_space<vmem>>, vector<1x256xf32>
    %83 = vector.broadcast %82 : vector<1x256xf32> to vector<200x256xf32>
    %84 = arith.addf %81, %83 : vector<200x256xf32>
    %cst_57 = arith.constant 0.000000e+00 : f32
    %85 = vector.broadcast %cst_57 : f32 to vector<200x256xf32>
    %86 = arith.subf %85, %84 : vector<200x256xf32>
    %87 = math.exp %86 : vector<200x256xf32>
    %cst_58 = arith.constant 1.000000e+00 : f32
    %88 = vector.broadcast %cst_58 : f32 to vector<200x256xf32>
    %89 = arith.addf %88, %87 : vector<200x256xf32>
    %90 = tpu.reciprocal %89 : vector<200x256xf32> -> vector<200x256xf32>
    %91 = vector.extract_strided_slice %90 {offsets = [0, 0], sizes = [8, 256], strides = [1, 1]} : vector<200x256xf32> to vector<8x256xf32>
    %c0_59 = arith.constant 0 : index
    %c0_60 = arith.constant 0 : index
    %c0_61 = arith.constant 0 : index
    %92 = vector.load %arg12[%c0_59, %c0_60, %c0_61] : memref<25x8x256xf32, #tpu.memory_space<vmem>>, vector<1x8x256xf32>
    %93 = vector.shape_cast %92 : vector<1x8x256xf32> to vector<8x256xf32>
    %94 = vector.shape_cast %91 : vector<8x256xf32> to vector<1x8x256xf32>
    tpu.vector_store %arg12[%c0_59, %c0_60, %c0_61], %94 {strides = array<i32>} : memref<25x8x256xf32, #tpu.memory_space<vmem>>, vector<1x8x256xf32>,
    %95 = vector.extract_strided_slice %90 {offsets = [8, 0], sizes = [8, 256], strides = [1, 1]} : vector<200x256xf32> to vector<8x256xf32>
    %c1 = arith.constant 1 : index
    %c0_62 = arith.constant 0 : index
    %c0_63 = arith.constant 0 : index
    %96 = vector.load %arg12[%c1, %c0_62, %c0_63] : memref<25x8x256xf32, #tpu.memory_space<vmem>>, vector<1x8x256xf32>
    %97 = vector.shape_cast %96 : vector<1x8x256xf32> to vector<8x256xf32>
    %98 = vector.shape_cast %95 : vector<8x256xf32> to vector<1x8x256xf32>
    tpu.vector_store %arg12[%c1, %c0_62, %c0_63], %98 {strides = array<i32>} : memref<25x8x256xf32, #tpu.memory_space<vmem>>, vector<1x8x256xf32>,
    %99 = vector.extract_strided_slice %90 {offsets = [16, 0], sizes = [8, 256], strides = [1, 1]} : vector<200x256xf32> to vector<8x256xf32>
    %c2 = arith.constant 2 : index
    %c0_64 = arith.constant 0 : index
    %c0_65 = arith.constant 0 : index
    %100 = vector.load %arg12[%c2, %c0_64, %c0_65] : memref<25x8x256xf32, #tpu.memory_space<vmem>>, vector<1x8x256xf32>
    %101 = vector.shape_cast %100 : vector<1x8x256xf32> to vector<8x256xf32>
    %102 = vector.shape_cast %99 : vector<8x256xf32> to vector<1x8x256xf32>
    tpu.vector_store %arg12[%c2, %c0_64, %c0_65], %102 {strides = array<i32>} : memref<25x8x256xf32, #tpu.memory_space<vmem>>, vector<1x8x256xf32>,
    %103 = vector.extract_strided_slice %90 {offsets = [24, 0], sizes = [8, 256], strides = [1, 1]} : vector<200x256xf32> to vector<8x256xf32>
    %c3 = arith.constant 3 : index
    %c0_66 = arith.constant 0 : index
    %c0_67 = arith.constant 0 : index
    %104 = vector.load %arg12[%c3, %c0_66, %c0_67] : memref<25x8x256xf32, #tpu.memory_space<vmem>>, vector<1x8x256xf32>
    %105 = vector.shape_cast %104 : vector<1x8x256xf32> to vector<8x256xf32>
    %106 = vector.shape_cast %103 : vector<8x256xf32> to vector<1x8x256xf32>
    tpu.vector_store %arg12[%c3, %c0_66, %c0_67], %106 {strides = array<i32>} : memref<25x8x256xf32, #tpu.memory_space<vmem>>, vector<1x8x256xf32>,
    %107 = vector.extract_strided_slice %90 {offsets = [32, 0], sizes = [8, 256], strides = [1, 1]} : vector<200x256xf32> to vector<8x256xf32>
    %c4 = arith.constant 4 : index
    %c0_68 = arith.constant 0 : index
    %c0_69 = arith.constant 0 : index
    %108 = vector.load %arg12[%c4, %c0_68, %c0_69] : memref<25x8x256xf32, #tpu.memory_space<vmem>>, vector<1x8x256xf32>
    %109 = vector.shape_cast %108 : vector<1x8x256xf32> to vector<8x256xf32>
    %110 = vector.shape_cast %107 : vector<8x256xf32> to vector<1x8x256xf32>
    tpu.vector_store %arg12[%c4, %c0_68, %c0_69], %110 {strides = array<i32>} : memref<25x8x256xf32, #tpu.memory_space<vmem>>, vector<1x8x256xf32>,
    %111 = vector.extract_strided_slice %90 {offsets = [40, 0], sizes = [8, 256], strides = [1, 1]} : vector<200x256xf32> to vector<8x256xf32>
    %c5 = arith.constant 5 : index
    %c0_70 = arith.constant 0 : index
    %c0_71 = arith.constant 0 : index
    %112 = vector.load %arg12[%c5, %c0_70, %c0_71] : memref<25x8x256xf32, #tpu.memory_space<vmem>>, vector<1x8x256xf32>
    %113 = vector.shape_cast %112 : vector<1x8x256xf32> to vector<8x256xf32>
    %114 = vector.shape_cast %111 : vector<8x256xf32> to vector<1x8x256xf32>
    tpu.vector_store %arg12[%c5, %c0_70, %c0_71], %114 {strides = array<i32>} : memref<25x8x256xf32, #tpu.memory_space<vmem>>, vector<1x8x256xf32>,
    %115 = vector.extract_strided_slice %90 {offsets = [48, 0], sizes = [8, 256], strides = [1, 1]} : vector<200x256xf32> to vector<8x256xf32>
    %c6 = arith.constant 6 : index
    %c0_72 = arith.constant 0 : index
    %c0_73 = arith.constant 0 : index
    %116 = vector.load %arg12[%c6, %c0_72, %c0_73] : memref<25x8x256xf32, #tpu.memory_space<vmem>>, vector<1x8x256xf32>
    %117 = vector.shape_cast %116 : vector<1x8x256xf32> to vector<8x256xf32>
    %118 = vector.shape_cast %115 : vector<8x256xf32> to vector<1x8x256xf32>
    tpu.vector_store %arg12[%c6, %c0_72, %c0_73], %118 {strides = array<i32>} : memref<25x8x256xf32, #tpu.memory_space<vmem>>, vector<1x8x256xf32>,
    %119 = vector.extract_strided_slice %90 {offsets = [56, 0], sizes = [8, 256], strides = [1, 1]} : vector<200x256xf32> to vector<8x256xf32>
    %c7 = arith.constant 7 : index
    %c0_74 = arith.constant 0 : index
    %c0_75 = arith.constant 0 : index
    %120 = vector.load %arg12[%c7, %c0_74, %c0_75] : memref<25x8x256xf32, #tpu.memory_space<vmem>>, vector<1x8x256xf32>
    %121 = vector.shape_cast %120 : vector<1x8x256xf32> to vector<8x256xf32>
    %122 = vector.shape_cast %119 : vector<8x256xf32> to vector<1x8x256xf32>
    tpu.vector_store %arg12[%c7, %c0_74, %c0_75], %122 {strides = array<i32>} : memref<25x8x256xf32, #tpu.memory_space<vmem>>, vector<1x8x256xf32>,
    %123 = vector.extract_strided_slice %90 {offsets = [64, 0], sizes = [8, 256], strides = [1, 1]} : vector<200x256xf32> to vector<8x256xf32>
    %c8_76 = arith.constant 8 : index
    %c0_77 = arith.constant 0 : index
    %c0_78 = arith.constant 0 : index
    %124 = vector.load %arg12[%c8_76, %c0_77, %c0_78] : memref<25x8x256xf32, #tpu.memory_space<vmem>>, vector<1x8x256xf32>
    %125 = vector.shape_cast %124 : vector<1x8x256xf32> to vector<8x256xf32>
    %126 = vector.shape_cast %123 : vector<8x256xf32> to vector<1x8x256xf32>
    tpu.vector_store %arg12[%c8_76, %c0_77, %c0_78], %126 {strides = array<i32>} : memref<25x8x256xf32, #tpu.memory_space<vmem>>, vector<1x8x256xf32>,
    %127 = vector.extract_strided_slice %90 {offsets = [72, 0], sizes = [8, 256], strides = [1, 1]} : vector<200x256xf32> to vector<8x256xf32>
    %c9 = arith.constant 9 : index
    %c0_79 = arith.constant 0 : index
    %c0_80 = arith.constant 0 : index
    %128 = vector.load %arg12[%c9, %c0_79, %c0_80] : memref<25x8x256xf32, #tpu.memory_space<vmem>>, vector<1x8x256xf32>
    %129 = vector.shape_cast %128 : vector<1x8x256xf32> to vector<8x256xf32>
    %130 = vector.shape_cast %127 : vector<8x256xf32> to vector<1x8x256xf32>
    tpu.vector_store %arg12[%c9, %c0_79, %c0_80], %130 {strides = array<i32>} : memref<25x8x256xf32, #tpu.memory_space<vmem>>, vector<1x8x256xf32>,
    %131 = vector.extract_strided_slice %90 {offsets = [80, 0], sizes = [8, 256], strides = [1, 1]} : vector<200x256xf32> to vector<8x256xf32>
    %c10 = arith.constant 10 : index
    %c0_81 = arith.constant 0 : index
    %c0_82 = arith.constant 0 : index
    %132 = vector.load %arg12[%c10, %c0_81, %c0_82] : memref<25x8x256xf32, #tpu.memory_space<vmem>>, vector<1x8x256xf32>
    %133 = vector.shape_cast %132 : vector<1x8x256xf32> to vector<8x256xf32>
    %134 = vector.shape_cast %131 : vector<8x256xf32> to vector<1x8x256xf32>
    tpu.vector_store %arg12[%c10, %c0_81, %c0_82], %134 {strides = array<i32>} : memref<25x8x256xf32, #tpu.memory_space<vmem>>, vector<1x8x256xf32>,
    %135 = vector.extract_strided_slice %90 {offsets = [88, 0], sizes = [8, 256], strides = [1, 1]} : vector<200x256xf32> to vector<8x256xf32>
    %c11 = arith.constant 11 : index
    %c0_83 = arith.constant 0 : index
    %c0_84 = arith.constant 0 : index
    %136 = vector.load %arg12[%c11, %c0_83, %c0_84] : memref<25x8x256xf32, #tpu.memory_space<vmem>>, vector<1x8x256xf32>
    %137 = vector.shape_cast %136 : vector<1x8x256xf32> to vector<8x256xf32>
    %138 = vector.shape_cast %135 : vector<8x256xf32> to vector<1x8x256xf32>
    tpu.vector_store %arg12[%c11, %c0_83, %c0_84], %138 {strides = array<i32>} : memref<25x8x256xf32, #tpu.memory_space<vmem>>, vector<1x8x256xf32>,
    %139 = vector.extract_strided_slice %90 {offsets = [96, 0], sizes = [8, 256], strides = [1, 1]} : vector<200x256xf32> to vector<8x256xf32>
    %c12 = arith.constant 12 : index
    %c0_85 = arith.constant 0 : index
    %c0_86 = arith.constant 0 : index
    %140 = vector.load %arg12[%c12, %c0_85, %c0_86] : memref<25x8x256xf32, #tpu.memory_space<vmem>>, vector<1x8x256xf32>
    %141 = vector.shape_cast %140 : vector<1x8x256xf32> to vector<8x256xf32>
    %142 = vector.shape_cast %139 : vector<8x256xf32> to vector<1x8x256xf32>
    tpu.vector_store %arg12[%c12, %c0_85, %c0_86], %142 {strides = array<i32>} : memref<25x8x256xf32, #tpu.memory_space<vmem>>, vector<1x8x256xf32>,
    %143 = vector.extract_strided_slice %90 {offsets = [104, 0], sizes = [8, 256], strides = [1, 1]} : vector<200x256xf32> to vector<8x256xf32>
    %c13 = arith.constant 13 : index
    %c0_87 = arith.constant 0 : index
    %c0_88 = arith.constant 0 : index
    %144 = vector.load %arg12[%c13, %c0_87, %c0_88] : memref<25x8x256xf32, #tpu.memory_space<vmem>>, vector<1x8x256xf32>
    %145 = vector.shape_cast %144 : vector<1x8x256xf32> to vector<8x256xf32>
    %146 = vector.shape_cast %143 : vector<8x256xf32> to vector<1x8x256xf32>
    tpu.vector_store %arg12[%c13, %c0_87, %c0_88], %146 {strides = array<i32>} : memref<25x8x256xf32, #tpu.memory_space<vmem>>, vector<1x8x256xf32>,
    %147 = vector.extract_strided_slice %90 {offsets = [112, 0], sizes = [8, 256], strides = [1, 1]} : vector<200x256xf32> to vector<8x256xf32>
    %c14 = arith.constant 14 : index
    %c0_89 = arith.constant 0 : index
    %c0_90 = arith.constant 0 : index
    %148 = vector.load %arg12[%c14, %c0_89, %c0_90] : memref<25x8x256xf32, #tpu.memory_space<vmem>>, vector<1x8x256xf32>
    %149 = vector.shape_cast %148 : vector<1x8x256xf32> to vector<8x256xf32>
    %150 = vector.shape_cast %147 : vector<8x256xf32> to vector<1x8x256xf32>
    tpu.vector_store %arg12[%c14, %c0_89, %c0_90], %150 {strides = array<i32>} : memref<25x8x256xf32, #tpu.memory_space<vmem>>, vector<1x8x256xf32>,
    %151 = vector.extract_strided_slice %90 {offsets = [120, 0], sizes = [8, 256], strides = [1, 1]} : vector<200x256xf32> to vector<8x256xf32>
    %c15 = arith.constant 15 : index
    %c0_91 = arith.constant 0 : index
    %c0_92 = arith.constant 0 : index
    %152 = vector.load %arg12[%c15, %c0_91, %c0_92] : memref<25x8x256xf32, #tpu.memory_space<vmem>>, vector<1x8x256xf32>
    %153 = vector.shape_cast %152 : vector<1x8x256xf32> to vector<8x256xf32>
    %154 = vector.shape_cast %151 : vector<8x256xf32> to vector<1x8x256xf32>
    tpu.vector_store %arg12[%c15, %c0_91, %c0_92], %154 {strides = array<i32>} : memref<25x8x256xf32, #tpu.memory_space<vmem>>, vector<1x8x256xf32>,
    %155 = vector.extract_strided_slice %90 {offsets = [128, 0], sizes = [8, 256], strides = [1, 1]} : vector<200x256xf32> to vector<8x256xf32>
    %c16_93 = arith.constant 16 : index
    %c0_94 = arith.constant 0 : index
    %c0_95 = arith.constant 0 : index
    %156 = vector.load %arg12[%c16_93, %c0_94, %c0_95] : memref<25x8x256xf32, #tpu.memory_space<vmem>>, vector<1x8x256xf32>
    %157 = vector.shape_cast %156 : vector<1x8x256xf32> to vector<8x256xf32>
    %158 = vector.shape_cast %155 : vector<8x256xf32> to vector<1x8x256xf32>
    tpu.vector_store %arg12[%c16_93, %c0_94, %c0_95], %158 {strides = array<i32>} : memref<25x8x256xf32, #tpu.memory_space<vmem>>, vector<1x8x256xf32>,
    %159 = vector.extract_strided_slice %90 {offsets = [136, 0], sizes = [8, 256], strides = [1, 1]} : vector<200x256xf32> to vector<8x256xf32>
    %c17 = arith.constant 17 : index
    %c0_96 = arith.constant 0 : index
    %c0_97 = arith.constant 0 : index
    %160 = vector.load %arg12[%c17, %c0_96, %c0_97] : memref<25x8x256xf32, #tpu.memory_space<vmem>>, vector<1x8x256xf32>
    %161 = vector.shape_cast %160 : vector<1x8x256xf32> to vector<8x256xf32>
    %162 = vector.shape_cast %159 : vector<8x256xf32> to vector<1x8x256xf32>
    tpu.vector_store %arg12[%c17, %c0_96, %c0_97], %162 {strides = array<i32>} : memref<25x8x256xf32, #tpu.memory_space<vmem>>, vector<1x8x256xf32>,
    %163 = vector.extract_strided_slice %90 {offsets = [144, 0], sizes = [8, 256], strides = [1, 1]} : vector<200x256xf32> to vector<8x256xf32>
    %c18 = arith.constant 18 : index
    %c0_98 = arith.constant 0 : index
    %c0_99 = arith.constant 0 : index
    %164 = vector.load %arg12[%c18, %c0_98, %c0_99] : memref<25x8x256xf32, #tpu.memory_space<vmem>>, vector<1x8x256xf32>
    %165 = vector.shape_cast %164 : vector<1x8x256xf32> to vector<8x256xf32>
    %166 = vector.shape_cast %163 : vector<8x256xf32> to vector<1x8x256xf32>
    tpu.vector_store %arg12[%c18, %c0_98, %c0_99], %166 {strides = array<i32>} : memref<25x8x256xf32, #tpu.memory_space<vmem>>, vector<1x8x256xf32>,
    %167 = vector.extract_strided_slice %90 {offsets = [152, 0], sizes = [8, 256], strides = [1, 1]} : vector<200x256xf32> to vector<8x256xf32>
    %c19 = arith.constant 19 : index
    %c0_100 = arith.constant 0 : index
    %c0_101 = arith.constant 0 : index
    %168 = vector.load %arg12[%c19, %c0_100, %c0_101] : memref<25x8x256xf32, #tpu.memory_space<vmem>>, vector<1x8x256xf32>
    %169 = vector.shape_cast %168 : vector<1x8x256xf32> to vector<8x256xf32>
    %170 = vector.shape_cast %167 : vector<8x256xf32> to vector<1x8x256xf32>
    tpu.vector_store %arg12[%c19, %c0_100, %c0_101], %170 {strides = array<i32>} : memref<25x8x256xf32, #tpu.memory_space<vmem>>, vector<1x8x256xf32>,
    %171 = vector.extract_strided_slice %90 {offsets = [160, 0], sizes = [8, 256], strides = [1, 1]} : vector<200x256xf32> to vector<8x256xf32>
    %c20 = arith.constant 20 : index
    %c0_102 = arith.constant 0 : index
    %c0_103 = arith.constant 0 : index
    %172 = vector.load %arg12[%c20, %c0_102, %c0_103] : memref<25x8x256xf32, #tpu.memory_space<vmem>>, vector<1x8x256xf32>
    %173 = vector.shape_cast %172 : vector<1x8x256xf32> to vector<8x256xf32>
    %174 = vector.shape_cast %171 : vector<8x256xf32> to vector<1x8x256xf32>
    tpu.vector_store %arg12[%c20, %c0_102, %c0_103], %174 {strides = array<i32>} : memref<25x8x256xf32, #tpu.memory_space<vmem>>, vector<1x8x256xf32>,
    %175 = vector.extract_strided_slice %90 {offsets = [168, 0], sizes = [8, 256], strides = [1, 1]} : vector<200x256xf32> to vector<8x256xf32>
    %c21 = arith.constant 21 : index
    %c0_104 = arith.constant 0 : index
    %c0_105 = arith.constant 0 : index
    %176 = vector.load %arg12[%c21, %c0_104, %c0_105] : memref<25x8x256xf32, #tpu.memory_space<vmem>>, vector<1x8x256xf32>
    %177 = vector.shape_cast %176 : vector<1x8x256xf32> to vector<8x256xf32>
    %178 = vector.shape_cast %175 : vector<8x256xf32> to vector<1x8x256xf32>
    tpu.vector_store %arg12[%c21, %c0_104, %c0_105], %178 {strides = array<i32>} : memref<25x8x256xf32, #tpu.memory_space<vmem>>, vector<1x8x256xf32>,
    %179 = vector.extract_strided_slice %90 {offsets = [176, 0], sizes = [8, 256], strides = [1, 1]} : vector<200x256xf32> to vector<8x256xf32>
    %c22 = arith.constant 22 : index
    %c0_106 = arith.constant 0 : index
    %c0_107 = arith.constant 0 : index
    %180 = vector.load %arg12[%c22, %c0_106, %c0_107] : memref<25x8x256xf32, #tpu.memory_space<vmem>>, vector<1x8x256xf32>
    %181 = vector.shape_cast %180 : vector<1x8x256xf32> to vector<8x256xf32>
    %182 = vector.shape_cast %179 : vector<8x256xf32> to vector<1x8x256xf32>
    tpu.vector_store %arg12[%c22, %c0_106, %c0_107], %182 {strides = array<i32>} : memref<25x8x256xf32, #tpu.memory_space<vmem>>, vector<1x8x256xf32>,
    %183 = vector.extract_strided_slice %90 {offsets = [184, 0], sizes = [8, 256], strides = [1, 1]} : vector<200x256xf32> to vector<8x256xf32>
    %c23 = arith.constant 23 : index
    %c0_108 = arith.constant 0 : index
    %c0_109 = arith.constant 0 : index
    %184 = vector.load %arg12[%c23, %c0_108, %c0_109] : memref<25x8x256xf32, #tpu.memory_space<vmem>>, vector<1x8x256xf32>
    %185 = vector.shape_cast %184 : vector<1x8x256xf32> to vector<8x256xf32>
    %186 = vector.shape_cast %183 : vector<8x256xf32> to vector<1x8x256xf32>
    tpu.vector_store %arg12[%c23, %c0_108, %c0_109], %186 {strides = array<i32>} : memref<25x8x256xf32, #tpu.memory_space<vmem>>, vector<1x8x256xf32>,
    %187 = vector.extract_strided_slice %90 {offsets = [192, 0], sizes = [8, 256], strides = [1, 1]} : vector<200x256xf32> to vector<8x256xf32>
    %c24_110 = arith.constant 24 : index
    %c0_111 = arith.constant 0 : index
    %c0_112 = arith.constant 0 : index
    %188 = vector.load %arg12[%c24_110, %c0_111, %c0_112] : memref<25x8x256xf32, #tpu.memory_space<vmem>>, vector<1x8x256xf32>
    %189 = vector.shape_cast %188 : vector<1x8x256xf32> to vector<8x256xf32>
    %190 = vector.shape_cast %187 : vector<8x256xf32> to vector<1x8x256xf32>
    tpu.vector_store %arg12[%c24_110, %c0_111, %c0_112], %190 {strides = array<i32>} : memref<25x8x256xf32, #tpu.memory_space<vmem>>, vector<1x8x256xf32>,
    return
  }
  func.func @transform_0(%arg0: i32) -> (i32, i32) {
    %c0_i32 = arith.constant 0 : i32
    %c0_i32_0 = arith.constant 0 : i32
    return %arg0, %c0_i32 : i32, i32
  }
  func.func @transform_1(%arg0: i32) -> (i32, i32) {
    %c0_i32 = arith.constant 0 : i32
    %c0_i32_0 = arith.constant 0 : i32
    %c0_i32_1 = arith.constant 0 : i32
    return %c0_i32, %c0_i32_0 : i32, i32
  }
  func.func @transform_2(%arg0: i32) -> (i32, i32) {
    %c0_i32 = arith.constant 0 : i32
    %c0_i32_0 = arith.constant 0 : i32
    %c0_i32_1 = arith.constant 0 : i32
    return %c0_i32, %c0_i32_0 : i32, i32
  }
  func.func @transform_3(%arg0: i32) -> (i32, i32) {
    %c0_i32 = arith.constant 0 : i32
    %c0_i32_0 = arith.constant 0 : i32
    %c0_i32_1 = arith.constant 0 : i32
    return %c0_i32, %c0_i32_0 : i32, i32
  }
  func.func @transform_4(%arg0: i32) -> (i32, i32) {
    %c0_i32 = arith.constant 0 : i32
    %c0_i32_0 = arith.constant 0 : i32
    %c0_i32_1 = arith.constant 0 : i32
    return %c0_i32, %c0_i32_0 : i32, i32
  }
  func.func @transform_5(%arg0: i32) -> (i32, i32) {
    %c0_i32 = arith.constant 0 : i32
    %c0_i32_0 = arith.constant 0 : i32
    %c0_i32_1 = arith.constant 0 : i32
    return %c0_i32, %c0_i32_0 : i32, i32
  }
  func.func @transform_6(%arg0: i32) -> (i32, i32) {
    %c0_i32 = arith.constant 0 : i32
    %c0_i32_0 = arith.constant 0 : i32
    %c0_i32_1 = arith.constant 0 : i32
    return %c0_i32, %c0_i32_0 : i32, i32
  }
  func.func @transform_7(%arg0: i32) -> (i32, i32) {
    %c0_i32 = arith.constant 0 : i32
    %c0_i32_0 = arith.constant 0 : i32
    %c0_i32_1 = arith.constant 0 : i32
    return %c0_i32, %c0_i32_0 : i32, i32
  }
  func.func @transform_8(%arg0: i32) -> (i32, i32) {
    %c0_i32 = arith.constant 0 : i32
    %c0_i32_0 = arith.constant 0 : i32
    %c0_i32_1 = arith.constant 0 : i32
    return %c0_i32, %c0_i32_0 : i32, i32
  }
  func.func @transform_9(%arg0: i32) -> (i32, i32) {
    %c0_i32 = arith.constant 0 : i32
    %c0_i32_0 = arith.constant 0 : i32
    %c0_i32_1 = arith.constant 0 : i32
    return %c0_i32, %c0_i32_0 : i32, i32
  }
  func.func @transform_10(%arg0: i32) -> (i32, i32) {
    %c0_i32 = arith.constant 0 : i32
    %c0_i32_0 = arith.constant 0 : i32
    %c0_i32_1 = arith.constant 0 : i32
    return %c0_i32, %c0_i32_0 : i32, i32
  }
  func.func @transform_11(%arg0: i32) -> (i32, i32, i32) {
    %c0_i32 = arith.constant 0 : i32
    %c0_i32_0 = arith.constant 0 : i32
    %c0_i32_1 = arith.constant 0 : i32
    return %c0_i32, %arg0, %c0_i32_0 : i32, i32, i32
  }
}

</mosaic_0001>

<llo_original>
// kernel: conv_decoder_forward.1
$region0: #{conv_decoder_forward.1}
  #allocation0 [shape = 'u32[]', space=smem, size = 0x4, offset = 0x4, fixed_abs, tag = 'smem constant byte address 0x4 - core index']
  #allocation1 [shape = 'u32[144,128]{1,0:T(1,128)}', space=vmem, size = 0x12000, scoped, tag = 'internal scratch']
  #allocation2 [shape = 'f32[200,16]{1,0:T(8,128)}', space=vmem, size = 0x19000, scoped, tag = 'scratch operand']
  %s0 = inlined_call_operand.hbm [shape: f32[16,64], index: 0, kind: input, shape index: {}]
  %s1 = inlined_call_operand.hbm [shape: f32[64,128], index: 1, kind: input, shape index: {}]
  %s2 = inlined_call_operand.hbm [shape: f32[1,128], index: 2, kind: input, shape index: {}]
  %s3 = inlined_call_operand.vmem [shape: f32[128,400], index: 3, kind: input, shape index: {}]
  %s4 = inlined_call_operand.hbm [shape: f32[1,400], index: 4, kind: input, shape index: {}]
  %s5 = inlined_call_operand.hbm [shape: f32[16,128], index: 5, kind: input, shape index: {}]
  %s6 = inlined_call_operand.hbm [shape: f32[1,128], index: 6, kind: input, shape index: {}]
  %s7 = inlined_call_operand.hbm [shape: f32[128,256], index: 7, kind: input, shape index: {}]
  %s8 = inlined_call_operand.hbm [shape: f32[1,256], index: 8, kind: input, shape index: {}]
  %s9 = inlined_call_operand.hbm [shape: f32[256,256], index: 9, kind: input, shape index: {}]
  %s10 = inlined_call_operand.hbm [shape: f32[1,256], index: 10, kind: input, shape index: {}]
  %s11 = inlined_call_operand.vmem [shape: f32[25,16,256], index: 11, kind: output, shape index: {}]
  %s12 = sld [smem:[#allocation0]]
  $region136: #{conv_decoder_forward.1} parent=0
    _
  %s14 = ssub.s32 1, %s12
  %s15 = scalar_select 0, %s14, %s12
  $region1: #{conv_decoder_forward.1} parent=0
    #allocation3 [shape = 'u8[8192]{0}', space=vmem, size = 0x2000, scoped, tag = 'input window, operand 0']
    #allocation4 [shape = 's32[2]{0}', space=sflag, size = 0x8, scoped, tag = 'scoped memory for conv_decoder_forward.1']
    #allocation5 [shape = 'u8[32768]{0}', space=vmem, size = 0x8000, scoped, tag = 'input window, operand 1, single buffered']
    #allocation6 [shape = 's32[1]{0}', space=sflag, size = 0x4, scoped, tag = 'scoped memory for conv_decoder_forward.1']
    #allocation7 [shape = 'u8[512]{0}', space=vmem, size = 0x400, scoped, tag = 'input window, operand 2, single buffered']
    #allocation8 [shape = 'u8[2048]{0}', space=vmem, size = 0x800, scoped, tag = 'input window, operand 4, single buffered']
    #allocation9 [shape = 's32[1]{0}', space=sflag, size = 0x4, scoped, tag = 'scoped memory for conv_decoder_forward.1']
    #allocation10 [shape = 'u8[8192]{0}', space=vmem, size = 0x2000, scoped, tag = 'input window, operand 5, single buffered']
    #allocation11 [shape = 'u8[512]{0}', space=vmem, size = 0x400, scoped, tag = 'input window, operand 6, single buffered']
    #allocation12 [shape = 's32[1]{0}', space=sflag, size = 0x4, scoped, tag = 'scoped memory for conv_decoder_forward.1']
    #allocation13 [shape = 'u8[131072]{0}', space=vmem, size = 0x20000, scoped, tag = 'input window, operand 7, single buffered']
    #allocation14 [shape = 'u8[1024]{0}', space=vmem, size = 0x400, scoped, tag = 'input window, operand 8, single buffered']
    #allocation15 [shape = 's32[1]{0}', space=sflag, size = 0x4, scoped, tag = 'scoped memory for conv_decoder_forward.1']
    #allocation16 [shape = 'u8[262144]{0}', space=vmem, size = 0x40000, scoped, tag = 'input window, operand 9, single buffered']
    #allocation17 [shape = 'u8[1024]{0}', space=vmem, size = 0x400, scoped, tag = 'input window, operand 10, single buffered']
    #allocation18 [shape = 's32[1]{0}', space=sflag, size = 0x4, scoped, tag = 'scoped memory for conv_decoder_forward.1']
    #allocation19 [shape = 'u8[409600]{0}', space=vmem, size = 0x64000, scoped, tag = 'output window, operand 0']
    %16 = vsyncpa [#allocation4], 0
    %s17 = scalar_lea.sflag [#allocation4], 1
    %18 = vsyncpa %s17, 0
    %19 = vsyncpa [#allocation6], 0
    %20 = vsyncpa [#allocation9], 0
    %21 = vsyncpa [#allocation12], 0
    %22 = vsyncpa [#allocation15], 0
    %23 = vsyncpa [#allocation18], 0
    loop: start=0, step=1, limit=4
    $region2: #{conv_decoder_forward.1} parent=1 // loop_pre_header
      _
    $region3: #{conv_decoder_forward.1} parent=1 // loop_header
      %s25 = sphi 0, %s29
      %p26 = scmp.ge.s32.totalorder %s25, 4
      %s35 = sphi 0, %s37
      %s38 = sphi 0, %s35
      %s39 = sphi 0, %s38
      %s55 = sphi 0, %s39
      %s59 = sphi 0, %s59
      %s61 = sphi 0, %s59
      %s62 = sphi 0, %s61
      %s76 = sphi 0, %s62
      %s80 = sphi 0, %s80
      %s82 = sphi 0, %s80
      %s83 = sphi 0, %s82
      %s97 = sphi 0, %s83
      %s101 = sphi 0, %s101
      %s103 = sphi 0, %s101
      %s104 = sphi 0, %s103
      %s118 = sphi 0, %s104
      %s122 = sphi 0, %s122
      %s124 = sphi 0, %s122
      %s125 = sphi 0, %s124
      %s139 = sphi 0, %s125
      %s143 = sphi 0, %s143
      %s145 = sphi 0, %s143
      %s146 = sphi 0, %s145
      %s160 = sphi 0, %s146
      %s164 = sphi 0, %s164
      %s166 = sphi 0, %s164
      %s167 = sphi 0, %s166
      %s181 = sphi 0, %s167
      %s185 = sphi 0, %s185
      %s187 = sphi 0, %s185
      %s188 = sphi 0, %s187
      %s202 = sphi 0, %s188
      %s206 = sphi 0, %s206
      %s208 = sphi 0, %s206
      %s209 = sphi 0, %s208
      %s223 = sphi 0, %s209
      %s227 = sphi 0, %s227
      %s229 = sphi 0, %s227
      %s230 = sphi 0, %s229
      %s244 = sphi 0, %s230
      %s248 = sphi 0, %s248
      %s250 = sphi 0, %s248
      %s251 = sphi 0, %s250
      %s265 = sphi 0, %s251
      %s271 = sphi 0, %s273
      %s274 = sphi 0, %s271
      %s275 = sphi 0, %s274
      %s291 = sphi 0, %s275
    $region4: #{conv_decoder_forward.1} parent=1 // loop_header_branch
      %28 = sbr.rel (%p26) target = $region8
    $region5: #{conv_decoder_forward.1} parent=1 // loop_body
      %s30 = ssub.s32 %s25, 1
      %s31 = ssub.s32 %s25, 2
      %s32 = sadd.s32 %s25, 1
      %s33 = ssub.s32 %s25, %s32
      %p34 = scmp.eq.s32.totalorder %s33, 0
      %s36 = sadd.s32 %s35, 1
      %s37 = scalar_select %p34, %s35, %s36
      %p40 = pneg %p34
      %p41 = scmp.eq.s32.totalorder %s25, 1
      %p42 = por %p40, %p41
      %p43 = scmp.ne.s32.totalorder %s35, %s38
      %p44 = scmp.eq.s32.totalorder %s25, 0
      %p45 = por %p43, %p44
      %p46 = scmp.ne.s32.totalorder %s35, %s38
      %p47 = scmp.eq.s32.totalorder %s30, 1
      %p48 = por %p46, %p47
      %p49 = scmp.ne.s32.totalorder %s38, %s39
      %p50 = scmp.eq.s32.totalorder %s30, 0
      %p51 = por %p49, %p50
      %p52 = scmp.ne.s32.totalorder %s38, %s39
      %p53 = scmp.eq.s32.totalorder %s31, 1
      %p54 = por %p52, %p53
      %p56 = scmp.ne.s32.totalorder %s39, %s55
      %p57 = scmp.eq.s32.totalorder %s31, 0
      %p58 = por %p56, %p57
      %s60 = sadd.s32 %s59, 1
      %p63 = scmp.eq.s32.totalorder %s25, 1
      %p64 = scmp.ne.s32.totalorder %s59, %s61
      %p65 = scmp.eq.s32.totalorder %s25, 0
      %p66 = por %p64, %p65
      %p67 = scmp.ne.s32.totalorder %s59, %s61
      %p68 = scmp.eq.s32.totalorder %s30, 1
      %p69 = por %p67, %p68
      %p70 = scmp.ne.s32.totalorder %s61, %s62
      %p71 = scmp.eq.s32.totalorder %s30, 0
      %p72 = por %p70, %p71
      %p73 = scmp.ne.s32.totalorder %s61, %s62
      %p74 = scmp.eq.s32.totalorder %s31, 1
      %p75 = por %p73, %p74
      %p77 = scmp.ne.s32.totalorder %s62, %s76
      %p78 = scmp.eq.s32.totalorder %s31, 0
      %p79 = por %p77, %p78
      %s81 = sadd.s32 %s80, 1
      %p84 = scmp.eq.s32.totalorder %s25, 1
      %p85 = scmp.ne.s32.totalorder %s80, %s82
      %p86 = scmp.eq.s32.totalorder %s25, 0
      %p87 = por %p85, %p86
      %p88 = scmp.ne.s32.totalorder %s80, %s82
      %p89 = scmp.eq.s32.totalorder %s30, 1
      %p90 = por %p88, %p89
      %p91 = scmp.ne.s32.totalorder %s82, %s83
      %p92 = scmp.eq.s32.totalorder %s30, 0
      %p93 = por %p91, %p92
      %p94 = scmp.ne.s32.totalorder %s82, %s83
      %p95 = scmp.eq.s32.totalorder %s31, 1
      %p96 = por %p94, %p95
      %p98 = scmp.ne.s32.totalorder %s83, %s97
      %p99 = scmp.eq.s32.totalorder %s31, 0
      %p100 = por %p98, %p99
      %s102 = sadd.s32 %s101, 1
      %p105 = scmp.eq.s32.totalorder %s25, 1
      %p106 = scmp.ne.s32.totalorder %s101, %s103
      %p107 = scmp.eq.s32.totalorder %s25, 0
      %p108 = por %p106, %p107
      %p109 = scmp.ne.s32.totalorder %s101, %s103
      %p110 = scmp.eq.s32.totalorder %s30, 1
      %p111 = por %p109, %p110
      %p112 = scmp.ne.s32.totalorder %s103, %s104
      %p113 = scmp.eq.s32.totalorder %s30, 0
      %p114 = por %p112, %p113
      %p115 = scmp.ne.s32.totalorder %s103, %s104
      %p116 = scmp.eq.s32.totalorder %s31, 1
      %p117 = por %p115, %p116
      %p119 = scmp.ne.s32.totalorder %s104, %s118
      %p120 = scmp.eq.s32.totalorder %s31, 0
      %p121 = por %p119, %p120
      %s123 = sadd.s32 %s122, 1
      %p126 = scmp.eq.s32.totalorder %s25, 1
      %p127 = scmp.ne.s32.totalorder %s122, %s124
      %p128 = scmp.eq.s32.totalorder %s25, 0
      %p129 = por %p127, %p128
      %p130 = scmp.ne.s32.totalorder %s122, %s124
      %p131 = scmp.eq.s32.totalorder %s30, 1
      %p132 = por %p130, %p131
      %p133 = scmp.ne.s32.totalorder %s124, %s125
      %p134 = scmp.eq.s32.totalorder %s30, 0
      %p135 = por %p133, %p134
      %p136 = scmp.ne.s32.totalorder %s124, %s125
      %p137 = scmp.eq.s32.totalorder %s31, 1
      %p138 = por %p136, %p137
      %p140 = scmp.ne.s32.totalorder %s125, %s139
      %p141 = scmp.eq.s32.totalorder %s31, 0
      %p142 = por %p140, %p141
      %s144 = sadd.s32 %s143, 1
      %p147 = scmp.eq.s32.totalorder %s25, 1
      %p148 = scmp.ne.s32.totalorder %s143, %s145
      %p149 = scmp.eq.s32.totalorder %s25, 0
      %p150 = por %p148, %p149
      %p151 = scmp.ne.s32.totalorder %s143, %s145
      %p152 = scmp.eq.s32.totalorder %s30, 1
      %p153 = por %p151, %p152
      %p154 = scmp.ne.s32.totalorder %s145, %s146
      %p155 = scmp.eq.s32.totalorder %s30, 0
      %p156 = por %p154, %p155
      %p157 = scmp.ne.s32.totalorder %s145, %s146
      %p158 = scmp.eq.s32.totalorder %s31, 1
      %p159 = por %p157, %p158
      %p161 = scmp.ne.s32.totalorder %s146, %s160
      %p162 = scmp.eq.s32.totalorder %s31, 0
      %p163 = por %p161, %p162
      %s165 = sadd.s32 %s164, 1
      %p168 = scmp.eq.s32.totalorder %s25, 1
      %p169 = scmp.ne.s32.totalorder %s164, %s166
      %p170 = scmp.eq.s32.totalorder %s25, 0
      %p171 = por %p169, %p170
      %p172 = scmp.ne.s32.totalorder %s164, %s166
      %p173 = scmp.eq.s32.totalorder %s30, 1
      %p174 = por %p172, %p173
      %p175 = scmp.ne.s32.totalorder %s166, %s167
      %p176 = scmp.eq.s32.totalorder %s30, 0
      %p177 = por %p175, %p176
      %p178 = scmp.ne.s32.totalorder %s166, %s167
      %p179 = scmp.eq.s32.totalorder %s31, 1
      %p180 = por %p178, %p179
      %p182 = scmp.ne.s32.totalorder %s167, %s181
      %p183 = scmp.eq.s32.totalorder %s31, 0
      %p184 = por %p182, %p183
      %s186 = sadd.s32 %s185, 1
      %p189 = scmp.eq.s32.totalorder %s25, 1
      %p190 = scmp.ne.s32.totalorder %s185, %s187
      %p191 = scmp.eq.s32.totalorder %s25, 0
      %p192 = por %p190, %p191
      %p193 = scmp.ne.s32.totalorder %s185, %s187
      %p194 = scmp.eq.s32.totalorder %s30, 1
      %p195 = por %p193, %p194
      %p196 = scmp.ne.s32.totalorder %s187, %s188
      %p197 = scmp.eq.s32.totalorder %s30, 0
      %p198 = por %p196, %p197
      %p199 = scmp.ne.s32.totalorder %s187, %s188
      %p200 = scmp.eq.s32.totalorder %s31, 1
      %p201 = por %p199, %p200
      %p203 = scmp.ne.s32.totalorder %s188, %s202
      %p204 = scmp.eq.s32.totalorder %s31, 0
      %p205 = por %p203, %p204
      %s207 = sadd.s32 %s206, 1
      %p210 = scmp.eq.s32.totalorder %s25, 1
      %p211 = scmp.ne.s32.totalorder %s206, %s208
      %p212 = scmp.eq.s32.totalorder %s25, 0
      %p213 = por %p211, %p212
      %p214 = scmp.ne.s32.totalorder %s206, %s208
      %p215 = scmp.eq.s32.totalorder %s30, 1
      %p216 = por %p214, %p215
      %p217 = scmp.ne.s32.totalorder %s208, %s209
      %p218 = scmp.eq.s32.totalorder %s30, 0
      %p219 = por %p217, %p218
      %p220 = scmp.ne.s32.totalorder %s208, %s209
      %p221 = scmp.eq.s32.totalorder %s31, 1
      %p222 = por %p220, %p221
      %p224 = scmp.ne.s32.totalorder %s209, %s223
      %p225 = scmp.eq.s32.totalorder %s31, 0
      %p226 = por %p224, %p225
      %s228 = sadd.s32 %s227, 1
      %p231 = scmp.eq.s32.totalorder %s25, 1
      %p232 = scmp.ne.s32.totalorder %s227, %s229
      %p233 = scmp.eq.s32.totalorder %s25, 0
      %p234 = por %p232, %p233
      %p235 = scmp.ne.s32.totalorder %s227, %s229
      %p236 = scmp.eq.s32.totalorder %s30, 1
      %p237 = por %p235, %p236
      %p238 = scmp.ne.s32.totalorder %s229, %s230
      %p239 = scmp.eq.s32.totalorder %s30, 0
      %p240 = por %p238, %p239
      %p241 = scmp.ne.s32.totalorder %s229, %s230
      %p242 = scmp.eq.s32.totalorder %s31, 1
      %p243 = por %p241, %p242
      %p245 = scmp.ne.s32.totalorder %s230, %s244
      %p246 = scmp.eq.s32.totalorder %s31, 0
      %p247 = por %p245, %p246
      %s249 = sadd.s32 %s248, 1
      %p252 = scmp.eq.s32.totalorder %s25, 1
      %p253 = scmp.ne.s32.totalorder %s248, %s250
      %p254 = scmp.eq.s32.totalorder %s25, 0
      %p255 = por %p253, %p254
      %p256 = scmp.ne.s32.totalorder %s248, %s250
      %p257 = scmp.eq.s32.totalorder %s30, 1
      %p258 = por %p256, %p257
      %p259 = scmp.ne.s32.totalorder %s250, %s251
      %p260 = scmp.eq.s32.totalorder %s30, 0
      %p261 = por %p259, %p260
      %p262 = scmp.ne.s32.totalorder %s250, %s251
      %p263 = scmp.eq.s32.totalorder %s31, 1
      %p264 = por %p262, %p263
      %p266 = scmp.ne.s32.totalorder %s251, %s265
      %p267 = scmp.eq.s32.totalorder %s31, 0
      %p268 = por %p266, %p267
      %s269 = ssub.s32 %s25, %s32
      %p270 = scmp.eq.s32.totalorder %s269, 0
      %s272 = sadd.s32 %s271, 1
      %s273 = scalar_select %p270, %s271, %s272
      %p276 = pneg %p270
      %p277 = scmp.eq.s32.totalorder %s25, 1
      %p278 = por %p276, %p277
      %p279 = scmp.ne.s32.totalorder %s271, %s274
      %p280 = scmp.eq.s32.totalorder %s25, 0
      %p281 = por %p279, %p280
      %p282 = scmp.ne.s32.totalorder %s271, %s274
      %p283 = scmp.eq.s32.totalorder %s30, 1
      %p284 = por %p282, %p283
      %p285 = scmp.ne.s32.totalorder %s274, %s275
      %p286 = scmp.eq.s32.totalorder %s30, 0
      %p287 = por %p285, %p286
      %p288 = scmp.ne.s32.totalorder %s274, %s275
      %p289 = scmp.eq.s32.totalorder %s31, 1
      %p290 = por %p288, %p289
      %p292 = scmp.ne.s32.totalorder %s275, %s291
      %p293 = scmp.eq.s32.totalorder %s31, 0
      %p294 = por %p292, %p293
      %p295 = scmp.le.s32.totalorder 1, %s25
      %p296 = scmp.lt.s32.totalorder %s25, 3
      %p297 = pnand %p295, %p296
      %p298 = pneg %p297
      // Predicated region
      $region9: #{conv_decoder_forward.1} parent=5 // pred_check
        _
      $region10: #{conv_decoder_forward.1} parent=5 // pred_check_branch
        %300 = sbr.rel (%p297) target = $region12
      $region11: #{conv_decoder_forward.1} parent=5 // pred_region
        %s301 = ssub.s32 %s25, 1
        // Predicated region
        $region13: #{conv_decoder_forward.1} parent=11 // pred_check
          %p302 = pneg %p72
        $region14: #{conv_decoder_forward.1} parent=11 // pred_check_branch
          %304 = sbr.rel (%p302) target = $region16
        $region15: #{conv_decoder_forward.1} parent=11 // pred_region
          %s306 = ssub.s32 1024, 1024
          %307 = vsyncadd [#allocation6], %s306
          %s308 = sshll.u32 [#allocation5], 4
          %s309 = int_to_ptr.vmem [resolvable:$true] %s308
          %314 = dma.hbm_to_vmem [thread:$0]  %s1, 1024, %s309, [#allocation6], 128, 128, 8
        $region16: #{conv_decoder_forward.1} parent=11 // pred_fallthru
          _
        // Predicated region
        $region17: #{conv_decoder_forward.1} parent=11 // pred_check
          %p315 = pneg %p93
        $region18: #{conv_decoder_forward.1} parent=11 // pred_check_branch
          %317 = sbr.rel (%p315) target = $region20
        $region19: #{conv_decoder_forward.1} parent=11 // pred_region
          %s319 = ssub.s32 16, 16
          %320 = vsyncadd [#allocation6], %s319
          %s322 = sshll.u32 [#allocation7], 4
          %s323 = int_to_ptr.vmem [resolvable:$true] %s322
          %325 = dma.hbm_to_vmem [thread:$0]  %s2, 16, %s323, [#allocation6]
        $region20: #{conv_decoder_forward.1} parent=11 // pred_fallthru
          _
        // Predicated region
        $region21: #{conv_decoder_forward.1} parent=11 // pred_check
          %p326 = pneg %p114
        $region22: #{conv_decoder_forward.1} parent=11 // pred_check_branch
          %328 = sbr.rel (%p326) target = $region24
        $region23: #{conv_decoder_forward.1} parent=11 // pred_region
          _
        $region24: #{conv_decoder_forward.1} parent=11 // pred_fallthru
          _
        // Predicated region
        $region25: #{conv_decoder_forward.1} parent=11 // pred_check
          %p329 = pneg %p135
        $region26: #{conv_decoder_forward.1} parent=11 // pred_check_branch
          %331 = sbr.rel (%p329) target = $region28
        $region27: #{conv_decoder_forward.1} parent=11 // pred_region
          %s333 = ssub.s32 64, 64
          %334 = vsyncadd [#allocation9], %s333
          %s336 = sshll.u32 [#allocation8], 4
          %s337 = int_to_ptr.vmem [resolvable:$true] %s336
          %339 = dma.hbm_to_vmem [thread:$0]  %s4, 64, %s337, [#allocation9]
        $region28: #{conv_decoder_forward.1} parent=11 // pred_fallthru
          _
        // Predicated region
        $region29: #{conv_decoder_forward.1} parent=11 // pred_check
          %p340 = pneg %p156
        $region30: #{conv_decoder_forward.1} parent=11 // pred_check_branch
          %342 = sbr.rel (%p340) target = $region32
        $region31: #{conv_decoder_forward.1} parent=11 // pred_region
          %s344 = ssub.s32 256, 256
          %345 = vsyncadd [#allocation9], %s344
          %s346 = sshll.u32 [#allocation10], 4
          %s347 = int_to_ptr.vmem [resolvable:$true] %s346
          %352 = dma.hbm_to_vmem [thread:$0]  %s5, 256, %s347, [#allocation9], 128, 128, 8
        $region32: #{conv_decoder_forward.1} parent=11 // pred_fallthru
          _
        // Predicated region
        $region33: #{conv_decoder_forward.1} parent=11 // pred_check
          %p353 = pneg %p177
        $region34: #{conv_decoder_forward.1} parent=11 // pred_check_branch
          %355 = sbr.rel (%p353) target = $region36
        $region35: #{conv_decoder_forward.1} parent=11 // pred_region
          %s357 = ssub.s32 16, 16
          %358 = vsyncadd [#allocation12], %s357
          %s360 = sshll.u32 [#allocation11], 4
          %s361 = int_to_ptr.vmem [resolvable:$true] %s360
          %363 = dma.hbm_to_vmem [thread:$0]  %s6, 16, %s361, [#allocation12]
        $region36: #{conv_decoder_forward.1} parent=11 // pred_fallthru
          _
        // Predicated region
        $region37: #{conv_decoder_forward.1} parent=11 // pred_check
          %p364 = pneg %p198
        $region38: #{conv_decoder_forward.1} parent=11 // pred_check_branch
          %366 = sbr.rel (%p364) target = $region40
        $region39: #{conv_decoder_forward.1} parent=11 // pred_region
          %s368 = ssub.s32 4096, 4096
          %369 = vsyncadd [#allocation12], %s368
          %s370 = sshll.u32 [#allocation13], 4
          %s371 = int_to_ptr.vmem [resolvable:$true] %s370
          %376 = dma.hbm_to_vmem [thread:$0]  %s7, 4096, %s371, [#allocation12], 256, 256, 16
        $region40: #{conv_decoder_forward.1} parent=11 // pred_fallthru
          _
        // Predicated region
        $region41: #{conv_decoder_forward.1} parent=11 // pred_check
          %p377 = pneg %p219
        $region42: #{conv_decoder_forward.1} parent=11 // pred_check_branch
          %379 = sbr.rel (%p377) target = $region44
        $region43: #{conv_decoder_forward.1} parent=11 // pred_region
          %s381 = ssub.s32 32, 32
          %382 = vsyncadd [#allocation15], %s381
          %s384 = sshll.u32 [#allocation14], 4
          %s385 = int_to_ptr.vmem [resolvable:$true] %s384
          %387 = dma.hbm_to_vmem [thread:$0]  %s8, 32, %s385, [#allocation15]
        $region44: #{conv_decoder_forward.1} parent=11 // pred_fallthru
          _
        // Predicated region
        $region45: #{conv_decoder_forward.1} parent=11 // pred_check
          %p388 = pneg %p240
        $region46: #{conv_decoder_forward.1} parent=11 // pred_check_branch
          %390 = sbr.rel (%p388) target = $region48
        $region47: #{conv_decoder_forward.1} parent=11 // pred_region
          %s392 = ssub.s32 8192, 8192
          %393 = vsyncadd [#allocation15], %s392
          %s394 = sshll.u32 [#allocation16], 4
          %s395 = int_to_ptr.vmem [resolvable:$true] %s394
          %400 = dma.hbm_to_vmem [thread:$0]  %s9, 8192, %s395, [#allocation15], 256, 256, 16
        $region48: #{conv_decoder_forward.1} parent=11 // pred_fallthru
          _
        // Predicated region
        $region49: #{conv_decoder_forward.1} parent=11 // pred_check
          %p401 = pneg %p261
        $region50: #{conv_decoder_forward.1} parent=11 // pred_check_branch
          %403 = sbr.rel (%p401) target = $region52
        $region51: #{conv_decoder_forward.1} parent=11 // pred_region
          %s405 = ssub.s32 32, 32
          %406 = vsyncadd [#allocation18], %s405
          %s408 = sshll.u32 [#allocation17], 4
          %s409 = int_to_ptr.vmem [resolvable:$true] %s408
          %411 = dma.hbm_to_vmem [thread:$0]  %s10, 32, %s409, [#allocation18]
        $region52: #{conv_decoder_forward.1} parent=11 // pred_fallthru
          _
      $region12: #{conv_decoder_forward.1} parent=5 // pred_fallthru
        _
      %p412 = scmp.lt.s32.totalorder %s25, 2
      // Predicated region
      $region53: #{conv_decoder_forward.1} parent=5 // pred_check
        %p413 = pneg %p412
      $region54: #{conv_decoder_forward.1} parent=5 // pred_check_branch
        %415 = sbr.rel (%p413) target = $region56
      $region55: #{conv_decoder_forward.1} parent=5 // pred_region
        // Predicated region
        $region57: #{conv_decoder_forward.1} parent=55 // pred_check
          %p416 = pneg %p45
        $region58: #{conv_decoder_forward.1} parent=55 // pred_check_branch
          %418 = sbr.rel (%p416) target = $region60
        $region59: #{conv_decoder_forward.1} parent=55 // pred_region
          %s419 = sand.u32 %s35, 1
          %s420 = scalar_lea.sflag [#allocation4], %s419
          %s421 = sand.u32 %s35, 1
          %s422 = smul.addr %s421, 8
          %s423 = scalar_lea.vmem [#allocation3], %s422
          %s425 = ssub.s32 128, 128
          %426 = vsyncadd %s420, %s425
          %s427 = smul.addr %s25, 128
          %s428 = scalar_lea.hbm %s0, %s427
          %s430 = sshll.u32 %s423, 4
          %s431 = int_to_ptr.vmem [resolvable:$true] %s430
          %433 = dma.hbm_to_vmem [thread:$0]  %s428, 128, %s431, %s420
        $region60: #{conv_decoder_forward.1} parent=55 // pred_fallthru
          _
      $region56: #{conv_decoder_forward.1} parent=5 // pred_fallthru
        _
      %p434 = scmp.le.s32.totalorder 1, %s25
      %p435 = scmp.lt.s32.totalorder %s25, 3
      %p436 = pnand %p434, %p435
      %p437 = pneg %p436
      // Predicated region
      $region61: #{conv_decoder_forward.1} parent=5 // pred_check
        _
      $region62: #{conv_decoder_forward.1} parent=5 // pred_check_branch
        %439 = sbr.rel (%p436) target = $region64
      $region63: #{conv_decoder_forward.1} parent=5 // pred_region
        %s440 = ssub.s32 %s25, 1
        %s441 = sand.u32 %s38, 1
        %s442 = scalar_lea.sflag [#allocation4], %s441
        %s443 = sand.u32 %s38, 1
        %s444 = smul.addr %s443, 8
        %s445 = scalar_lea.vmem [#allocation3], %s444
        // Predicated region
        $region65: #{conv_decoder_forward.1} parent=63 // pred_check
          %p446 = pneg %p51
        $region66: #{conv_decoder_forward.1} parent=63 // pred_check_branch
          %448 = sbr.rel (%p446) target = $region68
        $region67: #{conv_decoder_forward.1} parent=63 // pred_region
          %449 = dma.done %s442, 128
        $region68: #{conv_decoder_forward.1} parent=63 // pred_fallthru
          _
        // Predicated region
        $region69: #{conv_decoder_forward.1} parent=63 // pred_check
          %p450 = pneg %p72
        $region70: #{conv_decoder_forward.1} parent=63 // pred_check_branch
          %452 = sbr.rel (%p450) target = $region72
        $region71: #{conv_decoder_forward.1} parent=63 // pred_region
          %453 = dma.done [#allocation6], 1024
        $region72: #{conv_decoder_forward.1} parent=63 // pred_fallthru
          _
        // Predicated region
        $region73: #{conv_decoder_forward.1} parent=63 // pred_check
          %p454 = pneg %p93
        $region74: #{conv_decoder_forward.1} parent=63 // pred_check_branch
          %456 = sbr.rel (%p454) target = $region76
        $region75: #{conv_decoder_forward.1} parent=63 // pred_region
          %457 = dma.done [#allocation6], 16
        $region76: #{conv_decoder_forward.1} parent=63 // pred_fallthru
          _
        // Predicated region
        $region77: #{conv_decoder_forward.1} parent=63 // pred_check
          %p458 = pneg %p135
        $region78: #{conv_decoder_forward.1} parent=63 // pred_check_branch
          %460 = sbr.rel (%p458) target = $region80
        $region79: #{conv_decoder_forward.1} parent=63 // pred_region
          %461 = dma.done [#allocation9], 64
        $region80: #{conv_decoder_forward.1} parent=63 // pred_fallthru
          _
        // Predicated region
        $region81: #{conv_decoder_forward.1} parent=63 // pred_check
          %p462 = pneg %p156
        $region82: #{conv_decoder_forward.1} parent=63 // pred_check_branch
          %464 = sbr.rel (%p462) target = $region84
        $region83: #{conv_decoder_forward.1} parent=63 // pred_region
          %465 = dma.done [#allocation9], 256
        $region84: #{conv_decoder_forward.1} parent=63 // pred_fallthru
          _
        // Predicated region
        $region85: #{conv_decoder_forward.1} parent=63 // pred_check
          %p466 = pneg %p177
        $region86: #{conv_decoder_forward.1} parent=63 // pred_check_branch
          %468 = sbr.rel (%p466) target = $region88
        $region87: #{conv_decoder_forward.1} parent=63 // pred_region
          %469 = dma.done [#allocation12], 16
        $region88: #{conv_decoder_forward.1} parent=63 // pred_fallthru
          _
        // Predicated region
        $region89: #{conv_decoder_forward.1} parent=63 // pred_check
          %p470 = pneg %p198
        $region90: #{conv_decoder_forward.1} parent=63 // pred_check_branch
          %472 = sbr.rel (%p470) target = $region92
        $region91: #{conv_decoder_forward.1} parent=63 // pred_region
          %473 = dma.done [#allocation12], 4096
        $region92: #{conv_decoder_forward.1} parent=63 // pred_fallthru
          _
        // Predicated region
        $region93: #{conv_decoder_forward.1} parent=63 // pred_check
          %p474 = pneg %p219
        $region94: #{conv_decoder_forward.1} parent=63 // pred_check_branch
          %476 = sbr.rel (%p474) target = $region96
        $region95: #{conv_decoder_forward.1} parent=63 // pred_region
          %477 = dma.done [#allocation15], 32
        $region96: #{conv_decoder_forward.1} parent=63 // pred_fallthru
          _
        // Predicated region
        $region97: #{conv_decoder_forward.1} parent=63 // pred_check
          %p478 = pneg %p240
        $region98: #{conv_decoder_forward.1} parent=63 // pred_check_branch
          %480 = sbr.rel (%p478) target = $region100
        $region99: #{conv_decoder_forward.1} parent=63 // pred_region
          %481 = dma.done [#allocation15], 8192
        $region100: #{conv_decoder_forward.1} parent=63 // pred_fallthru
          _
        // Predicated region
        $region101: #{conv_decoder_forward.1} parent=63 // pred_check
          %p482 = pneg %p261
        $region102: #{conv_decoder_forward.1} parent=63 // pred_check_branch
          %484 = sbr.rel (%p482) target = $region104
        $region103: #{conv_decoder_forward.1} parent=63 // pred_region
          %485 = dma.done [#allocation18], 32
        $region104: #{conv_decoder_forward.1} parent=63 // pred_fallthru
          _
        %s486 = sand.u32 %s38, 1
        %s487 = scalar_lea.sflag [#allocation4], %s486
        %s488 = sand.u32 %s38, 1
        %s489 = smul.addr %s488, 8
        %s490 = scalar_lea.vmem [#allocation3], %s489
        %p491 = pneg %p51
        %p492 = pneg %p48
        %p493 = pneg %p72
        %p494 = pneg %p69
        %p495 = pneg %p93
        %p496 = pneg %p90
        %p497 = pneg %p114
        %p498 = pneg %p111
        %p499 = pneg %p135
        %p500 = pneg %p132
        %p501 = pneg %p156
        %p502 = pneg %p153
        %p503 = pneg %p177
        %p504 = pneg %p174
        %p505 = pneg %p198
        %p506 = pneg %p195
        %p507 = pneg %p219
        %p508 = pneg %p216
        %p509 = pneg %p240
        %p510 = pneg %p237
        %p511 = pneg %p261
        %p512 = pneg %p258
        %p513 = pneg %p287
        %p514 = pneg %p284
        %s515 = sand.u32 %s274, 1
        %s516 = sand.u32 %s274, 1
        %s517 = smul.addr %s516, 400
        %s518 = scalar_lea.vmem [#allocation19], %s517
        %v519 = vld [vmem:[%s445] sm:$0xff]
        %v520 = vld [vmem:[#allocation5] sm:$0xff]
        %v521 = vld [vmem:[#allocation5 + $0x8] sm:$0xff]
        %v522 = vld [vmem:[#allocation5 + $0x10] sm:$0xff]
        %v523 = vld [vmem:[#allocation5 + $0x18] sm:$0xff]
        %v524 = vld [vmem:[#allocation5 + $0x20] sm:$0xff]
        %v525 = vld [vmem:[#allocation5 + $0x28] sm:$0xff]
        %v526 = vld [vmem:[#allocation5 + $0x30] sm:$0xff]
        %v527 = vld [vmem:[#allocation5 + $0x38] sm:$0xff]
        %v528 = vld [vmem:[#allocation7] sm:$0x1]
        %v530 = vlaneseq
        %v531 = vshrl.u32 %v530, 7
        %v532 = vsub.s32 0, %v531
        %v533 = vrot.slane %v528, %v532
        %vm535 = vcmask 523264
        %v537 = vsel %vm535, %v519, 0
        %539 = vmatprep.subr.mxu0 0.0
        %540 = vmatpush1.msra.mxu0 0.0
        %541 = vmatprep.subr.mxu0 0.0
        %542 = vmatpush1.msra.mxu0 0.0
        %543 = vmatprep.subr.mxu0 0.0
        %544 = vmatpush1.msra.mxu0 0.0
        %545 = vmatprep.subr.mxu0 0.0
        %546 = vmatpush1.msra.mxu0 0.0
        %547 = vmatprep.subr.mxu0 0.0
        %548 = vmatpush1.msra.mxu0 0.0
        %549 = vmatprep.subr.mxu0 0.0
        %550 = vmatpush1.msra.mxu0 0.0
        %551 = vmatprep.subr.mxu0 0.0
        %552 = vmatpush1.msra.mxu0 0.0
        %553 = vmatprep.subr.mxu0 0.0
        %554 = vmatpush1.msra.mxu0 0.0
        %555 = vmatprep.subr.mxu0 0.0
        %556 = vmatpush1.msra.mxu0 %v527
        %557 = vmatprep.subr.mxu0 0.0
        %558 = vmatpush1.msra.mxu0 %v526
        %559 = vmatprep.subr.mxu0 0.0
        %560 = vmatpush1.msra.mxu0 %v525
        %561 = vmatprep.subr.mxu0 0.0
        %562 = vmatpush1.msra.mxu0 %v524
        %563 = vmatprep.subr.mxu0 0.0
        %564 = vmatpush1.msra.mxu0 %v523
        %565 = vmatprep.subr.mxu0 0.0
        %566 = vmatpush1.msra.mxu0 %v522
        %567 = vmatprep.subr.mxu0 0.0
        %568 = vmatpush1.msra.mxu0 %v521
        %569 = vmatprep.subr.mxu0 0.0
        %570 = vmatpush1.msra.mxu0 %v520
        %571 = vmatprep.subr.mxu0 0.0
        %572 = vmatpush2.msra.mxu0 0.0
        %573 = vmatprep.subr.mxu0 0.0
        %574 = vmatpush2.msra.mxu0 0.0
        %575 = vmatprep.subr.mxu0 0.0
        %576 = vmatpush2.msra.mxu0 0.0
        %577 = vmatprep.subr.mxu0 0.0
        %578 = vmatpush2.msra.mxu0 0.0
        %579 = vmatprep.subr.mxu0 0.0
        %580 = vmatpush2.msra.mxu0 0.0
        %581 = vmatprep.subr.mxu0 0.0
        %582 = vmatpush2.msra.mxu0 0.0
        %583 = vmatprep.subr.mxu0 0.0
        %584 = vmatpush2.msra.mxu0 0.0
        %585 = vmatprep.subr.mxu0 0.0
        %586 = vmatpush2.msra.mxu0 0.0
        %587 = vmatprep.subr.mxu0 0.0
        %588 = vmatpush2.msra.mxu0 0.0
        %589 = vmatprep.subr.mxu0 0.0
        %590 = vmatpush2.msra.mxu0 0.0
        %591 = vmatprep.subr.mxu0 0.0
        %592 = vmatpush2.msra.mxu0 0.0
        %593 = vmatprep.subr.mxu0 0.0
        %594 = vmatpush2.msra.mxu0 0.0
        %595 = vmatprep.subr.mxu0 0.0
        %596 = vmatpush2.msra.mxu0 0.0
        %597 = vmatprep.subr.mxu0 0.0
        %598 = vmatpush2.msra.mxu0 0.0
        %599 = vmatprep.subr.mxu0 0.0
        %600 = vmatpush2.msra.mxu0 0.0
        %601 = vmatprep.subr.mxu0 0.0
        %602 = vmatpush2.msra.mxu0 0.0
        %603 = vmatprep.mubr.f32.mxu0 0.0
        %604 = vmatmul.mubr.f32.gmra.mxu0 %v537
        %v605 = vpop.f32.mrf.mxu0
        %v606 = vadd.f32 %v533, %v605
        %v607 = vpop.f32.mrf.mxu0
        %608 = vdwg.mxu0
        %v609 = vmax.f32 %v606, 0.0
        %v610 = vld [vmem:[%s3] sm:$0xff]
        %v611 = vld [vmem:[%s3 + $0x8] sm:$0xff]
        %v612 = vld [vmem:[%s3 + $0x10] sm:$0xff]
        %v613 = vld [vmem:[%s3 + $0x18] sm:$0xff]
        %v614 = vld [vmem:[%s3 + $0x20] sm:$0xff]
        %v615 = vld [vmem:[%s3 + $0x28] sm:$0xff]
        %v616 = vld [vmem:[%s3 + $0x30] sm:$0xff]
        %v617 = vld [vmem:[%s3 + $0x38] sm:$0xff]
        %v618 = vld [vmem:[%s3 + $0x40] sm:$0xff]
        %v619 = vld [vmem:[%s3 + $0x48] sm:$0xff]
        %v620 = vld [vmem:[%s3 + $0x50] sm:$0xff]
        %v621 = vld [vmem:[%s3 + $0x58] sm:$0xff]
        %v622 = vld [vmem:[%s3 + $0x60] sm:$0xff]
        %v623 = vld [vmem:[%s3 + $0x68] sm:$0xff]
        %v624 = vld [vmem:[%s3 + $0x70] sm:$0xff]
        %v625 = vld [vmem:[%s3 + $0x78] sm:$0xff]
        %v626 = vld [vmem:[%s3 + $0x80] sm:$0xff]
        %v627 = vld [vmem:[%s3 + $0x88] sm:$0xff]
        %v628 = vld [vmem:[%s3 + $0x90] sm:$0xff]
        %v629 = vld [vmem:[%s3 + $0x98] sm:$0xff]
        %v630 = vld [vmem:[%s3 + $0xa0] sm:$0xff]
        %v631 = vld [vmem:[%s3 + $0xa8] sm:$0xff]
        %v632 = vld [vmem:[%s3 + $0xb0] sm:$0xff]
        %v633 = vld [vmem:[%s3 + $0xb8] sm:$0xff]
        %v634 = vld [vmem:[%s3 + $0xc0] sm:$0xff]
        %v635 = vld [vmem:[%s3 + $0xc8] sm:$0xff]
        %v636 = vld [vmem:[%s3 + $0xd0] sm:$0xff]
        %v637 = vld [vmem:[%s3 + $0xd8] sm:$0xff]
        %v638 = vld [vmem:[%s3 + $0xe0] sm:$0xff]
        %v639 = vld [vmem:[%s3 + $0xe8] sm:$0xff]
        %v640 = vld [vmem:[%s3 + $0xf0] sm:$0xff]
        %v641 = vld [vmem:[%s3 + $0xf8] sm:$0xff]
        %v642 = vld [vmem:[%s3 + $0x100] sm:$0xff]
        %v643 = vld [vmem:[%s3 + $0x108] sm:$0xff]
        %v644 = vld [vmem:[%s3 + $0x110] sm:$0xff]
        %v645 = vld [vmem:[%s3 + $0x118] sm:$0xff]
        %v646 = vld [vmem:[%s3 + $0x120] sm:$0xff]
        %v647 = vld [vmem:[%s3 + $0x128] sm:$0xff]
        %v648 = vld [vmem:[%s3 + $0x130] sm:$0xff]
        %v649 = vld [vmem:[%s3 + $0x138] sm:$0xff]
        %v650 = vld [vmem:[%s3 + $0x140] sm:$0xff]
        %v651 = vld [vmem:[%s3 + $0x148] sm:$0xff]
        %v652 = vld [vmem:[%s3 + $0x150] sm:$0xff]
        %v653 = vld [vmem:[%s3 + $0x158] sm:$0xff]
        %v654 = vld [vmem:[%s3 + $0x160] sm:$0xff]
        %v655 = vld [vmem:[%s3 + $0x168] sm:$0xff]
        %v656 = vld [vmem:[%s3 + $0x170] sm:$0xff]
        %v657 = vld [vmem:[%s3 + $0x178] sm:$0xff]
        %v658 = vld [vmem:[%s3 + $0x180] sm:$0xff]
        %v659 = vld [vmem:[%s3 + $0x188] sm:$0xff]
        %v660 = vld [vmem:[%s3 + $0x190] sm:$0xff]
        %v661 = vld [vmem:[%s3 + $0x198] sm:$0xff]
        %v662 = vld [vmem:[%s3 + $0x1a0] sm:$0xff]
        %v663 = vld [vmem:[%s3 + $0x1a8] sm:$0xff]
        %v664 = vld [vmem:[%s3 + $0x1b0] sm:$0xff]
        %v665 = vld [vmem:[%s3 + $0x1b8] sm:$0xff]
        %v666 = vld [vmem:[%s3 + $0x1c0] sm:$0xff]
        %v667 = vld [vmem:[%s3 + $0x1c8] sm:$0xff]
        %v668 = vld [vmem:[%s3 + $0x1d0] sm:$0xff]
        %v669 = vld [vmem:[%s3 + $0x1d8] sm:$0xff]
        %v670 = vld [vmem:[%s3 + $0x1e0] sm:$0xff]
        %v671 = vld [vmem:[%s3 + $0x1e8] sm:$0xff]
        %v672 = vld [vmem:[%s3 + $0x1f0] sm:$0xff]
        %v673 = vld [vmem:[%s3 + $0x1f8] sm:$0xff]
        %v674 = vld [vmem:[#allocation8] sm:$0xf]
        %v676 = vlaneseq
        %v677 = vshrl.u32 %v676, 7
        %v678 = vsub.s32 0, %v677
        %v679 = vrot.slane %v674, %v678
        %v680 = vlaneseq
        %v681 = vshrl.u32 %v680, 7
        %v682 = vsub.s32 1, %v681
        %v683 = vrot.slane %v674, %v682
        %v684 = vlaneseq
        %v685 = vshrl.u32 %v684, 7
        %v686 = vsub.s32 2, %v685
        %v687 = vrot.slane %v674, %v686
        %v688 = vlaneseq
        %v689 = vshrl.u32 %v688, 7
        %v690 = vsub.s32 3, %v689
        %v691 = vrot.slane %v674, %v690
        %696 = vmatprep.subr.mxu0 %v671
        %697 = vmatpush1.msra.mxu0 %v670
        %698 = vmatprep.subr.mxu0 %v667
        %699 = vmatpush1.msra.mxu0 %v666
        %700 = vmatprep.subr.mxu0 %v663
        %701 = vmatpush1.msra.mxu0 %v662
        %702 = vmatprep.subr.mxu0 %v659
        %703 = vmatpush1.msra.mxu0 %v658
        %704 = vmatprep.subr.mxu0 %v655
        %705 = vmatpush1.msra.mxu0 %v654
        %706 = vmatprep.subr.mxu0 %v651
        %707 = vmatpush1.msra.mxu0 %v650
        %708 = vmatprep.subr.mxu0 %v647
        %709 = vmatpush1.msra.mxu0 %v646
        %710 = vmatprep.subr.mxu0 %v643
        %711 = vmatpush1.msra.mxu0 %v642
        %712 = vmatprep.subr.mxu0 %v639
        %713 = vmatpush1.msra.mxu0 %v638
        %714 = vmatprep.subr.mxu0 %v635
        %715 = vmatpush1.msra.mxu0 %v634
        %716 = vmatprep.subr.mxu0 %v631
        %717 = vmatpush1.msra.mxu0 %v630
        %718 = vmatprep.subr.mxu0 %v627
        %719 = vmatpush1.msra.mxu0 %v626
        %720 = vmatprep.subr.mxu0 %v623
        %721 = vmatpush1.msra.mxu0 %v622
        %722 = vmatprep.subr.mxu0 %v619
        %723 = vmatpush1.msra.mxu0 %v618
        %724 = vmatprep.subr.mxu0 %v615
        %725 = vmatpush1.msra.mxu0 %v614
        %726 = vmatprep.subr.mxu0 %v611
        %727 = vmatpush1.msra.mxu0 %v610
        %728 = vmatprep.subr.mxu0 0.0
        %729 = vmatpush2.msra.mxu0 0.0
        %730 = vmatprep.subr.mxu0 0.0
        %731 = vmatpush2.msra.mxu0 0.0
        %732 = vmatprep.subr.mxu0 0.0
        %733 = vmatpush2.msra.mxu0 0.0
        %734 = vmatprep.subr.mxu0 0.0
        %735 = vmatpush2.msra.mxu0 0.0
        %736 = vmatprep.subr.mxu0 0.0
        %737 = vmatpush2.msra.mxu0 0.0
        %738 = vmatprep.subr.mxu0 0.0
        %739 = vmatpush2.msra.mxu0 0.0
        %740 = vmatprep.subr.mxu0 0.0
        %741 = vmatpush2.msra.mxu0 0.0
        %742 = vmatprep.subr.mxu0 0.0
        %743 = vmatpush2.msra.mxu0 0.0
        %744 = vmatprep.subr.mxu0 0.0
        %745 = vmatpush2.msra.mxu0 0.0
        %746 = vmatprep.subr.mxu0 0.0
        %747 = vmatpush2.msra.mxu0 0.0
        %748 = vmatprep.subr.mxu0 0.0
        %749 = vmatpush2.msra.mxu0 0.0
        %750 = vmatprep.subr.mxu0 0.0
        %751 = vmatpush2.msra.mxu0 0.0
        %752 = vmatprep.subr.mxu0 0.0
        %753 = vmatpush2.msra.mxu0 0.0
        %754 = vmatprep.subr.mxu0 0.0
        %755 = vmatpush2.msra.mxu0 0.0
        %756 = vmatprep.subr.mxu0 0.0
        %757 = vmatpush2.msra.mxu0 0.0
        %758 = vmatprep.subr.mxu0 0.0
        %759 = vmatpush2.msra.mxu0 0.0
        %760 = vmatprep.mubr.f32.mxu0 0.0
        %761 = vmatmul.mubr.f32.gmra.mxu0 %v609
        %v762 = vpop.f32.mrf.mxu0
        %v763 = vadd.f32 %v679, %v762
        %v764 = vpop.f32.mrf.mxu0
        %v765 = vadd.f32 %v683, %v764
        %766 = vdwg.mxu0
        %767 = vmatprep.subr.mxu0 %v673
        %768 = vmatpush1.msra.mxu0 %v672
        %769 = vmatprep.subr.mxu0 %v669
        %770 = vmatpush1.msra.mxu0 %v668
        %771 = vmatprep.subr.mxu0 %v665
        %772 = vmatpush1.msra.mxu0 %v664
        %773 = vmatprep.subr.mxu0 %v661
        %774 = vmatpush1.msra.mxu0 %v660
        %775 = vmatprep.subr.mxu0 %v657
        %776 = vmatpush1.msra.mxu0 %v656
        %777 = vmatprep.subr.mxu0 %v653
        %778 = vmatpush1.msra.mxu0 %v652
        %779 = vmatprep.subr.mxu0 %v649
        %780 = vmatpush1.msra.mxu0 %v648
        %781 = vmatprep.subr.mxu0 %v645
        %782 = vmatpush1.msra.mxu0 %v644
        %783 = vmatprep.subr.mxu0 %v641
        %784 = vmatpush1.msra.mxu0 %v640
        %785 = vmatprep.subr.mxu0 %v637
        %786 = vmatpush1.msra.mxu0 %v636
        %787 = vmatprep.subr.mxu0 %v633
        %788 = vmatpush1.msra.mxu0 %v632
        %789 = vmatprep.subr.mxu0 %v629
        %790 = vmatpush1.msra.mxu0 %v628
        %791 = vmatprep.subr.mxu0 %v625
        %792 = vmatpush1.msra.mxu0 %v624
        %793 = vmatprep.subr.mxu0 %v621
        %794 = vmatpush1.msra.mxu0 %v620
        %795 = vmatprep.subr.mxu0 %v617
        %796 = vmatpush1.msra.mxu0 %v616
        %797 = vmatprep.subr.mxu0 %v613
        %798 = vmatpush1.msra.mxu0 %v612
        %799 = vmatprep.subr.mxu0 0.0
        %800 = vmatpush2.msra.mxu0 0.0
        %801 = vmatprep.subr.mxu0 0.0
        %802 = vmatpush2.msra.mxu0 0.0
        %803 = vmatprep.subr.mxu0 0.0
        %804 = vmatpush2.msra.mxu0 0.0
        %805 = vmatprep.subr.mxu0 0.0
        %806 = vmatpush2.msra.mxu0 0.0
        %807 = vmatprep.subr.mxu0 0.0
        %808 = vmatpush2.msra.mxu0 0.0
        %809 = vmatprep.subr.mxu0 0.0
        %810 = vmatpush2.msra.mxu0 0.0
        %811 = vmatprep.subr.mxu0 0.0
        %812 = vmatpush2.msra.mxu0 0.0
        %813 = vmatprep.subr.mxu0 0.0
        %814 = vmatpush2.msra.mxu0 0.0
        %815 = vmatprep.subr.mxu0 0.0
        %816 = vmatpush2.msra.mxu0 0.0
        %817 = vmatprep.subr.mxu0 0.0
        %818 = vmatpush2.msra.mxu0 0.0
        %819 = vmatprep.subr.mxu0 0.0
        %820 = vmatpush2.msra.mxu0 0.0
        %821 = vmatprep.subr.mxu0 0.0
        %822 = vmatpush2.msra.mxu0 0.0
        %823 = vmatprep.subr.mxu0 0.0
        %824 = vmatpush2.msra.mxu0 0.0
        %825 = vmatprep.subr.mxu0 0.0
        %826 = vmatpush2.msra.mxu0 0.0
        %827 = vmatprep.subr.mxu0 0.0
        %828 = vmatpush2.msra.mxu0 0.0
        %829 = vmatprep.subr.mxu0 0.0
        %830 = vmatpush2.msra.mxu0 0.0
        %831 = vmatprep.mubr.f32.mxu0 0.0
        %832 = vmatmul.mubr.f32.gmra.mxu0 %v609
        %v833 = vpop.f32.mrf.mxu0
        %v834 = vadd.f32 %v687, %v833
        %v835 = vpop.f32.mrf.mxu0
        %v836 = vadd.f32 %v691, %v835
        %837 = vdwg.mxu0
        %v838 = vmax.f32 %v763, 0.0
        %v839 = vmax.f32 %v765, 0.0
        %v840 = vmax.f32 %v834, 0.0
        %v841 = vmax.f32 %v836, 0.0
        %vm842 = vcmask 130048
        %843 = vst.msk [vmem:[#allocation2] sm:$0xff] %vm842, %v838
        %845 = vrot.lane.b32.xlu0 %v838, 112
        %v846 = vpop.permute.xlu0 %845
        %848 = vst.msk [vmem:[#allocation2 + $0x8] sm:$0xff] %vm842, %v846
        %849 = vrot.lane.b32.xlu0 %v838, 96
        %v850 = vpop.permute.xlu0 %849
        %852 = vst.msk [vmem:[#allocation2 + $0x10] sm:$0xff] %vm842, %v850
        %853 = vrot.lane.b32.xlu0 %v838, 80
        %v854 = vpop.permute.xlu0 %853
        %856 = vst.msk [vmem:[#allocation2 + $0x18] sm:$0xff] %vm842, %v854
        %857 = vrot.lane.b32.xlu0 %v838, 64
        %v858 = vpop.permute.xlu0 %857
        %860 = vst.msk [vmem:[#allocation2 + $0x20] sm:$0xff] %vm842, %v858
        %861 = vrot.lane.b32.xlu0 %v838, 48
        %v862 = vpop.permute.xlu0 %861
        %864 = vst.msk [vmem:[#allocation2 + $0x28] sm:$0xff] %vm842, %v862
        %865 = vrot.lane.b32.xlu0 %v838, 32
        %v866 = vpop.permute.xlu0 %865
        %868 = vst.msk [vmem:[#allocation2 + $0x30] sm:$0xff] %vm842, %v866
        %869 = vrot.lane.b32.xlu0 %v838, 16
        %v870 = vpop.permute.xlu0 %869
        %872 = vst.msk [vmem:[#allocation2 + $0x38] sm:$0xff] %vm842, %v870
        %873 = vst.msk [vmem:[#allocation2 + $0x40] sm:$0xff] %vm842, %v839
        %875 = vrot.lane.b32.xlu0 %v839, 112
        %v876 = vpop.permute.xlu0 %875
        %878 = vst.msk [vmem:[#allocation2 + $0x48] sm:$0xff] %vm842, %v876
        %879 = vrot.lane.b32.xlu0 %v839, 96
        %v880 = vpop.permute.xlu0 %879
        %882 = vst.msk [vmem:[#allocation2 + $0x50] sm:$0xff] %vm842, %v880
        %883 = vrot.lane.b32.xlu0 %v839, 80
        %v884 = vpop.permute.xlu0 %883
        %886 = vst.msk [vmem:[#allocation2 + $0x58] sm:$0xff] %vm842, %v884
        %887 = vrot.lane.b32.xlu0 %v839, 64
        %v888 = vpop.permute.xlu0 %887
        %890 = vst.msk [vmem:[#allocation2 + $0x60] sm:$0xff] %vm842, %v888
        %891 = vrot.lane.b32.xlu0 %v839, 48
        %v892 = vpop.permute.xlu0 %891
        %894 = vst.msk [vmem:[#allocation2 + $0x68] sm:$0xff] %vm842, %v892
        %895 = vrot.lane.b32.xlu0 %v839, 32
        %v896 = vpop.permute.xlu0 %895
        %898 = vst.msk [vmem:[#allocation2 + $0x70] sm:$0xff] %vm842, %v896
        %899 = vrot.lane.b32.xlu0 %v839, 16
        %v900 = vpop.permute.xlu0 %899
        %902 = vst.msk [vmem:[#allocation2 + $0x78] sm:$0xff] %vm842, %v900
        %903 = vst.msk [vmem:[#allocation2 + $0x80] sm:$0xff] %vm842, %v840
        %905 = vrot.lane.b32.xlu0 %v840, 112
        %v906 = vpop.permute.xlu0 %905
        %908 = vst.msk [vmem:[#allocation2 + $0x88] sm:$0xff] %vm842, %v906
        %909 = vrot.lane.b32.xlu0 %v840, 96
        %v910 = vpop.permute.xlu0 %909
        %912 = vst.msk [vmem:[#allocation2 + $0x90] sm:$0xff] %vm842, %v910
        %913 = vrot.lane.b32.xlu0 %v840, 80
        %v914 = vpop.permute.xlu0 %913
        %916 = vst.msk [vmem:[#allocation2 + $0x98] sm:$0xff] %vm842, %v914
        %917 = vrot.lane.b32.xlu0 %v840, 64
        %v918 = vpop.permute.xlu0 %917
        %920 = vst.msk [vmem:[#allocation2 + $0xa0] sm:$0xff] %vm842, %v918
        %921 = vrot.lane.b32.xlu0 %v840, 48
        %v922 = vpop.permute.xlu0 %921
        %924 = vst.msk [vmem:[#allocation2 + $0xa8] sm:$0xff] %vm842, %v922
        %925 = vrot.lane.b32.xlu0 %v840, 32
        %v926 = vpop.permute.xlu0 %925
        %928 = vst.msk [vmem:[#allocation2 + $0xb0] sm:$0xff] %vm842, %v926
        %929 = vrot.lane.b32.xlu0 %v840, 16
        %v930 = vpop.permute.xlu0 %929
        %932 = vst.msk [vmem:[#allocation2 + $0xb8] sm:$0xff] %vm842, %v930
        %933 = vst.msk [vmem:[#allocation2 + $0xc0] sm:$0xff] %vm842, %v841
        %v934 = vld [vmem:[#allocation2] sm:$0xff]
        %v935 = vld [vmem:[#allocation2 + $0x8] sm:$0xff]
        %v936 = vld [vmem:[#allocation2 + $0x10] sm:$0xff]
        %v937 = vld [vmem:[#allocation2 + $0x18] sm:$0xff]
        %v938 = vld [vmem:[#allocation2 + $0x20] sm:$0xff]
        %v939 = vld [vmem:[#allocation2 + $0x28] sm:$0xff]
        %v940 = vld [vmem:[#allocation2 + $0x30] sm:$0xff]
        %v941 = vld [vmem:[#allocation2 + $0x38] sm:$0xff]
        %v942 = vld [vmem:[#allocation2 + $0x40] sm:$0xff]
        %v943 = vld [vmem:[#allocation2 + $0x48] sm:$0xff]
        %v944 = vld [vmem:[#allocation2 + $0x50] sm:$0xff]
        %v945 = vld [vmem:[#allocation2 + $0x58] sm:$0xff]
        %v946 = vld [vmem:[#allocation2 + $0x60] sm:$0xff]
        %v947 = vld [vmem:[#allocation2 + $0x68] sm:$0xff]
        %v948 = vld [vmem:[#allocation2 + $0x70] sm:$0xff]
        %v949 = vld [vmem:[#allocation2 + $0x78] sm:$0xff]
        %v950 = vld [vmem:[#allocation2 + $0x80] sm:$0xff]
        %v951 = vld [vmem:[#allocation2 + $0x88] sm:$0xff]
        %v952 = vld [vmem:[#allocation2 + $0x90] sm:$0xff]
        %v953 = vld [vmem:[#allocation2 + $0x98] sm:$0xff]
        %v954 = vld [vmem:[#allocation2 + $0xa0] sm:$0xff]
        %v955 = vld [vmem:[#allocation2 + $0xa8] sm:$0xff]
        %v956 = vld [vmem:[#allocation2 + $0xb0] sm:$0xff]
        %v957 = vld [vmem:[#allocation2 + $0xb8] sm:$0xff]
        %v958 = vld [vmem:[#allocation2 + $0xc0] sm:$0xff]
        %v959 = vld [vmem:[#allocation10] sm:$0xff]
        %v960 = vld [vmem:[#allocation10 + $0x8] sm:$0xff]
        %v961 = vld [vmem:[#allocation11] sm:$0x1]
        %v963 = vlaneseq
        %v964 = vshrl.u32 %v963, 7
        %v965 = vsub.s32 0, %v964
        %v966 = vrot.slane %v961, %v965
        %v969 = vsel %vm842, %v934, 0
        %v972 = vsel %vm842, %v935, 0
        %v975 = vsel %vm842, %v936, 0
        %v978 = vsel %vm842, %v937, 0
        %v981 = vsel %vm842, %v938, 0
        %v984 = vsel %vm842, %v939, 0
        %v987 = vsel %vm842, %v940, 0
        %v990 = vsel %vm842, %v941, 0
        %v993 = vsel %vm842, %v942, 0
        %v996 = vsel %vm842, %v943, 0
        %v999 = vsel %vm842, %v944, 0
        %v1002 = vsel %vm842, %v945, 0
        %v1005 = vsel %vm842, %v946, 0
        %v1008 = vsel %vm842, %v947, 0
        %v1011 = vsel %vm842, %v948, 0
        %v1014 = vsel %vm842, %v949, 0
        %v1017 = vsel %vm842, %v950, 0
        %v1020 = vsel %vm842, %v951, 0
        %v1023 = vsel %vm842, %v952, 0
        %v1026 = vsel %vm842, %v953, 0
        %v1029 = vsel %vm842, %v954, 0
        %v1032 = vsel %vm842, %v955, 0
        %v1035 = vsel %vm842, %v956, 0
        %v1038 = vsel %vm842, %v957, 0
        %v1041 = vsel %vm842, %v958, 0
        %1043 = vmatprep.subr.mxu0 0.0
        %1044 = vmatpush1.msra.mxu0 0.0
        %1045 = vmatprep.subr.mxu0 0.0
        %1046 = vmatpush1.msra.mxu0 0.0
        %1047 = vmatprep.subr.mxu0 0.0
        %1048 = vmatpush1.msra.mxu0 0.0
        %1049 = vmatprep.subr.mxu0 0.0
        %1050 = vmatpush1.msra.mxu0 0.0
        %1051 = vmatprep.subr.mxu0 0.0
        %1052 = vmatpush1.msra.mxu0 0.0
        %1053 = vmatprep.subr.mxu0 0.0
        %1054 = vmatpush1.msra.mxu0 0.0
        %1055 = vmatprep.subr.mxu0 0.0
        %1056 = vmatpush1.msra.mxu0 0.0
        %1057 = vmatprep.subr.mxu0 0.0
        %1058 = vmatpush1.msra.mxu0 0.0
        %1059 = vmatprep.subr.mxu0 0.0
        %1060 = vmatpush1.msra.mxu0 0.0
        %1061 = vmatprep.subr.mxu0 0.0
        %1062 = vmatpush1.msra.mxu0 0.0
        %1063 = vmatprep.subr.mxu0 0.0
        %1064 = vmatpush1.msra.mxu0 0.0
        %1065 = vmatprep.subr.mxu0 0.0
        %1066 = vmatpush1.msra.mxu0 0.0
        %1067 = vmatprep.subr.mxu0 0.0
        %1068 = vmatpush1.msra.mxu0 0.0
        %1069 = vmatprep.subr.mxu0 0.0
        %1070 = vmatpush1.msra.mxu0 0.0
        %1071 = vmatprep.subr.mxu0 0.0
        %1072 = vmatpush1.msra.mxu0 %v960
        %1073 = vmatprep.subr.mxu0 0.0
        %1074 = vmatpush1.msra.mxu0 %v959
        %1075 = vmatprep.subr.mxu0 0.0
        %1076 = vmatpush2.msra.mxu0 0.0
        %1077 = vmatprep.subr.mxu0 0.0
        %1078 = vmatpush2.msra.mxu0 0.0
        %1079 = vmatprep.subr.mxu0 0.0
        %1080 = vmatpush2.msra.mxu0 0.0
        %1081 = vmatprep.subr.mxu0 0.0
        %1082 = vmatpush2.msra.mxu0 0.0
        %1083 = vmatprep.subr.mxu0 0.0
        %1084 = vmatpush2.msra.mxu0 0.0
        %1085 = vmatprep.subr.mxu0 0.0
        %1086 = vmatpush2.msra.mxu0 0.0
        %1087 = vmatprep.subr.mxu0 0.0
        %1088 = vmatpush2.msra.mxu0 0.0
        %1089 = vmatprep.subr.mxu0 0.0
        %1090 = vmatpush2.msra.mxu0 0.0
        %1091 = vmatprep.subr.mxu0 0.0
        %1092 = vmatpush2.msra.mxu0 0.0
        %1093 = vmatprep.subr.mxu0 0.0
        %1094 = vmatpush2.msra.mxu0 0.0
        %1095 = vmatprep.subr.mxu0 0.0
        %1096 = vmatpush2.msra.mxu0 0.0
        %1097 = vmatprep.subr.mxu0 0.0
        %1098 = vmatpush2.msra.mxu0 0.0
        %1099 = vmatprep.subr.mxu0 0.0
        %1100 = vmatpush2.msra.mxu0 0.0
        %1101 = vmatprep.subr.mxu0 0.0
        %1102 = vmatpush2.msra.mxu0 0.0
        %1103 = vmatprep.subr.mxu0 0.0
        %1104 = vmatpush2.msra.mxu0 0.0
        %1105 = vmatprep.subr.mxu0 0.0
        %1106 = vmatpush2.msra.mxu0 0.0
        %1107 = vmatprep.mubr.f32.mxu0 0.0
        %1108 = vmatmul.mubr.f32.gmra.mxu0 %v969
        %v1109 = vpop.f32.mrf.mxu0
        %v1110 = vadd.f32 %v966, %v1109
        %v1111 = vpop.f32.mrf.mxu0
        %1112 = vmatprep.mubr.f32.mxu0 0.0
        %1113 = vmatmul.mubr.f32.gmra.mxu0 %v972
        %v1114 = vpop.f32.mrf.mxu0
        %v1115 = vadd.f32 %v966, %v1114
        %v1116 = vpop.f32.mrf.mxu0
        %1117 = vmatprep.mubr.f32.mxu0 0.0
        %1118 = vmatmul.mubr.f32.gmra.mxu0 %v975
        %v1119 = vpop.f32.mrf.mxu0
        %v1120 = vadd.f32 %v966, %v1119
        %v1121 = vpop.f32.mrf.mxu0
        %1122 = vmatprep.mubr.f32.mxu0 0.0
        %1123 = vmatmul.mubr.f32.gmra.mxu0 %v978
        %v1124 = vpop.f32.mrf.mxu0
        %v1125 = vadd.f32 %v966, %v1124
        %v1126 = vpop.f32.mrf.mxu0
        %1127 = vmatprep.mubr.f32.mxu0 0.0
        %1128 = vmatmul.mubr.f32.gmra.mxu0 %v981
        %v1129 = vpop.f32.mrf.mxu0
        %v1130 = vadd.f32 %v966, %v1129
        %v1131 = vpop.f32.mrf.mxu0
        %1132 = vmatprep.mubr.f32.mxu0 0.0
        %1133 = vmatmul.mubr.f32.gmra.mxu0 %v984
        %v1134 = vpop.f32.mrf.mxu0
        %v1135 = vadd.f32 %v966, %v1134
        %v1136 = vpop.f32.mrf.mxu0
        %1137 = vmatprep.mubr.f32.mxu0 0.0
        %1138 = vmatmul.mubr.f32.gmra.mxu0 %v987
        %v1139 = vpop.f32.mrf.mxu0
        %v1140 = vadd.f32 %v966, %v1139
        %v1141 = vpop.f32.mrf.mxu0
        %1142 = vmatprep.mubr.f32.mxu0 0.0
        %1143 = vmatmul.mubr.f32.gmra.mxu0 %v990
        %v1144 = vpop.f32.mrf.mxu0
        %v1145 = vadd.f32 %v966, %v1144
        %v1146 = vpop.f32.mrf.mxu0
        %1147 = vmatprep.mubr.f32.mxu0 0.0
        %1148 = vmatmul.mubr.f32.gmra.mxu0 %v993
        %v1149 = vpop.f32.mrf.mxu0
        %v1150 = vadd.f32 %v966, %v1149
        %v1151 = vpop.f32.mrf.mxu0
        %1152 = vmatprep.mubr.f32.mxu0 0.0
        %1153 = vmatmul.mubr.f32.gmra.mxu0 %v996
        %v1154 = vpop.f32.mrf.mxu0
        %v1155 = vadd.f32 %v966, %v1154
        %v1156 = vpop.f32.mrf.mxu0
        %1157 = vmatprep.mubr.f32.mxu0 0.0
        %1158 = vmatmul.mubr.f32.gmra.mxu0 %v999
        %v1159 = vpop.f32.mrf.mxu0
        %v1160 = vadd.f32 %v966, %v1159
        %v1161 = vpop.f32.mrf.mxu0
        %1162 = vmatprep.mubr.f32.mxu0 0.0
        %1163 = vmatmul.mubr.f32.gmra.mxu0 %v1002
        %v1164 = vpop.f32.mrf.mxu0
        %v1165 = vadd.f32 %v966, %v1164
        %v1166 = vpop.f32.mrf.mxu0
        %1167 = vmatprep.mubr.f32.mxu0 0.0
        %1168 = vmatmul.mubr.f32.gmra.mxu0 %v1005
        %v1169 = vpop.f32.mrf.mxu0
        %v1170 = vadd.f32 %v966, %v1169
        %v1171 = vpop.f32.mrf.mxu0
        %1172 = vmatprep.mubr.f32.mxu0 0.0
        %1173 = vmatmul.mubr.f32.gmra.mxu0 %v1008
        %v1174 = vpop.f32.mrf.mxu0
        %v1175 = vadd.f32 %v966, %v1174
        %v1176 = vpop.f32.mrf.mxu0
        %1177 = vmatprep.mubr.f32.mxu0 0.0
        %1178 = vmatmul.mubr.f32.gmra.mxu0 %v1011
        %v1179 = vpop.f32.mrf.mxu0
        %v1180 = vadd.f32 %v966, %v1179
        %v1181 = vpop.f32.mrf.mxu0
        %1182 = vmatprep.mubr.f32.mxu0 0.0
        %1183 = vmatmul.mubr.f32.gmra.mxu0 %v1014
        %v1184 = vpop.f32.mrf.mxu0
        %v1185 = vadd.f32 %v966, %v1184
        %v1186 = vpop.f32.mrf.mxu0
        %1187 = vmatprep.mubr.f32.mxu0 0.0
        %1188 = vmatmul.mubr.f32.gmra.mxu0 %v1017
        %v1189 = vpop.f32.mrf.mxu0
        %v1190 = vadd.f32 %v966, %v1189
        %v1191 = vpop.f32.mrf.mxu0
        %1192 = vmatprep.mubr.f32.mxu0 0.0
        %1193 = vmatmul.mubr.f32.gmra.mxu0 %v1020
        %v1194 = vpop.f32.mrf.mxu0
        %v1195 = vadd.f32 %v966, %v1194
        %v1196 = vpop.f32.mrf.mxu0
        %1197 = vmatprep.mubr.f32.mxu0 0.0
        %1198 = vmatmul.mubr.f32.gmra.mxu0 %v1023
        %v1199 = vpop.f32.mrf.mxu0
        %v1200 = vadd.f32 %v966, %v1199
        %v1201 = vpop.f32.mrf.mxu0
        %1202 = vmatprep.mubr.f32.mxu0 0.0
        %1203 = vmatmul.mubr.f32.gmra.mxu0 %v1026
        %v1204 = vpop.f32.mrf.mxu0
        %v1205 = vadd.f32 %v966, %v1204
        %v1206 = vpop.f32.mrf.mxu0
        %1207 = vmatprep.mubr.f32.mxu0 0.0
        %1208 = vmatmul.mubr.f32.gmra.mxu0 %v1029
        %v1209 = vpop.f32.mrf.mxu0
        %v1210 = vadd.f32 %v966, %v1209
        %v1211 = vpop.f32.mrf.mxu0
        %1212 = vmatprep.mubr.f32.mxu0 0.0
        %1213 = vmatmul.mubr.f32.gmra.mxu0 %v1032
        %v1214 = vpop.f32.mrf.mxu0
        %v1215 = vadd.f32 %v966, %v1214
        %v1216 = vpop.f32.mrf.mxu0
        %1217 = vmatprep.mubr.f32.mxu0 0.0
        %1218 = vmatmul.mubr.f32.gmra.mxu0 %v1035
        %v1219 = vpop.f32.mrf.mxu0
        %v1220 = vadd.f32 %v966, %v1219
        %v1221 = vpop.f32.mrf.mxu0
        %1222 = vmatprep.mubr.f32.mxu0 0.0
        %1223 = vmatmul.mubr.f32.gmra.mxu0 %v1038
        %v1224 = vpop.f32.mrf.mxu0
        %v1225 = vadd.f32 %v966, %v1224
        %v1226 = vpop.f32.mrf.mxu0
        %1227 = vmatprep.mubr.f32.mxu0 0.0
        %1228 = vmatmul.mubr.f32.gmra.mxu0 %v1041
        %v1229 = vpop.f32.mrf.mxu0
        %v1230 = vadd.f32 %v966, %v1229
        %v1231 = vpop.f32.mrf.mxu0
        %1232 = vdwg.mxu0
        %v1233 = vmax.f32 %v1110, 0.0
        %v1234 = vmax.f32 %v1115, 0.0
        %v1235 = vmax.f32 %v1120, 0.0
        %v1236 = vmax.f32 %v1125, 0.0
        %v1237 = vmax.f32 %v1130, 0.0
        %v1238 = vmax.f32 %v1135, 0.0
        %v1239 = vmax.f32 %v1140, 0.0
        %v1240 = vmax.f32 %v1145, 0.0
        %v1241 = vmax.f32 %v1150, 0.0
        %v1242 = vmax.f32 %v1155, 0.0
        %v1243 = vmax.f32 %v1160, 0.0
        %v1244 = vmax.f32 %v1165, 0.0
        %v1245 = vmax.f32 %v1170, 0.0
        %v1246 = vmax.f32 %v1175, 0.0
        %v1247 = vmax.f32 %v1180, 0.0
        %v1248 = vmax.f32 %v1185, 0.0
        %v1249 = vmax.f32 %v1190, 0.0
        %v1250 = vmax.f32 %v1195, 0.0
        %v1251 = vmax.f32 %v1200, 0.0
        %v1252 = vmax.f32 %v1205, 0.0
        %v1253 = vmax.f32 %v1210, 0.0
        %v1254 = vmax.f32 %v1215, 0.0
        %v1255 = vmax.f32 %v1220, 0.0
        %v1256 = vmax.f32 %v1225, 0.0
        %v1257 = vmax.f32 %v1230, 0.0
        %v1258 = vld [vmem:[#allocation13] sm:$0xff]
        %v1259 = vld [vmem:[#allocation13 + $0x8] sm:$0xff]
        %v1260 = vld [vmem:[#allocation13 + $0x10] sm:$0xff]
        %v1261 = vld [vmem:[#allocation13 + $0x18] sm:$0xff]
        %v1262 = vld [vmem:[#allocation13 + $0x20] sm:$0xff]
        %v1263 = vld [vmem:[#allocation13 + $0x28] sm:$0xff]
        %v1264 = vld [vmem:[#allocation13 + $0x30] sm:$0xff]
        %v1265 = vld [vmem:[#allocation13 + $0x38] sm:$0xff]
        %v1266 = vld [vmem:[#allocation13 + $0x40] sm:$0xff]
        %v1267 = vld [vmem:[#allocation13 + $0x48] sm:$0xff]
        %v1268 = vld [vmem:[#allocation13 + $0x50] sm:$0xff]
        %v1269 = vld [vmem:[#allocation13 + $0x58] sm:$0xff]
        %v1270 = vld [vmem:[#allocation13 + $0x60] sm:$0xff]
        %v1271 = vld [vmem:[#allocation13 + $0x68] sm:$0xff]
        %v1272 = vld [vmem:[#allocation13 + $0x70] sm:$0xff]
        %v1273 = vld [vmem:[#allocation13 + $0x78] sm:$0xff]
        %v1274 = vld [vmem:[#allocation13 + $0x80] sm:$0xff]
        %v1275 = vld [vmem:[#allocation13 + $0x88] sm:$0xff]
        %v1276 = vld [vmem:[#allocation13 + $0x90] sm:$0xff]
        %v1277 = vld [vmem:[#allocation13 + $0x98] sm:$0xff]
        %v1278 = vld [vmem:[#allocation13 + $0xa0] sm:$0xff]
        %v1279 = vld [vmem:[#allocation13 + $0xa8] sm:$0xff]
        %v1280 = vld [vmem:[#allocation13 + $0xb0] sm:$0xff]
        %v1281 = vld [vmem:[#allocation13 + $0xb8] sm:$0xff]
        %v1282 = vld [vmem:[#allocation13 + $0xc0] sm:$0xff]
        %v1283 = vld [vmem:[#allocation13 + $0xc8] sm:$0xff]
        %v1284 = vld [vmem:[#allocation13 + $0xd0] sm:$0xff]
        %v1285 = vld [vmem:[#allocation13 + $0xd8] sm:$0xff]
        %v1286 = vld [vmem:[#allocation13 + $0xe0] sm:$0xff]
        %v1287 = vld [vmem:[#allocation13 + $0xe8] sm:$0xff]
        %v1288 = vld [vmem:[#allocation13 + $0xf0] sm:$0xff]
        %v1289 = vld [vmem:[#allocation13 + $0xf8] sm:$0xff]
        %v1290 = vld [vmem:[#allocation14] sm:$0x3]
        %v1292 = vlaneseq
        %v1293 = vshrl.u32 %v1292, 7
        %v1294 = vsub.s32 0, %v1293
        %v1295 = vrot.slane %v1290, %v1294
        %v1296 = vlaneseq
        %v1297 = vshrl.u32 %v1296, 7
        %v1298 = vsub.s32 1, %v1297
        %v1299 = vrot.slane %v1290, %v1298
        %1302 = vmatprep.subr.mxu0 %v1289
        %1303 = vmatpush1.msra.mxu0 %v1288
        %1304 = vmatprep.subr.mxu0 %v1287
        %1305 = vmatpush1.msra.mxu0 %v1286
        %1306 = vmatprep.subr.mxu0 %v1285
        %1307 = vmatpush1.msra.mxu0 %v1284
        %1308 = vmatprep.subr.mxu0 %v1283
        %1309 = vmatpush1.msra.mxu0 %v1282
        %1310 = vmatprep.subr.mxu0 %v1281
        %1311 = vmatpush1.msra.mxu0 %v1280
        %1312 = vmatprep.subr.mxu0 %v1279
        %1313 = vmatpush1.msra.mxu0 %v1278
        %1314 = vmatprep.subr.mxu0 %v1277
        %1315 = vmatpush1.msra.mxu0 %v1276
        %1316 = vmatprep.subr.mxu0 %v1275
        %1317 = vmatpush1.msra.mxu0 %v1274
        %1318 = vmatprep.subr.mxu0 %v1273
        %1319 = vmatpush1.msra.mxu0 %v1272
        %1320 = vmatprep.subr.mxu0 %v1271
        %1321 = vmatpush1.msra.mxu0 %v1270
        %1322 = vmatprep.subr.mxu0 %v1269
        %1323 = vmatpush1.msra.mxu0 %v1268
        %1324 = vmatprep.subr.mxu0 %v1267
        %1325 = vmatpush1.msra.mxu0 %v1266
        %1326 = vmatprep.subr.mxu0 %v1265
        %1327 = vmatpush1.msra.mxu0 %v1264
        %1328 = vmatprep.subr.mxu0 %v1263
        %1329 = vmatpush1.msra.mxu0 %v1262
        %1330 = vmatprep.subr.mxu0 %v1261
        %1331 = vmatpush1.msra.mxu0 %v1260
        %1332 = vmatprep.subr.mxu0 %v1259
        %1333 = vmatpush1.msra.mxu0 %v1258
        %1334 = vmatprep.subr.mxu0 0.0
        %1335 = vmatpush2.msra.mxu0 0.0
        %1336 = vmatprep.subr.mxu0 0.0
        %1337 = vmatpush2.msra.mxu0 0.0
        %1338 = vmatprep.subr.mxu0 0.0
        %1339 = vmatpush2.msra.mxu0 0.0
        %1340 = vmatprep.subr.mxu0 0.0
        %1341 = vmatpush2.msra.mxu0 0.0
        %1342 = vmatprep.subr.mxu0 0.0
        %1343 = vmatpush2.msra.mxu0 0.0
        %1344 = vmatprep.subr.mxu0 0.0
        %1345 = vmatpush2.msra.mxu0 0.0
        %1346 = vmatprep.subr.mxu0 0.0
        %1347 = vmatpush2.msra.mxu0 0.0
        %1348 = vmatprep.subr.mxu0 0.0
        %1349 = vmatpush2.msra.mxu0 0.0
        %1350 = vmatprep.subr.mxu0 0.0
        %1351 = vmatpush2.msra.mxu0 0.0
        %1352 = vmatprep.subr.mxu0 0.0
        %1353 = vmatpush2.msra.mxu0 0.0
        %1354 = vmatprep.subr.mxu0 0.0
        %1355 = vmatpush2.msra.mxu0 0.0
        %1356 = vmatprep.subr.mxu0 0.0
        %1357 = vmatpush2.msra.mxu0 0.0
        %1358 = vmatprep.subr.mxu0 0.0
        %1359 = vmatpush2.msra.mxu0 0.0
        %1360 = vmatprep.subr.mxu0 0.0
        %1361 = vmatpush2.msra.mxu0 0.0
        %1362 = vmatprep.subr.mxu0 0.0
        %1363 = vmatpush2.msra.mxu0 0.0
        %1364 = vmatprep.subr.mxu0 0.0
        %1365 = vmatpush2.msra.mxu0 0.0
        %1366 = vmatprep.mubr.f32.mxu0 0.0
        %1367 = vmatmul.mubr.f32.gmra.mxu0 %v1233
        %v1368 = vpop.f32.mrf.mxu0
        %v1369 = vadd.f32 %v1295, %v1368
        %v1370 = vpop.f32.mrf.mxu0
        %v1371 = vadd.f32 %v1299, %v1370
        %1372 = vmatprep.mubr.f32.mxu0 0.0
        %1373 = vmatmul.mubr.f32.gmra.mxu0 %v1234
        %v1374 = vpop.f32.mrf.mxu0
        %v1375 = vadd.f32 %v1295, %v1374
        %v1376 = vpop.f32.mrf.mxu0
        %v1377 = vadd.f32 %v1299, %v1376
        %1378 = vmatprep.mubr.f32.mxu0 0.0
        %1379 = vmatmul.mubr.f32.gmra.mxu0 %v1235
        %v1380 = vpop.f32.mrf.mxu0
        %v1381 = vadd.f32 %v1295, %v1380
        %v1382 = vpop.f32.mrf.mxu0
        %v1383 = vadd.f32 %v1299, %v1382
        %1384 = vmatprep.mubr.f32.mxu0 0.0
        %1385 = vmatmul.mubr.f32.gmra.mxu0 %v1236
        %v1386 = vpop.f32.mrf.mxu0
        %v1387 = vadd.f32 %v1295, %v1386
        %v1388 = vpop.f32.mrf.mxu0
        %v1389 = vadd.f32 %v1299, %v1388
        %1390 = vmatprep.mubr.f32.mxu0 0.0
        %1391 = vmatmul.mubr.f32.gmra.mxu0 %v1237
        %v1392 = vpop.f32.mrf.mxu0
        %v1393 = vadd.f32 %v1295, %v1392
        %v1394 = vpop.f32.mrf.mxu0
        %v1395 = vadd.f32 %v1299, %v1394
        %1396 = vmatprep.mubr.f32.mxu0 0.0
        %1397 = vmatmul.mubr.f32.gmra.mxu0 %v1238
        %v1398 = vpop.f32.mrf.mxu0
        %v1399 = vadd.f32 %v1295, %v1398
        %v1400 = vpop.f32.mrf.mxu0
        %v1401 = vadd.f32 %v1299, %v1400
        %1402 = vmatprep.mubr.f32.mxu0 0.0
        %1403 = vmatmul.mubr.f32.gmra.mxu0 %v1239
        %v1404 = vpop.f32.mrf.mxu0
        %v1405 = vadd.f32 %v1295, %v1404
        %v1406 = vpop.f32.mrf.mxu0
        %v1407 = vadd.f32 %v1299, %v1406
        %1408 = vmatprep.mubr.f32.mxu0 0.0
        %1409 = vmatmul.mubr.f32.gmra.mxu0 %v1240
        %v1410 = vpop.f32.mrf.mxu0
        %v1411 = vadd.f32 %v1295, %v1410
        %v1412 = vpop.f32.mrf.mxu0
        %v1413 = vadd.f32 %v1299, %v1412
        %1414 = vmatprep.mubr.f32.mxu0 0.0
        %1415 = vmatmul.mubr.f32.gmra.mxu0 %v1241
        %v1416 = vpop.f32.mrf.mxu0
        %v1417 = vadd.f32 %v1295, %v1416
        %v1418 = vpop.f32.mrf.mxu0
        %v1419 = vadd.f32 %v1299, %v1418
        %1420 = vmatprep.mubr.f32.mxu0 0.0
        %1421 = vmatmul.mubr.f32.gmra.mxu0 %v1242
        %v1422 = vpop.f32.mrf.mxu0
        %v1423 = vadd.f32 %v1295, %v1422
        %v1424 = vpop.f32.mrf.mxu0
        %v1425 = vadd.f32 %v1299, %v1424
        %1426 = vmatprep.mubr.f32.mxu0 0.0
        %1427 = vmatmul.mubr.f32.gmra.mxu0 %v1243
        %v1428 = vpop.f32.mrf.mxu0
        %v1429 = vadd.f32 %v1295, %v1428
        %v1430 = vpop.f32.mrf.mxu0
        %v1431 = vadd.f32 %v1299, %v1430
        %1432 = vmatprep.mubr.f32.mxu0 0.0
        %1433 = vmatmul.mubr.f32.gmra.mxu0 %v1244
        %v1434 = vpop.f32.mrf.mxu0
        %v1435 = vadd.f32 %v1295, %v1434
        %v1436 = vpop.f32.mrf.mxu0
        %v1437 = vadd.f32 %v1299, %v1436
        %1438 = vmatprep.mubr.f32.mxu0 0.0
        %1439 = vmatmul.mubr.f32.gmra.mxu0 %v1245
        %v1440 = vpop.f32.mrf.mxu0
        %v1441 = vadd.f32 %v1295, %v1440
        %v1442 = vpop.f32.mrf.mxu0
        %v1443 = vadd.f32 %v1299, %v1442
        %1444 = vmatprep.mubr.f32.mxu0 0.0
        %1445 = vmatmul.mubr.f32.gmra.mxu0 %v1246
        %v1446 = vpop.f32.mrf.mxu0
        %v1447 = vadd.f32 %v1295, %v1446
        %v1448 = vpop.f32.mrf.mxu0
        %v1449 = vadd.f32 %v1299, %v1448
        %1450 = vmatprep.mubr.f32.mxu0 0.0
        %1451 = vmatmul.mubr.f32.gmra.mxu0 %v1247
        %v1452 = vpop.f32.mrf.mxu0
        %v1453 = vadd.f32 %v1295, %v1452
        %v1454 = vpop.f32.mrf.mxu0
        %v1455 = vadd.f32 %v1299, %v1454
        %1456 = vmatprep.mubr.f32.mxu0 0.0
        %1457 = vmatmul.mubr.f32.gmra.mxu0 %v1248
        %v1458 = vpop.f32.mrf.mxu0
        %v1459 = vadd.f32 %v1295, %v1458
        %v1460 = vpop.f32.mrf.mxu0
        %v1461 = vadd.f32 %v1299, %v1460
        %1462 = vmatprep.mubr.f32.mxu0 0.0
        %1463 = vmatmul.mubr.f32.gmra.mxu0 %v1249
        %v1464 = vpop.f32.mrf.mxu0
        %v1465 = vadd.f32 %v1295, %v1464
        %v1466 = vpop.f32.mrf.mxu0
        %v1467 = vadd.f32 %v1299, %v1466
        %1468 = vmatprep.mubr.f32.mxu0 0.0
        %1469 = vmatmul.mubr.f32.gmra.mxu0 %v1250
        %v1470 = vpop.f32.mrf.mxu0
        %v1471 = vadd.f32 %v1295, %v1470
        %v1472 = vpop.f32.mrf.mxu0
        %v1473 = vadd.f32 %v1299, %v1472
        %1474 = vmatprep.mubr.f32.mxu0 0.0
        %1475 = vmatmul.mubr.f32.gmra.mxu0 %v1251
        %v1476 = vpop.f32.mrf.mxu0
        %v1477 = vadd.f32 %v1295, %v1476
        %v1478 = vpop.f32.mrf.mxu0
        %v1479 = vadd.f32 %v1299, %v1478
        %1480 = vmatprep.mubr.f32.mxu0 0.0
        %1481 = vmatmul.mubr.f32.gmra.mxu0 %v1252
        %v1482 = vpop.f32.mrf.mxu0
        %v1483 = vadd.f32 %v1295, %v1482
        %v1484 = vpop.f32.mrf.mxu0
        %v1485 = vadd.f32 %v1299, %v1484
        %1486 = vmatprep.mubr.f32.mxu0 0.0
        %1487 = vmatmul.mubr.f32.gmra.mxu0 %v1253
        %v1488 = vpop.f32.mrf.mxu0
        %v1489 = vadd.f32 %v1295, %v1488
        %v1490 = vpop.f32.mrf.mxu0
        %v1491 = vadd.f32 %v1299, %v1490
        %1492 = vmatprep.mubr.f32.mxu0 0.0
        %1493 = vmatmul.mubr.f32.gmra.mxu0 %v1254
        %v1494 = vpop.f32.mrf.mxu0
        %v1495 = vadd.f32 %v1295, %v1494
        %v1496 = vpop.f32.mrf.mxu0
        %v1497 = vadd.f32 %v1299, %v1496
        %1498 = vmatprep.mubr.f32.mxu0 0.0
        %1499 = vmatmul.mubr.f32.gmra.mxu0 %v1255
        %v1500 = vpop.f32.mrf.mxu0
        %v1501 = vadd.f32 %v1295, %v1500
        %v1502 = vpop.f32.mrf.mxu0
        %v1503 = vadd.f32 %v1299, %v1502
        %1504 = vmatprep.mubr.f32.mxu0 0.0
        %1505 = vmatmul.mubr.f32.gmra.mxu0 %v1256
        %v1506 = vpop.f32.mrf.mxu0
        %v1507 = vadd.f32 %v1295, %v1506
        %v1508 = vpop.f32.mrf.mxu0
        %v1509 = vadd.f32 %v1299, %v1508
        %1510 = vmatprep.mubr.f32.mxu0 0.0
        %1511 = vmatmul.mubr.f32.gmra.mxu0 %v1257
        %v1512 = vpop.f32.mrf.mxu0
        %v1513 = vadd.f32 %v1295, %v1512
        %v1514 = vpop.f32.mrf.mxu0
        %v1515 = vadd.f32 %v1299, %v1514
        %1516 = vdwg.mxu0
        %v1517 = vmax.f32 %v1369, 0.0
        %v1518 = vmax.f32 %v1371, 0.0
        %v1519 = vmax.f32 %v1375, 0.0
        %v1520 = vmax.f32 %v1377, 0.0
        %v1521 = vmax.f32 %v1381, 0.0
        %v1522 = vmax.f32 %v1383, 0.0
        %v1523 = vmax.f32 %v1387, 0.0
        %v1524 = vmax.f32 %v1389, 0.0
        %v1525 = vmax.f32 %v1393, 0.0
        %v1526 = vmax.f32 %v1395, 0.0
        %v1527 = vmax.f32 %v1399, 0.0
        %v1528 = vmax.f32 %v1401, 0.0
        %v1529 = vmax.f32 %v1405, 0.0
        %v1530 = vmax.f32 %v1407, 0.0
        %v1531 = vmax.f32 %v1411, 0.0
        %v1532 = vmax.f32 %v1413, 0.0
        %v1533 = vmax.f32 %v1417, 0.0
        %v1534 = vmax.f32 %v1419, 0.0
        %v1535 = vmax.f32 %v1423, 0.0
        %v1536 = vmax.f32 %v1425, 0.0
        %v1537 = vmax.f32 %v1429, 0.0
        %v1538 = vmax.f32 %v1431, 0.0
        %v1539 = vmax.f32 %v1435, 0.0
        %v1540 = vmax.f32 %v1437, 0.0
        %v1541 = vmax.f32 %v1441, 0.0
        %v1542 = vmax.f32 %v1443, 0.0
        %v1543 = vmax.f32 %v1447, 0.0
        %v1544 = vmax.f32 %v1449, 0.0
        %v1545 = vmax.f32 %v1453, 0.0
        %v1546 = vmax.f32 %v1455, 0.0
        %v1547 = vmax.f32 %v1459, 0.0
        %v1548 = vmax.f32 %v1461, 0.0
        %v1549 = vmax.f32 %v1465, 0.0
        %v1550 = vmax.f32 %v1467, 0.0
        %v1551 = vmax.f32 %v1471, 0.0
        %v1552 = vmax.f32 %v1473, 0.0
        %v1553 = vmax.f32 %v1477, 0.0
        %v1554 = vmax.f32 %v1479, 0.0
        %v1555 = vmax.f32 %v1483, 0.0
        %v1556 = vmax.f32 %v1485, 0.0
        %v1557 = vmax.f32 %v1489, 0.0
        %v1558 = vmax.f32 %v1491, 0.0
        %v1559 = vmax.f32 %v1495, 0.0
        %v1560 = vmax.f32 %v1497, 0.0
        %v1561 = vmax.f32 %v1501, 0.0
        %v1562 = vmax.f32 %v1503, 0.0
        %v1563 = vmax.f32 %v1507, 0.0
        %v1564 = vmax.f32 %v1509, 0.0
        %v1565 = vmax.f32 %v1513, 0.0
        %v1566 = vmax.f32 %v1515, 0.0
        %v1567 = vld [vmem:[#allocation16] sm:$0xff]
        %v1568 = vld [vmem:[#allocation16 + $0x8] sm:$0xff]
        %v1569 = vld [vmem:[#allocation16 + $0x10] sm:$0xff]
        %v1570 = vld [vmem:[#allocation16 + $0x18] sm:$0xff]
        %v1571 = vld [vmem:[#allocation16 + $0x20] sm:$0xff]
        %v1572 = vld [vmem:[#allocation16 + $0x28] sm:$0xff]
        %v1573 = vld [vmem:[#allocation16 + $0x30] sm:$0xff]
        %v1574 = vld [vmem:[#allocation16 + $0x38] sm:$0xff]
        %v1575 = vld [vmem:[#allocation16 + $0x40] sm:$0xff]
        %v1576 = vld [vmem:[#allocation16 + $0x48] sm:$0xff]
        %v1577 = vld [vmem:[#allocation16 + $0x50] sm:$0xff]
        %v1578 = vld [vmem:[#allocation16 + $0x58] sm:$0xff]
        %v1579 = vld [vmem:[#allocation16 + $0x60] sm:$0xff]
        %v1580 = vld [vmem:[#allocation16 + $0x68] sm:$0xff]
        %v1581 = vld [vmem:[#allocation16 + $0x70] sm:$0xff]
        %v1582 = vld [vmem:[#allocation16 + $0x78] sm:$0xff]
        %v1583 = vld [vmem:[#allocation16 + $0x80] sm:$0xff]
        %v1584 = vld [vmem:[#allocation16 + $0x88] sm:$0xff]
        %v1585 = vld [vmem:[#allocation16 + $0x90] sm:$0xff]
        %v1586 = vld [vmem:[#allocation16 + $0x98] sm:$0xff]
        %v1587 = vld [vmem:[#allocation16 + $0xa0] sm:$0xff]
        %v1588 = vld [vmem:[#allocation16 + $0xa8] sm:$0xff]
        %v1589 = vld [vmem:[#allocation16 + $0xb0] sm:$0xff]
        %v1590 = vld [vmem:[#allocation16 + $0xb8] sm:$0xff]
        %v1591 = vld [vmem:[#allocation16 + $0xc0] sm:$0xff]
        %v1592 = vld [vmem:[#allocation16 + $0xc8] sm:$0xff]
        %v1593 = vld [vmem:[#allocation16 + $0xd0] sm:$0xff]
        %v1594 = vld [vmem:[#allocation16 + $0xd8] sm:$0xff]
        %v1595 = vld [vmem:[#allocation16 + $0xe0] sm:$0xff]
        %v1596 = vld [vmem:[#allocation16 + $0xe8] sm:$0xff]
        %v1597 = vld [vmem:[#allocation16 + $0xf0] sm:$0xff]
        %v1598 = vld [vmem:[#allocation16 + $0xf8] sm:$0xff]
        %v1599 = vld [vmem:[#allocation16 + $0x100] sm:$0xff]
        %v1600 = vld [vmem:[#allocation16 + $0x108] sm:$0xff]
        %v1601 = vld [vmem:[#allocation16 + $0x110] sm:$0xff]
        %v1602 = vld [vmem:[#allocation16 + $0x118] sm:$0xff]
        %v1603 = vld [vmem:[#allocation16 + $0x120] sm:$0xff]
        %v1604 = vld [vmem:[#allocation16 + $0x128] sm:$0xff]
        %v1605 = vld [vmem:[#allocation16 + $0x130] sm:$0xff]
        %v1606 = vld [vmem:[#allocation16 + $0x138] sm:$0xff]
        %v1607 = vld [vmem:[#allocation16 + $0x140] sm:$0xff]
        %v1608 = vld [vmem:[#allocation16 + $0x148] sm:$0xff]
        %v1609 = vld [vmem:[#allocation16 + $0x150] sm:$0xff]
        %v1610 = vld [vmem:[#allocation16 + $0x158] sm:$0xff]
        %v1611 = vld [vmem:[#allocation16 + $0x160] sm:$0xff]
        %v1612 = vld [vmem:[#allocation16 + $0x168] sm:$0xff]
        %v1613 = vld [vmem:[#allocation16 + $0x170] sm:$0xff]
        %v1614 = vld [vmem:[#allocation16 + $0x178] sm:$0xff]
        %v1615 = vld [vmem:[#allocation16 + $0x180] sm:$0xff]
        %v1616 = vld [vmem:[#allocation16 + $0x188] sm:$0xff]
        %v1617 = vld [vmem:[#allocation16 + $0x190] sm:$0xff]
        %v1618 = vld [vmem:[#allocation16 + $0x198] sm:$0xff]
        %v1619 = vld [vmem:[#allocation16 + $0x1a0] sm:$0xff]
        %v1620 = vld [vmem:[#allocation16 + $0x1a8] sm:$0xff]
        %v1621 = vld [vmem:[#allocation16 + $0x1b0] sm:$0xff]
        %v1622 = vld [vmem:[#allocation16 + $0x1b8] sm:$0xff]
        %v1623 = vld [vmem:[#allocation16 + $0x1c0] sm:$0xff]
        %v1624 = vld [vmem:[#allocation16 + $0x1c8] sm:$0xff]
        %v1625 = vld [vmem:[#allocation16 + $0x1d0] sm:$0xff]
        %v1626 = vld [vmem:[#allocation16 + $0x1d8] sm:$0xff]
        %v1627 = vld [vmem:[#allocation16 + $0x1e0] sm:$0xff]
        %v1628 = vld [vmem:[#allocation16 + $0x1e8] sm:$0xff]
        %v1629 = vld [vmem:[#allocation16 + $0x1f0] sm:$0xff]
        %v1630 = vld [vmem:[#allocation16 + $0x1f8] sm:$0xff]
        %v1631 = vld [vmem:[#allocation17] sm:$0x3]
        %v1633 = vlaneseq
        %v1634 = vshrl.u32 %v1633, 7
        %v1635 = vsub.s32 0, %v1634
        %v1636 = vrot.slane %v1631, %v1635
        %v1637 = vlaneseq
        %v1638 = vshrl.u32 %v1637, 7
        %v1639 = vsub.s32 1, %v1638
        %v1640 = vrot.slane %v1631, %v1639
        %1643 = vmatprep.subr.mxu0 %v1598
        %1644 = vmatpush1.msra.mxu0 %v1597
        %1645 = vmatprep.subr.mxu0 %v1596
        %1646 = vmatpush1.msra.mxu0 %v1595
        %1647 = vmatprep.subr.mxu0 %v1594
        %1648 = vmatpush1.msra.mxu0 %v1593
        %1649 = vmatprep.subr.mxu0 %v1592
        %1650 = vmatpush1.msra.mxu0 %v1591
        %1651 = vmatprep.subr.mxu0 %v1590
        %1652 = vmatpush1.msra.mxu0 %v1589
        %1653 = vmatprep.subr.mxu0 %v1588
        %1654 = vmatpush1.msra.mxu0 %v1587
        %1655 = vmatprep.subr.mxu0 %v1586
        %1656 = vmatpush1.msra.mxu0 %v1585
        %1657 = vmatprep.subr.mxu0 %v1584
        %1658 = vmatpush1.msra.mxu0 %v1583
        %1659 = vmatprep.subr.mxu0 %v1582
        %1660 = vmatpush1.msra.mxu0 %v1581
        %1661 = vmatprep.subr.mxu0 %v1580
        %1662 = vmatpush1.msra.mxu0 %v1579
        %1663 = vmatprep.subr.mxu0 %v1578
        %1664 = vmatpush1.msra.mxu0 %v1577
        %1665 = vmatprep.subr.mxu0 %v1576
        %1666 = vmatpush1.msra.mxu0 %v1575
        %1667 = vmatprep.subr.mxu0 %v1574
        %1668 = vmatpush1.msra.mxu0 %v1573
        %1669 = vmatprep.subr.mxu0 %v1572
        %1670 = vmatpush1.msra.mxu0 %v1571
        %1671 = vmatprep.subr.mxu0 %v1570
        %1672 = vmatpush1.msra.mxu0 %v1569
        %1673 = vmatprep.subr.mxu0 %v1568
        %1674 = vmatpush1.msra.mxu0 %v1567
        %1675 = vmatprep.subr.mxu0 %v1630
        %1676 = vmatpush2.msra.mxu0 %v1629
        %1677 = vmatprep.subr.mxu0 %v1628
        %1678 = vmatpush2.msra.mxu0 %v1627
        %1679 = vmatprep.subr.mxu0 %v1626
        %1680 = vmatpush2.msra.mxu0 %v1625
        %1681 = vmatprep.subr.mxu0 %v1624
        %1682 = vmatpush2.msra.mxu0 %v1623
        %1683 = vmatprep.subr.mxu0 %v1622
        %1684 = vmatpush2.msra.mxu0 %v1621
        %1685 = vmatprep.subr.mxu0 %v1620
        %1686 = vmatpush2.msra.mxu0 %v1619
        %1687 = vmatprep.subr.mxu0 %v1618
        %1688 = vmatpush2.msra.mxu0 %v1617
        %1689 = vmatprep.subr.mxu0 %v1616
        %1690 = vmatpush2.msra.mxu0 %v1615
        %1691 = vmatprep.subr.mxu0 %v1614
        %1692 = vmatpush2.msra.mxu0 %v1613
        %1693 = vmatprep.subr.mxu0 %v1612
        %1694 = vmatpush2.msra.mxu0 %v1611
        %1695 = vmatprep.subr.mxu0 %v1610
        %1696 = vmatpush2.msra.mxu0 %v1609
        %1697 = vmatprep.subr.mxu0 %v1608
        %1698 = vmatpush2.msra.mxu0 %v1607
        %1699 = vmatprep.subr.mxu0 %v1606
        %1700 = vmatpush2.msra.mxu0 %v1605
        %1701 = vmatprep.subr.mxu0 %v1604
        %1702 = vmatpush2.msra.mxu0 %v1603
        %1703 = vmatprep.subr.mxu0 %v1602
        %1704 = vmatpush2.msra.mxu0 %v1601
        %1705 = vmatprep.subr.mxu0 %v1600
        %1706 = vmatpush2.msra.mxu0 %v1599
        %1707 = vmatprep.mubr.f32.mxu0 %v1518
        %1708 = vmatmul.mubr.f32.gmra.mxu0 %v1517
        %v1709 = vpop.f32.mrf.mxu0
        %v1710 = vadd.f32 %v1636, %v1709
        %v1711 = vpop.f32.mrf.mxu0
        %v1712 = vadd.f32 %v1640, %v1711
        %1713 = vmatprep.mubr.f32.mxu0 %v1520
        %1714 = vmatmul.mubr.f32.gmra.mxu0 %v1519
        %v1715 = vpop.f32.mrf.mxu0
        %v1716 = vadd.f32 %v1636, %v1715
        %v1717 = vpop.f32.mrf.mxu0
        %v1718 = vadd.f32 %v1640, %v1717
        %1719 = vmatprep.mubr.f32.mxu0 %v1522
        %1720 = vmatmul.mubr.f32.gmra.mxu0 %v1521
        %v1721 = vpop.f32.mrf.mxu0
        %v1722 = vadd.f32 %v1636, %v1721
        %v1723 = vpop.f32.mrf.mxu0
        %v1724 = vadd.f32 %v1640, %v1723
        %1725 = vmatprep.mubr.f32.mxu0 %v1524
        %1726 = vmatmul.mubr.f32.gmra.mxu0 %v1523
        %v1727 = vpop.f32.mrf.mxu0
        %v1728 = vadd.f32 %v1636, %v1727
        %v1729 = vpop.f32.mrf.mxu0
        %v1730 = vadd.f32 %v1640, %v1729
        %1731 = vmatprep.mubr.f32.mxu0 %v1526
        %1732 = vmatmul.mubr.f32.gmra.mxu0 %v1525
        %v1733 = vpop.f32.mrf.mxu0
        %v1734 = vadd.f32 %v1636, %v1733
        %v1735 = vpop.f32.mrf.mxu0
        %v1736 = vadd.f32 %v1640, %v1735
        %1737 = vmatprep.mubr.f32.mxu0 %v1528
        %1738 = vmatmul.mubr.f32.gmra.mxu0 %v1527
        %v1739 = vpop.f32.mrf.mxu0
        %v1740 = vadd.f32 %v1636, %v1739
        %v1741 = vpop.f32.mrf.mxu0
        %v1742 = vadd.f32 %v1640, %v1741
        %1743 = vmatprep.mubr.f32.mxu0 %v1530
        %1744 = vmatmul.mubr.f32.gmra.mxu0 %v1529
        %v1745 = vpop.f32.mrf.mxu0
        %v1746 = vadd.f32 %v1636, %v1745
        %v1747 = vpop.f32.mrf.mxu0
        %v1748 = vadd.f32 %v1640, %v1747
        %1749 = vmatprep.mubr.f32.mxu0 %v1532
        %1750 = vmatmul.mubr.f32.gmra.mxu0 %v1531
        %v1751 = vpop.f32.mrf.mxu0
        %v1752 = vadd.f32 %v1636, %v1751
        %v1753 = vpop.f32.mrf.mxu0
        %v1754 = vadd.f32 %v1640, %v1753
        %1755 = vmatprep.mubr.f32.mxu0 %v1534
        %1756 = vmatmul.mubr.f32.gmra.mxu0 %v1533
        %v1757 = vpop.f32.mrf.mxu0
        %v1758 = vadd.f32 %v1636, %v1757
        %v1759 = vpop.f32.mrf.mxu0
        %v1760 = vadd.f32 %v1640, %v1759
        %1761 = vmatprep.mubr.f32.mxu0 %v1536
        %1762 = vmatmul.mubr.f32.gmra.mxu0 %v1535
        %v1763 = vpop.f32.mrf.mxu0
        %v1764 = vadd.f32 %v1636, %v1763
        %v1765 = vpop.f32.mrf.mxu0
        %v1766 = vadd.f32 %v1640, %v1765
        %1767 = vmatprep.mubr.f32.mxu0 %v1538
        %1768 = vmatmul.mubr.f32.gmra.mxu0 %v1537
        %v1769 = vpop.f32.mrf.mxu0
        %v1770 = vadd.f32 %v1636, %v1769
        %v1771 = vpop.f32.mrf.mxu0
        %v1772 = vadd.f32 %v1640, %v1771
        %1773 = vmatprep.mubr.f32.mxu0 %v1540
        %1774 = vmatmul.mubr.f32.gmra.mxu0 %v1539
        %v1775 = vpop.f32.mrf.mxu0
        %v1776 = vadd.f32 %v1636, %v1775
        %v1777 = vpop.f32.mrf.mxu0
        %v1778 = vadd.f32 %v1640, %v1777
        %1779 = vmatprep.mubr.f32.mxu0 %v1542
        %1780 = vmatmul.mubr.f32.gmra.mxu0 %v1541
        %v1781 = vpop.f32.mrf.mxu0
        %v1782 = vadd.f32 %v1636, %v1781
        %v1783 = vpop.f32.mrf.mxu0
        %v1784 = vadd.f32 %v1640, %v1783
        %1785 = vmatprep.mubr.f32.mxu0 %v1544
        %1786 = vmatmul.mubr.f32.gmra.mxu0 %v1543
        %v1787 = vpop.f32.mrf.mxu0
        %v1788 = vadd.f32 %v1636, %v1787
        %v1789 = vpop.f32.mrf.mxu0
        %v1790 = vadd.f32 %v1640, %v1789
        %1791 = vmatprep.mubr.f32.mxu0 %v1546
        %1792 = vmatmul.mubr.f32.gmra.mxu0 %v1545
        %v1793 = vpop.f32.mrf.mxu0
        %v1794 = vadd.f32 %v1636, %v1793
        %v1795 = vpop.f32.mrf.mxu0
        %v1796 = vadd.f32 %v1640, %v1795
        %1797 = vmatprep.mubr.f32.mxu0 %v1548
        %1798 = vmatmul.mubr.f32.gmra.mxu0 %v1547
        %v1799 = vpop.f32.mrf.mxu0
        %v1800 = vadd.f32 %v1636, %v1799
        %v1801 = vpop.f32.mrf.mxu0
        %v1802 = vadd.f32 %v1640, %v1801
        %1803 = vmatprep.mubr.f32.mxu0 %v1550
        %1804 = vmatmul.mubr.f32.gmra.mxu0 %v1549
        %v1805 = vpop.f32.mrf.mxu0
        %v1806 = vadd.f32 %v1636, %v1805
        %v1807 = vpop.f32.mrf.mxu0
        %v1808 = vadd.f32 %v1640, %v1807
        %1809 = vmatprep.mubr.f32.mxu0 %v1552
        %1810 = vmatmul.mubr.f32.gmra.mxu0 %v1551
        %v1811 = vpop.f32.mrf.mxu0
        %v1812 = vadd.f32 %v1636, %v1811
        %v1813 = vpop.f32.mrf.mxu0
        %v1814 = vadd.f32 %v1640, %v1813
        %1815 = vmatprep.mubr.f32.mxu0 %v1554
        %1816 = vmatmul.mubr.f32.gmra.mxu0 %v1553
        %v1817 = vpop.f32.mrf.mxu0
        %v1818 = vadd.f32 %v1636, %v1817
        %v1819 = vpop.f32.mrf.mxu0
        %v1820 = vadd.f32 %v1640, %v1819
        %1821 = vmatprep.mubr.f32.mxu0 %v1556
        %1822 = vmatmul.mubr.f32.gmra.mxu0 %v1555
        %v1823 = vpop.f32.mrf.mxu0
        %v1824 = vadd.f32 %v1636, %v1823
        %v1825 = vpop.f32.mrf.mxu0
        %v1826 = vadd.f32 %v1640, %v1825
        %1827 = vmatprep.mubr.f32.mxu0 %v1558
        %1828 = vmatmul.mubr.f32.gmra.mxu0 %v1557
        %v1829 = vpop.f32.mrf.mxu0
        %v1830 = vadd.f32 %v1636, %v1829
        %v1831 = vpop.f32.mrf.mxu0
        %v1832 = vadd.f32 %v1640, %v1831
        %1833 = vmatprep.mubr.f32.mxu0 %v1560
        %1834 = vmatmul.mubr.f32.gmra.mxu0 %v1559
        %v1835 = vpop.f32.mrf.mxu0
        %v1836 = vadd.f32 %v1636, %v1835
        %v1837 = vpop.f32.mrf.mxu0
        %v1838 = vadd.f32 %v1640, %v1837
        %1839 = vmatprep.mubr.f32.mxu0 %v1562
        %1840 = vmatmul.mubr.f32.gmra.mxu0 %v1561
        %v1841 = vpop.f32.mrf.mxu0
        %v1842 = vadd.f32 %v1636, %v1841
        %v1843 = vpop.f32.mrf.mxu0
        %v1844 = vadd.f32 %v1640, %v1843
        %1845 = vmatprep.mubr.f32.mxu0 %v1564
        %1846 = vmatmul.mubr.f32.gmra.mxu0 %v1563
        %v1847 = vpop.f32.mrf.mxu0
        %v1848 = vadd.f32 %v1636, %v1847
        %v1849 = vpop.f32.mrf.mxu0
        %v1850 = vadd.f32 %v1640, %v1849
        %1851 = vmatprep.mubr.f32.mxu0 %v1566
        %1852 = vmatmul.mubr.f32.gmra.mxu0 %v1565
        %v1853 = vpop.f32.mrf.mxu0
        %v1854 = vadd.f32 %v1636, %v1853
        %v1855 = vpop.f32.mrf.mxu0
        %v1856 = vadd.f32 %v1640, %v1855
        %1857 = vdwg.mxu0
        %v1858 = vsub.f32 0.0, %v1710
        %v1859 = vsub.f32 0.0, %v1712
        %v1860 = vsub.f32 0.0, %v1716
        %v1861 = vsub.f32 0.0, %v1718
        %v1862 = vsub.f32 0.0, %v1722
        %v1863 = vsub.f32 0.0, %v1724
        %v1864 = vsub.f32 0.0, %v1728
        %v1865 = vsub.f32 0.0, %v1730
        %v1866 = vsub.f32 0.0, %v1734
        %v1867 = vsub.f32 0.0, %v1736
        %v1868 = vsub.f32 0.0, %v1740
        %v1869 = vsub.f32 0.0, %v1742
        %v1870 = vsub.f32 0.0, %v1746
        %v1871 = vsub.f32 0.0, %v1748
        %v1872 = vsub.f32 0.0, %v1752
        %v1873 = vsub.f32 0.0, %v1754
        %v1874 = vsub.f32 0.0, %v1758
        %v1875 = vsub.f32 0.0, %v1760
        %v1876 = vsub.f32 0.0, %v1764
        %v1877 = vsub.f32 0.0, %v1766
        %v1878 = vsub.f32 0.0, %v1770
        %v1879 = vsub.f32 0.0, %v1772
        %v1880 = vsub.f32 0.0, %v1776
        %v1881 = vsub.f32 0.0, %v1778
        %v1882 = vsub.f32 0.0, %v1782
        %v1883 = vsub.f32 0.0, %v1784
        %v1884 = vsub.f32 0.0, %v1788
        %v1885 = vsub.f32 0.0, %v1790
        %v1886 = vsub.f32 0.0, %v1794
        %v1887 = vsub.f32 0.0, %v1796
        %v1888 = vsub.f32 0.0, %v1800
        %v1889 = vsub.f32 0.0, %v1802
        %v1890 = vsub.f32 0.0, %v1806
        %v1891 = vsub.f32 0.0, %v1808
        %v1892 = vsub.f32 0.0, %v1812
        %v1893 = vsub.f32 0.0, %v1814
        %v1894 = vsub.f32 0.0, %v1818
        %v1895 = vsub.f32 0.0, %v1820
        %v1896 = vsub.f32 0.0, %v1824
        %v1897 = vsub.f32 0.0, %v1826
        %v1898 = vsub.f32 0.0, %v1830
        %v1899 = vsub.f32 0.0, %v1832
        %v1900 = vsub.f32 0.0, %v1836
        %v1901 = vsub.f32 0.0, %v1838
        %v1902 = vsub.f32 0.0, %v1842
        %v1903 = vsub.f32 0.0, %v1844
        %v1904 = vsub.f32 0.0, %v1848
        %v1905 = vsub.f32 0.0, %v1850
        %v1906 = vsub.f32 0.0, %v1854
        %v1907 = vsub.f32 0.0, %v1856
        %v1908 = vmul.f32 %v1858, 1.442695
        %v1909 = vpow.pop %v1908
        %v1910 = vmul.f32 %v1859, 1.442695
        %v1911 = vpow.pop %v1910
        %v1912 = vmul.f32 %v1860, 1.442695
        %v1913 = vpow.pop %v1912
        %v1914 = vmul.f32 %v1861, 1.442695
        %v1915 = vpow.pop %v1914
        %v1916 = vmul.f32 %v1862, 1.442695
        %v1917 = vpow.pop %v1916
        %v1918 = vmul.f32 %v1863, 1.442695
        %v1919 = vpow.pop %v1918
        %v1920 = vmul.f32 %v1864, 1.442695
        %v1921 = vpow.pop %v1920
        %v1922 = vmul.f32 %v1865, 1.442695
        %v1923 = vpow.pop %v1922
        %v1924 = vmul.f32 %v1866, 1.442695
        %v1925 = vpow.pop %v1924
        %v1926 = vmul.f32 %v1867, 1.442695
        %v1927 = vpow.pop %v1926
        %v1928 = vmul.f32 %v1868, 1.442695
        %v1929 = vpow.pop %v1928
        %v1930 = vmul.f32 %v1869, 1.442695
        %v1931 = vpow.pop %v1930
        %v1932 = vmul.f32 %v1870, 1.442695
        %v1933 = vpow.pop %v1932
        %v1934 = vmul.f32 %v1871, 1.442695
        %v1935 = vpow.pop %v1934
        %v1936 = vmul.f32 %v1872, 1.442695
        %v1937 = vpow.pop %v1936
        %v1938 = vmul.f32 %v1873, 1.442695
        %v1939 = vpow.pop %v1938
        %v1940 = vmul.f32 %v1874, 1.442695
        %v1941 = vpow.pop %v1940
        %v1942 = vmul.f32 %v1875, 1.442695
        %v1943 = vpow.pop %v1942
        %v1944 = vmul.f32 %v1876, 1.442695
        %v1945 = vpow.pop %v1944
        %v1946 = vmul.f32 %v1877, 1.442695
        %v1947 = vpow.pop %v1946
        %v1948 = vmul.f32 %v1878, 1.442695
        %v1949 = vpow.pop %v1948
        %v1950 = vmul.f32 %v1879, 1.442695
        %v1951 = vpow.pop %v1950
        %v1952 = vmul.f32 %v1880, 1.442695
        %v1953 = vpow.pop %v1952
        %v1954 = vmul.f32 %v1881, 1.442695
        %v1955 = vpow.pop %v1954
        %v1956 = vmul.f32 %v1882, 1.442695
        %v1957 = vpow.pop %v1956
        %v1958 = vmul.f32 %v1883, 1.442695
        %v1959 = vpow.pop %v1958
        %v1960 = vmul.f32 %v1884, 1.442695
        %v1961 = vpow.pop %v1960
        %v1962 = vmul.f32 %v1885, 1.442695
        %v1963 = vpow.pop %v1962
        %v1964 = vmul.f32 %v1886, 1.442695
        %v1965 = vpow.pop %v1964
        %v1966 = vmul.f32 %v1887, 1.442695
        %v1967 = vpow.pop %v1966
        %v1968 = vmul.f32 %v1888, 1.442695
        %v1969 = vpow.pop %v1968
        %v1970 = vmul.f32 %v1889, 1.442695
        %v1971 = vpow.pop %v1970
        %v1972 = vmul.f32 %v1890, 1.442695
        %v1973 = vpow.pop %v1972
        %v1974 = vmul.f32 %v1891, 1.442695
        %v1975 = vpow.pop %v1974
        %v1976 = vmul.f32 %v1892, 1.442695
        %v1977 = vpow.pop %v1976
        %v1978 = vmul.f32 %v1893, 1.442695
        %v1979 = vpow.pop %v1978
        %v1980 = vmul.f32 %v1894, 1.442695
        %v1981 = vpow.pop %v1980
        %v1982 = vmul.f32 %v1895, 1.442695
        %v1983 = vpow.pop %v1982
        %v1984 = vmul.f32 %v1896, 1.442695
        %v1985 = vpow.pop %v1984
        %v1986 = vmul.f32 %v1897, 1.442695
        %v1987 = vpow.pop %v1986
        %v1988 = vmul.f32 %v1898, 1.442695
        %v1989 = vpow.pop %v1988
        %v1990 = vmul.f32 %v1899, 1.442695
        %v1991 = vpow.pop %v1990
        %v1992 = vmul.f32 %v1900, 1.442695
        %v1993 = vpow.pop %v1992
        %v1994 = vmul.f32 %v1901, 1.442695
        %v1995 = vpow.pop %v1994
        %v1996 = vmul.f32 %v1902, 1.442695
        %v1997 = vpow.pop %v1996
        %v1998 = vmul.f32 %v1903, 1.442695
        %v1999 = vpow.pop %v1998
        %v2000 = vmul.f32 %v1904, 1.442695
        %v2001 = vpow.pop %v2000
        %v2002 = vmul.f32 %v1905, 1.442695
        %v2003 = vpow.pop %v2002
        %v2004 = vmul.f32 %v1906, 1.442695
        %v2005 = vpow.pop %v2004
        %v2006 = vmul.f32 %v1907, 1.442695
        %v2007 = vpow.pop %v2006
        %v2008 = vadd.f32 %v1909, 1.0
        %v2009 = vadd.f32 %v1911, 1.0
        %v2010 = vadd.f32 %v1913, 1.0
        %v2011 = vadd.f32 %v1915, 1.0
        %v2012 = vadd.f32 %v1917, 1.0
        %v2013 = vadd.f32 %v1919, 1.0
        %v2014 = vadd.f32 %v1921, 1.0
        %v2015 = vadd.f32 %v1923, 1.0
        %v2016 = vadd.f32 %v1925, 1.0
        %v2017 = vadd.f32 %v1927, 1.0
        %v2018 = vadd.f32 %v1929, 1.0
        %v2019 = vadd.f32 %v1931, 1.0
        %v2020 = vadd.f32 %v1933, 1.0
        %v2021 = vadd.f32 %v1935, 1.0
        %v2022 = vadd.f32 %v1937, 1.0
        %v2023 = vadd.f32 %v1939, 1.0
        %v2024 = vadd.f32 %v1941, 1.0
        %v2025 = vadd.f32 %v1943, 1.0
        %v2026 = vadd.f32 %v1945, 1.0
        %v2027 = vadd.f32 %v1947, 1.0
        %v2028 = vadd.f32 %v1949, 1.0
        %v2029 = vadd.f32 %v1951, 1.0
        %v2030 = vadd.f32 %v1953, 1.0
        %v2031 = vadd.f32 %v1955, 1.0
        %v2032 = vadd.f32 %v1957, 1.0
        %v2033 = vadd.f32 %v1959, 1.0
        %v2034 = vadd.f32 %v1961, 1.0
        %v2035 = vadd.f32 %v1963, 1.0
        %v2036 = vadd.f32 %v1965, 1.0
        %v2037 = vadd.f32 %v1967, 1.0
        %v2038 = vadd.f32 %v1969, 1.0
        %v2039 = vadd.f32 %v1971, 1.0
        %v2040 = vadd.f32 %v1973, 1.0
        %v2041 = vadd.f32 %v1975, 1.0
        %v2042 = vadd.f32 %v1977, 1.0
        %v2043 = vadd.f32 %v1979, 1.0
        %v2044 = vadd.f32 %v1981, 1.0
        %v2045 = vadd.f32 %v1983, 1.0
        %v2046 = vadd.f32 %v1985, 1.0
        %v2047 = vadd.f32 %v1987, 1.0
        %v2048 = vadd.f32 %v1989, 1.0
        %v2049 = vadd.f32 %v1991, 1.0
        %v2050 = vadd.f32 %v1993, 1.0
        %v2051 = vadd.f32 %v1995, 1.0
        %v2052 = vadd.f32 %v1997, 1.0
        %v2053 = vadd.f32 %v1999, 1.0
        %v2054 = vadd.f32 %v2001, 1.0
        %v2055 = vadd.f32 %v2003, 1.0
        %v2056 = vadd.f32 %v2005, 1.0
        %v2057 = vadd.f32 %v2007, 1.0
        %v2058 = vrcp.pop %v2008
        %v2059 = vrcp.pop %v2009
        %v2060 = vrcp.pop %v2010
        %v2061 = vrcp.pop %v2011
        %v2062 = vrcp.pop %v2012
        %v2063 = vrcp.pop %v2013
        %v2064 = vrcp.pop %v2014
        %v2065 = vrcp.pop %v2015
        %v2066 = vrcp.pop %v2016
        %v2067 = vrcp.pop %v2017
        %v2068 = vrcp.pop %v2018
        %v2069 = vrcp.pop %v2019
        %v2070 = vrcp.pop %v2020
        %v2071 = vrcp.pop %v2021
        %v2072 = vrcp.pop %v2022
        %v2073 = vrcp.pop %v2023
        %v2074 = vrcp.pop %v2024
        %v2075 = vrcp.pop %v2025
        %v2076 = vrcp.pop %v2026
        %v2077 = vrcp.pop %v2027
        %v2078 = vrcp.pop %v2028
        %v2079 = vrcp.pop %v2029
        %v2080 = vrcp.pop %v2030
        %v2081 = vrcp.pop %v2031
        %v2082 = vrcp.pop %v2032
        %v2083 = vrcp.pop %v2033
        %v2084 = vrcp.pop %v2034
        %v2085 = vrcp.pop %v2035
        %v2086 = vrcp.pop %v2036
        %v2087 = vrcp.pop %v2037
        %v2088 = vrcp.pop %v2038
        %v2089 = vrcp.pop %v2039
        %v2090 = vrcp.pop %v2040
        %v2091 = vrcp.pop %v2041
        %v2092 = vrcp.pop %v2042
        %v2093 = vrcp.pop %v2043
        %v2094 = vrcp.pop %v2044
        %v2095 = vrcp.pop %v2045
        %v2096 = vrcp.pop %v2046
        %v2097 = vrcp.pop %v2047
        %v2098 = vrcp.pop %v2048
        %v2099 = vrcp.pop %v2049
        %v2100 = vrcp.pop %v2050
        %v2101 = vrcp.pop %v2051
        %v2102 = vrcp.pop %v2052
        %v2103 = vrcp.pop %v2053
        %v2104 = vrcp.pop %v2054
        %v2105 = vrcp.pop %v2055
        %v2106 = vrcp.pop %v2056
        %v2107 = vrcp.pop %v2057
        %2108 = vst [vmem:[%s518] sm:$0xff] %v2058
        %2109 = vst [vmem:[%s518 + $0x8] sm:$0xff] %v2059
        %s2110 = scalar_lea.vmem %s518, 16 [#allocation19]
        %2111 = vst [vmem:[%s2110] sm:$0xff] %v2060
        %2112 = vst [vmem:[%s2110 + $0x8] sm:$0xff] %v2061
        %s2113 = scalar_lea.vmem %s518, 32 [#allocation19]
        %2114 = vst [vmem:[%s2113] sm:$0xff] %v2062
        %2115 = vst [vmem:[%s2113 + $0x8] sm:$0xff] %v2063
        %s2116 = scalar_lea.vmem %s518, 48 [#allocation19]
        %2117 = vst [vmem:[%s2116] sm:$0xff] %v2064
        %2118 = vst [vmem:[%s2116 + $0x8] sm:$0xff] %v2065
        %s2119 = scalar_lea.vmem %s518, 64 [#allocation19]
        %2120 = vst [vmem:[%s2119] sm:$0xff] %v2066
        %2121 = vst [vmem:[%s2119 + $0x8] sm:$0xff] %v2067
        %s2122 = scalar_lea.vmem %s518, 80 [#allocation19]
        %2123 = vst [vmem:[%s2122] sm:$0xff] %v2068
        %2124 = vst [vmem:[%s2122 + $0x8] sm:$0xff] %v2069
        %s2125 = scalar_lea.vmem %s518, 96 [#allocation19]
        %2126 = vst [vmem:[%s2125] sm:$0xff] %v2070
        %2127 = vst [vmem:[%s2125 + $0x8] sm:$0xff] %v2071
        %s2128 = scalar_lea.vmem %s518, 112 [#allocation19]
        %2129 = vst [vmem:[%s2128] sm:$0xff] %v2072
        %2130 = vst [vmem:[%s2128 + $0x8] sm:$0xff] %v2073
        %s2131 = scalar_lea.vmem %s518, 128 [#allocation19]
        %2132 = vst [vmem:[%s2131] sm:$0xff] %v2074
        %2133 = vst [vmem:[%s2131 + $0x8] sm:$0xff] %v2075
        %s2134 = scalar_lea.vmem %s518, 144 [#allocation19]
        %2135 = vst [vmem:[%s2134] sm:$0xff] %v2076
        %2136 = vst [vmem:[%s2134 + $0x8] sm:$0xff] %v2077
        %s2137 = scalar_lea.vmem %s518, 160 [#allocation19]
        %2138 = vst [vmem:[%s2137] sm:$0xff] %v2078
        %2139 = vst [vmem:[%s2137 + $0x8] sm:$0xff] %v2079
        %s2140 = scalar_lea.vmem %s518, 176 [#allocation19]
        %2141 = vst [vmem:[%s2140] sm:$0xff] %v2080
        %2142 = vst [vmem:[%s2140 + $0x8] sm:$0xff] %v2081
        %s2143 = scalar_lea.vmem %s518, 192 [#allocation19]
        %2144 = vst [vmem:[%s2143] sm:$0xff] %v2082
        %2145 = vst [vmem:[%s2143 + $0x8] sm:$0xff] %v2083
        %s2146 = scalar_lea.vmem %s518, 208 [#allocation19]
        %2147 = vst [vmem:[%s2146] sm:$0xff] %v2084
        %2148 = vst [vmem:[%s2146 + $0x8] sm:$0xff] %v2085
        %s2149 = scalar_lea.vmem %s518, 224 [#allocation19]
        %2150 = vst [vmem:[%s2149] sm:$0xff] %v2086
        %2151 = vst [vmem:[%s2149 + $0x8] sm:$0xff] %v2087
        %s2152 = scalar_lea.vmem %s518, 240 [#allocation19]
        %2153 = vst [vmem:[%s2152] sm:$0xff] %v2088
        %2154 = vst [vmem:[%s2152 + $0x8] sm:$0xff] %v2089
        %s2155 = scalar_lea.vmem %s518, 256 [#allocation19]
        %2156 = vst [vmem:[%s2155] sm:$0xff] %v2090
        %2157 = vst [vmem:[%s2155 + $0x8] sm:$0xff] %v2091
        %s2158 = scalar_lea.vmem %s518, 272 [#allocation19]
        %2159 = vst [vmem:[%s2158] sm:$0xff] %v2092
        %2160 = vst [vmem:[%s2158 + $0x8] sm:$0xff] %v2093
        %s2161 = scalar_lea.vmem %s518, 288 [#allocation19]
        %2162 = vst [vmem:[%s2161] sm:$0xff] %v2094
        %2163 = vst [vmem:[%s2161 + $0x8] sm:$0xff] %v2095
        %s2164 = scalar_lea.vmem %s518, 304 [#allocation19]
        %2165 = vst [vmem:[%s2164] sm:$0xff] %v2096
        %2166 = vst [vmem:[%s2164 + $0x8] sm:$0xff] %v2097
        %s2167 = scalar_lea.vmem %s518, 320 [#allocation19]
        %2168 = vst [vmem:[%s2167] sm:$0xff] %v2098
        %2169 = vst [vmem:[%s2167 + $0x8] sm:$0xff] %v2099
        %s2170 = scalar_lea.vmem %s518, 336 [#allocation19]
        %2171 = vst [vmem:[%s2170] sm:$0xff] %v2100
        %2172 = vst [vmem:[%s2170 + $0x8] sm:$0xff] %v2101
        %s2173 = scalar_lea.vmem %s518, 352 [#allocation19]
        %2174 = vst [vmem:[%s2173] sm:$0xff] %v2102
        %2175 = vst [vmem:[%s2173 + $0x8] sm:$0xff] %v2103
        %s2176 = scalar_lea.vmem %s518, 368 [#allocation19]
        %2177 = vst [vmem:[%s2176] sm:$0xff] %v2104
        %2178 = vst [vmem:[%s2176 + $0x8] sm:$0xff] %v2105
        %s2179 = scalar_lea.vmem %s518, 384 [#allocation19]
        %2180 = vst [vmem:[%s2179] sm:$0xff] %v2106
        %2181 = vst [vmem:[%s2179 + $0x8] sm:$0xff] %v2107
        %s2182 = sand.u32 %s274, 1
        %s2183 = sand.u32 %s274, 1
        %s2184 = smul.addr %s2183, 400
        %s2185 = scalar_lea.vmem [#allocation19], %s2184
        // Predicated region
        $region105: #{conv_decoder_forward.1} parent=63 // pred_check
          %p2186 = pneg %p284
        $region106: #{conv_decoder_forward.1} parent=63 // pred_check_branch
          %2188 = sbr.rel (%p2186) target = $region108
        $region107: #{conv_decoder_forward.1} parent=63 // pred_region
          %s2189 = smul.addr %s30, 2
          %s2190 = smul.addr %s2189, 8
          %s2191 = scalar_lea.vmem %s11, %s2190
          // Predicated region
          $region109: #{conv_decoder_forward.1} parent=107 // pred_check
            _
          $region110: #{conv_decoder_forward.1} parent=107 // pred_check_branch
            %2193 = sbr.rel (0) target = $region112
          $region111: #{conv_decoder_forward.1} parent=107 // pred_region
            // Predicated region
            $region113: #{conv_decoder_forward.1} parent=111 // pred_check
              _
            $region114: #{conv_decoder_forward.1} parent=111 // pred_check_branch
              %2195 = sbr.rel (0) target = $region116
            $region115: #{conv_decoder_forward.1} parent=111 // pred_region
              loop: start=0, step=1, limit=1
              $region117: #{conv_decoder_forward.1} parent=115 // loop_pre_header
                _
              $region118: #{conv_decoder_forward.1} parent=115 // loop_header
                %s2197 = sphi 0, %s2201
                %p2198 = scmp.ge.s32.totalorder %s2197, 1
                %s2202 = sphi %s2185, %s2185
                %s2203 = sphi %s2191, %s2191
              $region119: #{conv_decoder_forward.1} parent=115 // loop_header_branch
                %2200 = sbr.rel (%p2198) target = $region123
              $region120: #{conv_decoder_forward.1} parent=115 // loop_body
                %v2204 = vld [vmem:[%s2202] sm:$0xff]
                %2205 = vst [vmem:[%s2203] sm:$0xff] %v2204
                %v2206 = vld [vmem:[%s2202 + $0x8] sm:$0xff]
                %2207 = vst [vmem:[%s2203 + $0x8] sm:$0xff] %v2206
                %v2208 = vld [vmem:[%s2202 + $0x10] sm:$0xff]
                %2209 = vst [vmem:[%s2203 + $0x20] sm:$0xff] %v2208
                %v2210 = vld [vmem:[%s2202 + $0x18] sm:$0xff]
                %2211 = vst [vmem:[%s2203 + $0x28] sm:$0xff] %v2210
                %v2212 = vld [vmem:[%s2202 + $0x20] sm:$0xff]
                %2213 = vst [vmem:[%s2203 + $0x40] sm:$0xff] %v2212
                %v2214 = vld [vmem:[%s2202 + $0x28] sm:$0xff]
                %2215 = vst [vmem:[%s2203 + $0x48] sm:$0xff] %v2214
                %v2216 = vld [vmem:[%s2202 + $0x30] sm:$0xff]
                %2217 = vst [vmem:[%s2203 + $0x60] sm:$0xff] %v2216
                %v2218 = vld [vmem:[%s2202 + $0x38] sm:$0xff]
                %2219 = vst [vmem:[%s2203 + $0x68] sm:$0xff] %v2218
                %v2220 = vld [vmem:[%s2202 + $0x40] sm:$0xff]
                %2221 = vst [vmem:[%s2203 + $0x80] sm:$0xff] %v2220
                %v2222 = vld [vmem:[%s2202 + $0x48] sm:$0xff]
                %2223 = vst [vmem:[%s2203 + $0x88] sm:$0xff] %v2222
                %v2224 = vld [vmem:[%s2202 + $0x50] sm:$0xff]
                %2225 = vst [vmem:[%s2203 + $0xa0] sm:$0xff] %v2224
                %v2226 = vld [vmem:[%s2202 + $0x58] sm:$0xff]
                %2227 = vst [vmem:[%s2203 + $0xa8] sm:$0xff] %v2226
                %v2228 = vld [vmem:[%s2202 + $0x60] sm:$0xff]
                %2229 = vst [vmem:[%s2203 + $0xc0] sm:$0xff] %v2228
                %v2230 = vld [vmem:[%s2202 + $0x68] sm:$0xff]
                %2231 = vst [vmem:[%s2203 + $0xc8] sm:$0xff] %v2230
                %v2232 = vld [vmem:[%s2202 + $0x70] sm:$0xff]
                %2233 = vst [vmem:[%s2203 + $0xe0] sm:$0xff] %v2232
                %v2234 = vld [vmem:[%s2202 + $0x78] sm:$0xff]
                %2235 = vst [vmem:[%s2203 + $0xe8] sm:$0xff] %v2234
                %v2236 = vld [vmem:[%s2202 + $0x80] sm:$0xff]
                %2237 = vst [vmem:[%s2203 + $0x100] sm:$0xff] %v2236
                %v2238 = vld [vmem:[%s2202 + $0x88] sm:$0xff]
                %2239 = vst [vmem:[%s2203 + $0x108] sm:$0xff] %v2238
                %v2240 = vld [vmem:[%s2202 + $0x90] sm:$0xff]
                %2241 = vst [vmem:[%s2203 + $0x120] sm:$0xff] %v2240
                %v2242 = vld [vmem:[%s2202 + $0x98] sm:$0xff]
                %2243 = vst [vmem:[%s2203 + $0x128] sm:$0xff] %v2242
                %v2244 = vld [vmem:[%s2202 + $0xa0] sm:$0xff]
                %2245 = vst [vmem:[%s2203 + $0x140] sm:$0xff] %v2244
                %v2246 = vld [vmem:[%s2202 + $0xa8] sm:$0xff]
                %2247 = vst [vmem:[%s2203 + $0x148] sm:$0xff] %v2246
                %v2248 = vld [vmem:[%s2202 + $0xb0] sm:$0xff]
                %2249 = vst [vmem:[%s2203 + $0x160] sm:$0xff] %v2248
                %v2250 = vld [vmem:[%s2202 + $0xb8] sm:$0xff]
                %2251 = vst [vmem:[%s2203 + $0x168] sm:$0xff] %v2250
                %v2252 = vld [vmem:[%s2202 + $0xc0] sm:$0xff]
                %2253 = vst [vmem:[%s2203 + $0x180] sm:$0xff] %v2252
                %v2254 = vld [vmem:[%s2202 + $0xc8] sm:$0xff]
                %2255 = vst [vmem:[%s2203 + $0x188] sm:$0xff] %v2254
                %v2256 = vld [vmem:[%s2202 + $0xd0] sm:$0xff]
                %2257 = vst [vmem:[%s2203 + $0x1a0] sm:$0xff] %v2256
                %v2258 = vld [vmem:[%s2202 + $0xd8] sm:$0xff]
                %2259 = vst [vmem:[%s2203 + $0x1a8] sm:$0xff] %v2258
                %v2260 = vld [vmem:[%s2202 + $0xe0] sm:$0xff]
                %2261 = vst [vmem:[%s2203 + $0x1c0] sm:$0xff] %v2260
                %v2262 = vld [vmem:[%s2202 + $0xe8] sm:$0xff]
                %2263 = vst [vmem:[%s2203 + $0x1c8] sm:$0xff] %v2262
                %v2264 = vld [vmem:[%s2202 + $0xf0] sm:$0xff]
                %2265 = vst [vmem:[%s2203 + $0x1e0] sm:$0xff] %v2264
                %v2266 = vld [vmem:[%s2202 + $0xf8] sm:$0xff]
                %2267 = vst [vmem:[%s2203 + $0x1e8] sm:$0xff] %v2266
                %v2268 = vld [vmem:[%s2202 + $0x100] sm:$0xff]
                %2269 = vst [vmem:[%s2203 + $0x200] sm:$0xff] %v2268
                %v2270 = vld [vmem:[%s2202 + $0x108] sm:$0xff]
                %2271 = vst [vmem:[%s2203 + $0x208] sm:$0xff] %v2270
                %v2272 = vld [vmem:[%s2202 + $0x110] sm:$0xff]
                %2273 = vst [vmem:[%s2203 + $0x220] sm:$0xff] %v2272
                %v2274 = vld [vmem:[%s2202 + $0x118] sm:$0xff]
                %2275 = vst [vmem:[%s2203 + $0x228] sm:$0xff] %v2274
                %v2276 = vld [vmem:[%s2202 + $0x120] sm:$0xff]
                %2277 = vst [vmem:[%s2203 + $0x240] sm:$0xff] %v2276
                %v2278 = vld [vmem:[%s2202 + $0x128] sm:$0xff]
                %2279 = vst [vmem:[%s2203 + $0x248] sm:$0xff] %v2278
                %v2280 = vld [vmem:[%s2202 + $0x130] sm:$0xff]
                %2281 = vst [vmem:[%s2203 + $0x260] sm:$0xff] %v2280
                %v2282 = vld [vmem:[%s2202 + $0x138] sm:$0xff]
                %2283 = vst [vmem:[%s2203 + $0x268] sm:$0xff] %v2282
                %v2284 = vld [vmem:[%s2202 + $0x140] sm:$0xff]
                %2285 = vst [vmem:[%s2203 + $0x280] sm:$0xff] %v2284
                %v2286 = vld [vmem:[%s2202 + $0x148] sm:$0xff]
                %2287 = vst [vmem:[%s2203 + $0x288] sm:$0xff] %v2286
                %v2288 = vld [vmem:[%s2202 + $0x150] sm:$0xff]
                %2289 = vst [vmem:[%s2203 + $0x2a0] sm:$0xff] %v2288
                %v2290 = vld [vmem:[%s2202 + $0x158] sm:$0xff]
                %2291 = vst [vmem:[%s2203 + $0x2a8] sm:$0xff] %v2290
                %v2292 = vld [vmem:[%s2202 + $0x160] sm:$0xff]
                %2293 = vst [vmem:[%s2203 + $0x2c0] sm:$0xff] %v2292
                %v2294 = vld [vmem:[%s2202 + $0x168] sm:$0xff]
                %2295 = vst [vmem:[%s2203 + $0x2c8] sm:$0xff] %v2294
                %v2296 = vld [vmem:[%s2202 + $0x170] sm:$0xff]
                %2297 = vst [vmem:[%s2203 + $0x2e0] sm:$0xff] %v2296
                %v2298 = vld [vmem:[%s2202 + $0x178] sm:$0xff]
                %2299 = vst [vmem:[%s2203 + $0x2e8] sm:$0xff] %v2298
                %v2300 = vld [vmem:[%s2202 + $0x180] sm:$0xff]
                %2301 = vst [vmem:[%s2203 + $0x300] sm:$0xff] %v2300
                %v2302 = vld [vmem:[%s2202 + $0x188] sm:$0xff]
                %2303 = vst [vmem:[%s2203 + $0x308] sm:$0xff] %v2302
              $region121: #{conv_decoder_forward.1} parent=115 // loop_footer
                %s2201 = sadd.s32 1, %s2197
              $region122: #{conv_decoder_forward.1} parent=115 // loop_footer_branch
                %2196 = sbr.rel target = $region118
              $region123: #{conv_decoder_forward.1} parent=115 // loop_exit
                _
            $region116: #{conv_decoder_forward.1} parent=111 // pred_fallthru
              _
            // Predicated region
            $region124: #{conv_decoder_forward.1} parent=111 // pred_check
              _
            $region125: #{conv_decoder_forward.1} parent=111 // pred_check_branch
              %2305 = sbr.rel target = $region127
            $region126: #{conv_decoder_forward.1} parent=111 // pred_region
              _
            $region127: #{conv_decoder_forward.1} parent=111 // pred_fallthru
              _
          $region112: #{conv_decoder_forward.1} parent=107 // pred_fallthru
            _
          %2306 = vnop
        $region108: #{conv_decoder_forward.1} parent=63 // pred_fallthru
          _
      $region64: #{conv_decoder_forward.1} parent=5 // pred_fallthru
        _
      %p2307 = scmp.le.s32.totalorder 2, %s25
      // Predicated region
      $region128: #{conv_decoder_forward.1} parent=5 // pred_check
        %p2308 = pneg %p2307
      $region129: #{conv_decoder_forward.1} parent=5 // pred_check_branch
        %2310 = sbr.rel (%p2308) target = $region131
      $region130: #{conv_decoder_forward.1} parent=5 // pred_region
        %s2311 = ssub.s32 %s25, 2
        // Predicated region
        $region132: #{conv_decoder_forward.1} parent=130 // pred_check
          %p2312 = pneg %p290
        $region133: #{conv_decoder_forward.1} parent=130 // pred_check_branch
          %2314 = sbr.rel (%p2312) target = $region135
        $region134: #{conv_decoder_forward.1} parent=130 // pred_region
          %s2315 = sand.u32 %s275, 1
          %s2316 = sand.u32 %s275, 1
          %s2317 = smul.addr %s2316, 400
          %s2318 = scalar_lea.vmem [#allocation19], %s2317
        $region135: #{conv_decoder_forward.1} parent=130 // pred_fallthru
          _
      $region131: #{conv_decoder_forward.1} parent=5 // pred_fallthru
        _
    $region6: #{conv_decoder_forward.1} parent=1 // loop_footer
      %s29 = sadd.s32 1, %s25
    $region7: #{conv_decoder_forward.1} parent=1 // loop_footer_branch
      %24 = sbr.rel target = $region3
    $region8: #{conv_decoder_forward.1} parent=1 // loop_exit
      _
    %2319 = vsyncpa [#allocation4], 1
    %s2320 = scalar_lea.sflag [#allocation4], 1
    %2321 = vsyncpa %s2320, 1
    %2322 = vsyncpa [#allocation6], 1
    %2323 = vsyncpa [#allocation9], 1
    %2324 = vsyncpa [#allocation12], 1
    %2325 = vsyncpa [#allocation15], 1
    %2326 = vsyncpa [#allocation18], 1

</llo_original>
